<compile_context>
chip_gen: v7x
topology: tpu7x:2x2x1
jax: 0.10.0
libtpu: 0.0.40
codegen_flags: <defaults>
</compile_context>

<pallas_src>
import math

import jax
import jax.numpy as jnp
from jax import lax
from jax.experimental import pallas as pl
from jax.experimental.pallas import tpu as pltpu


# ----------------------------------------------------------------------------
# Bidirectional GRU: one pallas_call, grid=(2,) over direction (parallel),
# whole recurrence inside an unrolled fori_loop.
# ----------------------------------------------------------------------------
def bigru(x, fwd_params, bwd_params):
    """x: (T, B, E) f32.  Each params tuple = (w_ih (3H,E), w_hh (3H,H),
    b_ih (3H,), b_hh (3H,)).  Returns (2, T*B, H): [0]=fwd, [1]=bwd hidden at
    every step, rows flattened as t*B + b (PyTorch GRU semantics, h0 = 0)."""
    T, B, E = x.shape
    H = fwd_params[1].shape[1]
    G = 3 * H

    x_flat = x.reshape(T * B, E)

    # Stack per-direction weights so direction is a grid axis.
    wih = jnp.stack([jnp.transpose(fwd_params[0]), jnp.transpose(bwd_params[0])])  # (2,E,3H)
    whh = jnp.stack([jnp.transpose(fwd_params[1]), jnp.transpose(bwd_params[1])])  # (2,H,3H)
    bih = jnp.stack([fwd_params[2].reshape(1, G), bwd_params[2].reshape(1, G)])    # (2,1,3H)
    bhh = jnp.stack([fwd_params[3].reshape(1, G), bwd_params[3].reshape(1, G)])    # (2,1,3H)

    def kernel(x_ref, wih_ref, whh_ref, bih_ref, bhh_ref, out_ref, gi_ref):
        d = pl.program_id(0)          # 0 = forward, 1 = backward

        # Hoisted input projection: one (T*B, E) x (E, 3H) matmul for all steps.
        gi_ref[...] = (jnp.dot(x_ref[...], wih_ref[...],
                               preferred_element_type=jnp.float32) + bih_ref[...])

        whh_m = whh_ref[...]          # (H, 3H)
        bhh_v = bhh_ref[...]          # (1, 3H)

        def step(t, h):
            # fwd processes time t; bwd processes time T-1-t (reversed indexing
            # instead of reversing the sequence in HBM).
            tt = jnp.where(d == 0, t, T - 1 - t)
            row = tt * B
            gi = gi_ref[pl.ds(row, B), :]                                   # (B, 3H)
            gh = jnp.dot(h, whh_m, preferred_element_type=jnp.float32) + bhh_v
            r = jax.nn.sigmoid(gi[:, 0:H] + gh[:, 0:H])
            z = jax.nn.sigmoid(gi[:, H:2 * H] + gh[:, H:2 * H])
            n = jnp.tanh(gi[:, 2 * H:3 * H] + r * gh[:, 2 * H:3 * H])
            h_new = (1.0 - z) * n + z * h
            out_ref[pl.ds(row, B), :] = h_new
            return h_new

        lax.fori_loop(0, T, step, jnp.zeros((B, H), jnp.float32), unroll=True)

    return pl.pallas_call(
        kernel,
        out_shape=jax.ShapeDtypeStruct((2, T * B, H), jnp.float32),
        grid_spec=pltpu.PrefetchScalarGridSpec(
            num_scalar_prefetch=0,
            grid=(2,),
            in_specs=[
                pl.BlockSpec((T * B, E), lambda d: (0, 0)),
                pl.BlockSpec((None, E, G), lambda d: (d, 0, 0)),
                pl.BlockSpec((None, H, G), lambda d: (d, 0, 0)),
                pl.BlockSpec((None, 1, G), lambda d: (d, 0, 0)),
                pl.BlockSpec((None, 1, G), lambda d: (d, 0, 0)),
            ],
            out_specs=pl.BlockSpec((None, T * B, H), lambda d: (d, 0, 0)),
            scratch_shapes=[pltpu.VMEM((T * B, G), jnp.float32)],
        ),
        compiler_params=pltpu.CompilerParams(
            dimension_semantics=("parallel",)),   # 2 independent directions -> 2 TCs on v7x
    )(x_flat, wih, whh, bih, bhh)


# ----------------------------------------------------------------------------
# Fused tail: masked sum over target seq + broadcast + "concat" + 3-layer MLP.
#   t_vect   = (t_seq * mask).sum(0)        -> msel @ t_seq_flat (per direction)
#   wt       = cat([tgt, t_vect, w_seq], -1)-> never materialized: w1 split rows
#   out      = sigmoid(L3(sigmoid(L2(sigmoid(L1(wt))))))   (dropout = identity)
# ----------------------------------------------------------------------------
def _tail_kernel(tgt_ref, msel_ref, tseq_ref, wseq_ref, rep_ref,
                 w1t_ref, w1vf_ref, w1vb_ref, w1wf_ref, w1wb_ref, b1_ref,
                 w2_ref, b2_ref, w3_ref, b3_ref, out_ref):
    def dot(a, b):
        return jnp.dot(a, b, preferred_element_type=jnp.float32)

    # Masked reduction over target time steps, per direction, as a tiny matmul:
    # msel[b, t*B+b] = mask[t, b]  =>  tv[b] = sum_t mask[t,b] * t_seq[t,b]
    tv_f = dot(msel_ref[...], tseq_ref[0])          # (B, H)
    tv_b = dot(msel_ref[...], tseq_ref[1])          # (B, H)

    # Per-batch contribution of tgt and t_vect to linear1 (shared by all
    # window positions) -- the row-split of w1 realizes the concat implicitly.
    base = (dot(tgt_ref[...], w1t_ref[...])
            + dot(tv_f, w1vf_ref[...])
            + dot(tv_b, w1vb_ref[...])
            + b1_ref[...])                          # (B, 200)

    # Window contribution; rep[w*B+b, b] = 1 broadcasts base over window slots.
    z1 = (dot(wseq_ref[0], w1wf_ref[...])
          + dot(wseq_ref[1], w1wb_ref[...])
          + dot(rep_ref[...], base))                # (W*B, 200)
    h1 = jax.nn.sigmoid(z1)
    h2 = jax.nn.sigmoid(dot(h1, w2_ref[...]) + b2_ref[...])
    h3 = jax.nn.sigmoid(dot(h2, w3_ref[...]) + b3_ref[...])   # (W*B, 128) padded
    out_ref[...] = h3.astype(out_ref.dtype)


# ----------------------------------------------------------------------------
# Full RecurrentTgt forward
# ----------------------------------------------------------------------------
def recurrent_tgt_forward(params, predarg, target_seq, mask, window):
    # Embedding gathers are plain-JAX glue.
    tgt = jnp.take(params["tgt_emb"], predarg, axis=0)           # (B, tgt_dim)
    t_embeds = jnp.take(params["embs"], target_seq, axis=0)      # (T, B, E)
    w_embeds = jnp.take(params["embs"], window, axis=0)          # (W, B, E)

    t_seq = bigru(t_embeds, params["gru_t_fwd"], params["gru_t_bwd"])   # (2, T*B, H)
    w_seq = bigru(w_embeds, params["gru_w_fwd"], params["gru_w_bwd"])   # (2, W*B, H)

    T, B = target_seq.shape
    Wn = window.shape[0]
    H = t_seq.shape[-1]
    hidden = 2 * H
    tgt_dim = tgt.shape[-1]

    eye_b = jnp.eye(B, dtype=jnp.float32)
    # masked-sum selection matrix: msel[b, t*B+b] = mask[t, b]
    mask_t = mask[:, :, 0].T                                     # (B, T)
    msel = (mask_t[:, :, None] * eye_b[:, None, :]).reshape(B, T * B)
    # broadcast matrix: rep[w*B+b, b] = 1
    rep = jnp.tile(eye_b, (Wn, 1))                               # (W*B, B)

    # Row-split of linear1 weight (wt = [tgt | t_vect_f | t_vect_b | ws_f | ws_b])
    w1 = params["w1"]                                            # (D, 200)
    w1t = w1[0:tgt_dim]
    w1vf = w1[tgt_dim:tgt_dim + H]
    w1vb = w1[tgt_dim + H:tgt_dim + hidden]
    w1wf = w1[tgt_dim + hidden:tgt_dim + hidden + H]
    w1wb = w1[tgt_dim + hidden + H:tgt_dim + 2 * hidden]

    # Pad the final (200,1) projection to 128 lanes for an unmasked store.
    w3p = jnp.pad(params["w3"], ((0, 0), (0, 127)))              # (200, 128)
    b3p = jnp.pad(params["b3"].reshape(1, 1), ((0, 0), (0, 127)))  # (1, 128)

    # At these sizes the whole tail fits VMEM as full blocks (no grid).
    # Tiling over W*B / T would only be needed for a large-scale variant.
    out_pad = pl.pallas_call(
        _tail_kernel,
        out_shape=jax.ShapeDtypeStruct((Wn * B, 128), jnp.float32),
    )(tgt, msel, t_seq, w_seq, rep,
      w1t, w1vf, w1vb, w1wf, w1wb, params["b1"].reshape(1, -1),
      params["w2"], params["b2"].reshape(1, -1), w3p, b3p)

    return out_pad[:, 0:1]                                       # (W*B, 1)


# ----------------------------------------------------------------------------
# Deterministic parameter init (shapes from __init__)
# ----------------------------------------------------------------------------
def init_params(key, max_tgt, tgt_dim, max_features, embedding_dim, hidden_size):
    H = hidden_size // 2
    keys = iter(jax.random.split(key, 24))

    def uni(k, shape, scale):
        return jax.random.uniform(k, shape, jnp.float32, -scale, scale)

    params = {}
    params["tgt_emb"] = jax.random.normal(next(keys), (max_tgt, tgt_dim), jnp.float32)
    params["embs"] = jax.random.normal(next(keys), (max_features, embedding_dim), jnp.float32)

    s_h = 1.0 / math.sqrt(H)

    def gru_dir_params(k):
        k1, k2, k3, k4 = jax.random.split(k, 4)
        return (uni(k1, (3 * H, embedding_dim), s_h),   # weight_ih
                uni(k2, (3 * H, H), s_h),               # weight_hh
                uni(k3, (3 * H,), s_h),                 # bias_ih
                uni(k4, (3 * H,), s_h))                 # bias_hh

    params["gru_t_fwd"] = gru_dir_params(next(keys))
    params["gru_t_bwd"] = gru_dir_params(next(keys))
    params["gru_w_fwd"] = gru_dir_params(next(keys))
    params["gru_w_bwd"] = gru_dir_params(next(keys))

    D = hidden_size * 2 + tgt_dim          # linear1 in_features
    s1 = 1.0 / math.sqrt(D)
    s2 = 1.0 / math.sqrt(200)
    params["w1"] = uni(next(keys), (D, 200), s1)
    params["b1"] = uni(next(keys), (200,), s1)
    params["w2"] = uni(next(keys), (200, 200), s2)
    params["b2"] = uni(next(keys), (200,), s2)
    params["w3"] = uni(next(keys), (200, 1), s2)
    params["b3"] = uni(next(keys), (1,), s2)
    return params


if __name__ == "__main__":
    # Small shapes consistent with the forward pass
    max_tgt, tgt_dim = 10, 8
    max_features, embedding_dim = 50, 16
    hidden_size = 32
    T, W, B = 8, 8, 2          # target-seq length, window length, batch

    key = jax.random.PRNGKey(0)
    k_par, k_pa, k_ts, k_mk, k_wd = jax.random.split(key, 5)

    params = init_params(k_par, max_tgt, tgt_dim, max_features,
                         embedding_dim, hidden_size)

    predarg = jax.random.randint(k_pa, (B,), 0, max_tgt, dtype=jnp.int32)
    target_seq = jax.random.randint(k_ts, (T, B), 0, max_features, dtype=jnp.int32)
    mask = (jax.random.uniform(k_mk, (T, B, 1)) > 0.3).astype(jnp.float32)
    window = jax.random.randint(k_wd, (W, B), 0, max_features, dtype=jnp.int32)

    fwd = jax.jit(recurrent_tgt_forward)
    out = fwd(params, predarg, target_seq, mask, window)
    out = jax.block_until_ready(out)

    assert out.shape == (W * B, 1)
    assert bool(jnp.all(jnp.isfinite(out)))
    print("KERNEL_OK")
</pallas_src>

<mosaic_0001>
module attributes {stable_mosaic.version = 11 : i64} {
  func.func @kernel(%arg0: i32, %arg1: memref<16x16xf32, #tpu.memory_space<vmem>>, %arg2: memref<1x16x48xf32, #tpu.memory_space<vmem>>, %arg3: memref<1x16x48xf32, #tpu.memory_space<vmem>>, %arg4: memref<1x1x48xf32, #tpu.memory_space<vmem>>, %arg5: memref<1x1x48xf32, #tpu.memory_space<vmem>>, %arg6: memref<1x16x16xf32, #tpu.memory_space<vmem>>, %arg7: memref<16x48xf32, #tpu.memory_space<vmem>>) attributes {dimension_semantics = [#tpu.dimension_semantics<parallel>], iteration_bounds = array<i64: 2>, scalar_prefetch = 0 : i64, scratch_operands = 1 : i64, tpu.core_type = #tpu.core_type<tc>, window_params = [{pipeline_mode = #tpu.pipeline_mode<synchronous>, transform_indices = @transform_0, window_bounds = array<i64: 16, 16>}, {transform_indices = @transform_1, window_bounds = array<i64: 1, 16, 48>}, {transform_indices = @transform_2, window_bounds = array<i64: 1, 16, 48>}, {transform_indices = @transform_3, window_bounds = array<i64: 1, 1, 48>}, {transform_indices = @transform_4, window_bounds = array<i64: 1, 1, 48>}, {transform_indices = @transform_5, window_bounds = array<i64: 1, 16, 16>}]} {
    %c0 = arith.constant 0 : index
    %c0_0 = arith.constant 0 : index
    %0 = vector.load %arg1[%c0, %c0_0] : memref<16x16xf32, #tpu.memory_space<vmem>>, vector<16x16xf32>
    %c0_1 = arith.constant 0 : index
    %c0_2 = arith.constant 0 : index
    %c0_3 = arith.constant 0 : index
    %1 = vector.load %arg2[%c0_1, %c0_2, %c0_3] : memref<1x16x48xf32, #tpu.memory_space<vmem>>, vector<1x16x48xf32>
    %2 = vector.shape_cast %1 : vector<1x16x48xf32> to vector<16x48xf32>
    %cst = arith.constant dense<0.000000e+00> : vector<16x48xf32>
    %3 = tpu.matmul %0, %2, %cst {dimension_numbers = #tpu.dot_dimension_numbers<[1], [0], [0], [1], [0, 0, 1, 1], [], []>} : vector<16x16xf32>, vector<16x48xf32>, vector<16x48xf32> -> vector<16x48xf32>
    %c0_4 = arith.constant 0 : index
    %c0_5 = arith.constant 0 : index
    %c0_6 = arith.constant 0 : index
    %4 = vector.load %arg4[%c0_4, %c0_5, %c0_6] : memref<1x1x48xf32, #tpu.memory_space<vmem>>, vector<1x1x48xf32>
    %5 = vector.shape_cast %4 : vector<1x1x48xf32> to vector<1x48xf32>
    %6 = vector.broadcast %5 : vector<1x48xf32> to vector<16x48xf32>
    %7 = arith.addf %3, %6 : vector<16x48xf32>
    %c0_7 = arith.constant 0 : index
    %c0_8 = arith.constant 0 : index
    %8 = vector.load %arg7[%c0_7, %c0_8] : memref<16x48xf32, #tpu.memory_space<vmem>>, vector<16x48xf32>
    tpu.vector_store %arg7[%c0_7, %c0_8], %7 {strides = array<i32>} : memref<16x48xf32, #tpu.memory_space<vmem>>, vector<16x48xf32>,
    %c0_9 = arith.constant 0 : index
    %c0_10 = arith.constant 0 : index
    %c0_11 = arith.constant 0 : index
    %9 = vector.load %arg3[%c0_9, %c0_10, %c0_11] : memref<1x16x48xf32, #tpu.memory_space<vmem>>, vector<1x16x48xf32>
    %10 = vector.shape_cast %9 : vector<1x16x48xf32> to vector<16x48xf32>
    %c0_12 = arith.constant 0 : index
    %c0_13 = arith.constant 0 : index
    %c0_14 = arith.constant 0 : index
    %11 = vector.load %arg5[%c0_12, %c0_13, %c0_14] : memref<1x1x48xf32, #tpu.memory_space<vmem>>, vector<1x1x48xf32>
    %12 = vector.shape_cast %11 : vector<1x1x48xf32> to vector<1x48xf32>
    %cst_15 = arith.constant 0.000000e+00 : f32
    %13 = vector.broadcast %cst_15 : f32 to vector<2x16xf32>
    %c0_i32 = arith.constant 0 : i32
    %c0_i32_16 = arith.constant 0 : i32
    %14 = arith.cmpi eq, %arg0, %c0_i32_16 : i32
    %c7_i32 = arith.constant 7 : i32
    %15 = arith.subi %c7_i32, %c0_i32 : i32
    %16 = arith.select %14, %c0_i32, %15 : i32
    %c2_i32 = arith.constant 2 : i32
    %17 = arith.muli %16, %c2_i32 : i32
    %18 = arith.index_cast %17 : i32 to index
    %c0_17 = arith.constant 0 : index
    %19 = vector.load %arg7[%18, %c0_17] : memref<16x48xf32, #tpu.memory_space<vmem>>, vector<2x48xf32>
    %cst_18 = arith.constant dense<0.000000e+00> : vector<2x48xf32>
    %20 = tpu.matmul %13, %10, %cst_18 {dimension_numbers = #tpu.dot_dimension_numbers<[1], [0], [0], [1], [0, 0, 1, 1], [], []>} : vector<2x16xf32>, vector<16x48xf32>, vector<2x48xf32> -> vector<2x48xf32>
    %21 = vector.broadcast %12 : vector<1x48xf32> to vector<2x48xf32>
    %22 = arith.addf %20, %21 : vector<2x48xf32>
    %23 = vector.extract_strided_slice %19 {offsets = [0, 0], sizes = [2, 16], strides = [1, 1]} : vector<2x48xf32> to vector<2x16xf32>
    %24 = vector.extract_strided_slice %22 {offsets = [0, 0], sizes = [2, 16], strides = [1, 1]} : vector<2x48xf32> to vector<2x16xf32>
    %25 = arith.addf %23, %24 : vector<2x16xf32>
    %26 = arith.negf %25 : vector<2x16xf32>
    %27 = math.exp %26 : vector<2x16xf32>
    %cst_19 = arith.constant 1.000000e+00 : f32
    %28 = vector.broadcast %cst_19 : f32 to vector<2x16xf32>
    %29 = arith.addf %28, %27 : vector<2x16xf32>
    %30 = arith.divf %28, %29 : vector<2x16xf32>
    %31 = vector.extract_strided_slice %19 {offsets = [0, 16], sizes = [2, 16], strides = [1, 1]} : vector<2x48xf32> to vector<2x16xf32>
    %32 = vector.extract_strided_slice %22 {offsets = [0, 16], sizes = [2, 16], strides = [1, 1]} : vector<2x48xf32> to vector<2x16xf32>
    %33 = arith.addf %31, %32 : vector<2x16xf32>
    %34 = arith.negf %33 : vector<2x16xf32>
    %35 = math.exp %34 : vector<2x16xf32>
    %cst_20 = arith.constant 1.000000e+00 : f32
    %36 = vector.broadcast %cst_20 : f32 to vector<2x16xf32>
    %37 = arith.addf %36, %35 : vector<2x16xf32>
    %38 = arith.divf %36, %37 : vector<2x16xf32>
    %39 = vector.extract_strided_slice %19 {offsets = [0, 32], sizes = [2, 16], strides = [1, 1]} : vector<2x48xf32> to vector<2x16xf32>
    %40 = vector.extract_strided_slice %22 {offsets = [0, 32], sizes = [2, 16], strides = [1, 1]} : vector<2x48xf32> to vector<2x16xf32>
    %41 = arith.mulf %30, %40 : vector<2x16xf32>
    %42 = arith.addf %39, %41 : vector<2x16xf32>
    %43 = math.tanh %42 : vector<2x16xf32>
    %cst_21 = arith.constant 1.000000e+00 : f32
    %44 = vector.broadcast %cst_21 : f32 to vector<2x16xf32>
    %45 = arith.subf %44, %38 : vector<2x16xf32>
    %46 = arith.mulf %45, %43 : vector<2x16xf32>
    %47 = arith.mulf %38, %13 : vector<2x16xf32>
    %48 = arith.addf %46, %47 : vector<2x16xf32>
    %c0_22 = arith.constant 0 : index
    %49 = arith.index_cast %17 : i32 to index
    %c0_23 = arith.constant 0 : index
    %50 = vector.load %arg6[%c0_22, %49, %c0_23] : memref<1x16x16xf32, #tpu.memory_space<vmem>>, vector<1x2x16xf32>
    %51 = vector.shape_cast %50 : vector<1x2x16xf32> to vector<2x16xf32>
    %52 = vector.shape_cast %48 : vector<2x16xf32> to vector<1x2x16xf32>
    tpu.vector_store %arg6[%c0_22, %49, %c0_23], %52 {strides = array<i32>} : memref<1x16x16xf32, #tpu.memory_space<vmem>>, vector<1x2x16xf32>,
    %c1_i32 = arith.constant 1 : i32
    %c0_i32_24 = arith.constant 0 : i32
    %53 = arith.cmpi eq, %arg0, %c0_i32_24 : i32
    %c7_i32_25 = arith.constant 7 : i32
    %54 = arith.subi %c7_i32_25, %c1_i32 : i32
    %55 = arith.select %53, %c1_i32, %54 : i32
    %c2_i32_26 = arith.constant 2 : i32
    %56 = arith.muli %55, %c2_i32_26 : i32
    %57 = arith.index_cast %56 : i32 to index
    %c0_27 = arith.constant 0 : index
    %58 = vector.load %arg7[%57, %c0_27] : memref<16x48xf32, #tpu.memory_space<vmem>>, vector<2x48xf32>
    %cst_28 = arith.constant dense<0.000000e+00> : vector<2x48xf32>
    %59 = tpu.matmul %48, %10, %cst_28 {dimension_numbers = #tpu.dot_dimension_numbers<[1], [0], [0], [1], [0, 0, 1, 1], [], []>} : vector<2x16xf32>, vector<16x48xf32>, vector<2x48xf32> -> vector<2x48xf32>
    %60 = vector.broadcast %12 : vector<1x48xf32> to vector<2x48xf32>
    %61 = arith.addf %59, %60 : vector<2x48xf32>
    %62 = vector.extract_strided_slice %58 {offsets = [0, 0], sizes = [2, 16], strides = [1, 1]} : vector<2x48xf32> to vector<2x16xf32>
    %63 = vector.extract_strided_slice %61 {offsets = [0, 0], sizes = [2, 16], strides = [1, 1]} : vector<2x48xf32> to vector<2x16xf32>
    %64 = arith.addf %62, %63 : vector<2x16xf32>
    %65 = arith.negf %64 : vector<2x16xf32>
    %66 = math.exp %65 : vector<2x16xf32>
    %cst_29 = arith.constant 1.000000e+00 : f32
    %67 = vector.broadcast %cst_29 : f32 to vector<2x16xf32>
    %68 = arith.addf %67, %66 : vector<2x16xf32>
    %69 = arith.divf %67, %68 : vector<2x16xf32>
    %70 = vector.extract_strided_slice %58 {offsets = [0, 16], sizes = [2, 16], strides = [1, 1]} : vector<2x48xf32> to vector<2x16xf32>
    %71 = vector.extract_strided_slice %61 {offsets = [0, 16], sizes = [2, 16], strides = [1, 1]} : vector<2x48xf32> to vector<2x16xf32>
    %72 = arith.addf %70, %71 : vector<2x16xf32>
    %73 = arith.negf %72 : vector<2x16xf32>
    %74 = math.exp %73 : vector<2x16xf32>
    %cst_30 = arith.constant 1.000000e+00 : f32
    %75 = vector.broadcast %cst_30 : f32 to vector<2x16xf32>
    %76 = arith.addf %75, %74 : vector<2x16xf32>
    %77 = arith.divf %75, %76 : vector<2x16xf32>
    %78 = vector.extract_strided_slice %58 {offsets = [0, 32], sizes = [2, 16], strides = [1, 1]} : vector<2x48xf32> to vector<2x16xf32>
    %79 = vector.extract_strided_slice %61 {offsets = [0, 32], sizes = [2, 16], strides = [1, 1]} : vector<2x48xf32> to vector<2x16xf32>
    %80 = arith.mulf %69, %79 : vector<2x16xf32>
    %81 = arith.addf %78, %80 : vector<2x16xf32>
    %82 = math.tanh %81 : vector<2x16xf32>
    %cst_31 = arith.constant 1.000000e+00 : f32
    %83 = vector.broadcast %cst_31 : f32 to vector<2x16xf32>
    %84 = arith.subf %83, %77 : vector<2x16xf32>
    %85 = arith.mulf %84, %82 : vector<2x16xf32>
    %86 = arith.mulf %77, %48 : vector<2x16xf32>
    %87 = arith.addf %85, %86 : vector<2x16xf32>
    %c0_32 = arith.constant 0 : index
    %88 = arith.index_cast %56 : i32 to index
    %c0_33 = arith.constant 0 : index
    %89 = vector.load %arg6[%c0_32, %88, %c0_33] : memref<1x16x16xf32, #tpu.memory_space<vmem>>, vector<1x2x16xf32>
    %90 = vector.shape_cast %89 : vector<1x2x16xf32> to vector<2x16xf32>
    %91 = vector.shape_cast %87 : vector<2x16xf32> to vector<1x2x16xf32>
    tpu.vector_store %arg6[%c0_32, %88, %c0_33], %91 {strides = array<i32>} : memref<1x16x16xf32, #tpu.memory_space<vmem>>, vector<1x2x16xf32>,
    %c2_i32_34 = arith.constant 2 : i32
    %c0_i32_35 = arith.constant 0 : i32
    %92 = arith.cmpi eq, %arg0, %c0_i32_35 : i32
    %c7_i32_36 = arith.constant 7 : i32
    %93 = arith.subi %c7_i32_36, %c2_i32_34 : i32
    %94 = arith.select %92, %c2_i32_34, %93 : i32
    %c2_i32_37 = arith.constant 2 : i32
    %95 = arith.muli %94, %c2_i32_37 : i32
    %96 = arith.index_cast %95 : i32 to index
    %c0_38 = arith.constant 0 : index
    %97 = vector.load %arg7[%96, %c0_38] : memref<16x48xf32, #tpu.memory_space<vmem>>, vector<2x48xf32>
    %cst_39 = arith.constant dense<0.000000e+00> : vector<2x48xf32>
    %98 = tpu.matmul %87, %10, %cst_39 {dimension_numbers = #tpu.dot_dimension_numbers<[1], [0], [0], [1], [0, 0, 1, 1], [], []>} : vector<2x16xf32>, vector<16x48xf32>, vector<2x48xf32> -> vector<2x48xf32>
    %99 = vector.broadcast %12 : vector<1x48xf32> to vector<2x48xf32>
    %100 = arith.addf %98, %99 : vector<2x48xf32>
    %101 = vector.extract_strided_slice %97 {offsets = [0, 0], sizes = [2, 16], strides = [1, 1]} : vector<2x48xf32> to vector<2x16xf32>
    %102 = vector.extract_strided_slice %100 {offsets = [0, 0], sizes = [2, 16], strides = [1, 1]} : vector<2x48xf32> to vector<2x16xf32>
    %103 = arith.addf %101, %102 : vector<2x16xf32>
    %104 = arith.negf %103 : vector<2x16xf32>
    %105 = math.exp %104 : vector<2x16xf32>
    %cst_40 = arith.constant 1.000000e+00 : f32
    %106 = vector.broadcast %cst_40 : f32 to vector<2x16xf32>
    %107 = arith.addf %106, %105 : vector<2x16xf32>
    %108 = arith.divf %106, %107 : vector<2x16xf32>
    %109 = vector.extract_strided_slice %97 {offsets = [0, 16], sizes = [2, 16], strides = [1, 1]} : vector<2x48xf32> to vector<2x16xf32>
    %110 = vector.extract_strided_slice %100 {offsets = [0, 16], sizes = [2, 16], strides = [1, 1]} : vector<2x48xf32> to vector<2x16xf32>
    %111 = arith.addf %109, %110 : vector<2x16xf32>
    %112 = arith.negf %111 : vector<2x16xf32>
    %113 = math.exp %112 : vector<2x16xf32>
    %cst_41 = arith.constant 1.000000e+00 : f32
    %114 = vector.broadcast %cst_41 : f32 to vector<2x16xf32>
    %115 = arith.addf %114, %113 : vector<2x16xf32>
    %116 = arith.divf %114, %115 : vector<2x16xf32>
    %117 = vector.extract_strided_slice %97 {offsets = [0, 32], sizes = [2, 16], strides = [1, 1]} : vector<2x48xf32> to vector<2x16xf32>
    %118 = vector.extract_strided_slice %100 {offsets = [0, 32], sizes = [2, 16], strides = [1, 1]} : vector<2x48xf32> to vector<2x16xf32>
    %119 = arith.mulf %108, %118 : vector<2x16xf32>
    %120 = arith.addf %117, %119 : vector<2x16xf32>
    %121 = math.tanh %120 : vector<2x16xf32>
    %cst_42 = arith.constant 1.000000e+00 : f32
    %122 = vector.broadcast %cst_42 : f32 to vector<2x16xf32>
    %123 = arith.subf %122, %116 : vector<2x16xf32>
    %124 = arith.mulf %123, %121 : vector<2x16xf32>
    %125 = arith.mulf %116, %87 : vector<2x16xf32>
    %126 = arith.addf %124, %125 : vector<2x16xf32>
    %c0_43 = arith.constant 0 : index
    %127 = arith.index_cast %95 : i32 to index
    %c0_44 = arith.constant 0 : index
    %128 = vector.load %arg6[%c0_43, %127, %c0_44] : memref<1x16x16xf32, #tpu.memory_space<vmem>>, vector<1x2x16xf32>
    %129 = vector.shape_cast %128 : vector<1x2x16xf32> to vector<2x16xf32>
    %130 = vector.shape_cast %126 : vector<2x16xf32> to vector<1x2x16xf32>
    tpu.vector_store %arg6[%c0_43, %127, %c0_44], %130 {strides = array<i32>} : memref<1x16x16xf32, #tpu.memory_space<vmem>>, vector<1x2x16xf32>,
    %c3_i32 = arith.constant 3 : i32
    %c0_i32_45 = arith.constant 0 : i32
    %131 = arith.cmpi eq, %arg0, %c0_i32_45 : i32
    %c7_i32_46 = arith.constant 7 : i32
    %132 = arith.subi %c7_i32_46, %c3_i32 : i32
    %133 = arith.select %131, %c3_i32, %132 : i32
    %c2_i32_47 = arith.constant 2 : i32
    %134 = arith.muli %133, %c2_i32_47 : i32
    %135 = arith.index_cast %134 : i32 to index
    %c0_48 = arith.constant 0 : index
    %136 = vector.load %arg7[%135, %c0_48] : memref<16x48xf32, #tpu.memory_space<vmem>>, vector<2x48xf32>
    %cst_49 = arith.constant dense<0.000000e+00> : vector<2x48xf32>
    %137 = tpu.matmul %126, %10, %cst_49 {dimension_numbers = #tpu.dot_dimension_numbers<[1], [0], [0], [1], [0, 0, 1, 1], [], []>} : vector<2x16xf32>, vector<16x48xf32>, vector<2x48xf32> -> vector<2x48xf32>
    %138 = vector.broadcast %12 : vector<1x48xf32> to vector<2x48xf32>
    %139 = arith.addf %137, %138 : vector<2x48xf32>
    %140 = vector.extract_strided_slice %136 {offsets = [0, 0], sizes = [2, 16], strides = [1, 1]} : vector<2x48xf32> to vector<2x16xf32>
    %141 = vector.extract_strided_slice %139 {offsets = [0, 0], sizes = [2, 16], strides = [1, 1]} : vector<2x48xf32> to vector<2x16xf32>
    %142 = arith.addf %140, %141 : vector<2x16xf32>
    %143 = arith.negf %142 : vector<2x16xf32>
    %144 = math.exp %143 : vector<2x16xf32>
    %cst_50 = arith.constant 1.000000e+00 : f32
    %145 = vector.broadcast %cst_50 : f32 to vector<2x16xf32>
    %146 = arith.addf %145, %144 : vector<2x16xf32>
    %147 = arith.divf %145, %146 : vector<2x16xf32>
    %148 = vector.extract_strided_slice %136 {offsets = [0, 16], sizes = [2, 16], strides = [1, 1]} : vector<2x48xf32> to vector<2x16xf32>
    %149 = vector.extract_strided_slice %139 {offsets = [0, 16], sizes = [2, 16], strides = [1, 1]} : vector<2x48xf32> to vector<2x16xf32>
    %150 = arith.addf %148, %149 : vector<2x16xf32>
    %151 = arith.negf %150 : vector<2x16xf32>
    %152 = math.exp %151 : vector<2x16xf32>
    %cst_51 = arith.constant 1.000000e+00 : f32
    %153 = vector.broadcast %cst_51 : f32 to vector<2x16xf32>
    %154 = arith.addf %153, %152 : vector<2x16xf32>
    %155 = arith.divf %153, %154 : vector<2x16xf32>
    %156 = vector.extract_strided_slice %136 {offsets = [0, 32], sizes = [2, 16], strides = [1, 1]} : vector<2x48xf32> to vector<2x16xf32>
    %157 = vector.extract_strided_slice %139 {offsets = [0, 32], sizes = [2, 16], strides = [1, 1]} : vector<2x48xf32> to vector<2x16xf32>
    %158 = arith.mulf %147, %157 : vector<2x16xf32>
    %159 = arith.addf %156, %158 : vector<2x16xf32>
    %160 = math.tanh %159 : vector<2x16xf32>
    %cst_52 = arith.constant 1.000000e+00 : f32
    %161 = vector.broadcast %cst_52 : f32 to vector<2x16xf32>
    %162 = arith.subf %161, %155 : vector<2x16xf32>
    %163 = arith.mulf %162, %160 : vector<2x16xf32>
    %164 = arith.mulf %155, %126 : vector<2x16xf32>
    %165 = arith.addf %163, %164 : vector<2x16xf32>
    %c0_53 = arith.constant 0 : index
    %166 = arith.index_cast %134 : i32 to index
    %c0_54 = arith.constant 0 : index
    %167 = vector.load %arg6[%c0_53, %166, %c0_54] : memref<1x16x16xf32, #tpu.memory_space<vmem>>, vector<1x2x16xf32>
    %168 = vector.shape_cast %167 : vector<1x2x16xf32> to vector<2x16xf32>
    %169 = vector.shape_cast %165 : vector<2x16xf32> to vector<1x2x16xf32>
    tpu.vector_store %arg6[%c0_53, %166, %c0_54], %169 {strides = array<i32>} : memref<1x16x16xf32, #tpu.memory_space<vmem>>, vector<1x2x16xf32>,
    %c4_i32 = arith.constant 4 : i32
    %c0_i32_55 = arith.constant 0 : i32
    %170 = arith.cmpi eq, %arg0, %c0_i32_55 : i32
    %c7_i32_56 = arith.constant 7 : i32
    %171 = arith.subi %c7_i32_56, %c4_i32 : i32
    %172 = arith.select %170, %c4_i32, %171 : i32
    %c2_i32_57 = arith.constant 2 : i32
    %173 = arith.muli %172, %c2_i32_57 : i32
    %174 = arith.index_cast %173 : i32 to index
    %c0_58 = arith.constant 0 : index
    %175 = vector.load %arg7[%174, %c0_58] : memref<16x48xf32, #tpu.memory_space<vmem>>, vector<2x48xf32>
    %cst_59 = arith.constant dense<0.000000e+00> : vector<2x48xf32>
    %176 = tpu.matmul %165, %10, %cst_59 {dimension_numbers = #tpu.dot_dimension_numbers<[1], [0], [0], [1], [0, 0, 1, 1], [], []>} : vector<2x16xf32>, vector<16x48xf32>, vector<2x48xf32> -> vector<2x48xf32>
    %177 = vector.broadcast %12 : vector<1x48xf32> to vector<2x48xf32>
    %178 = arith.addf %176, %177 : vector<2x48xf32>
    %179 = vector.extract_strided_slice %175 {offsets = [0, 0], sizes = [2, 16], strides = [1, 1]} : vector<2x48xf32> to vector<2x16xf32>
    %180 = vector.extract_strided_slice %178 {offsets = [0, 0], sizes = [2, 16], strides = [1, 1]} : vector<2x48xf32> to vector<2x16xf32>
    %181 = arith.addf %179, %180 : vector<2x16xf32>
    %182 = arith.negf %181 : vector<2x16xf32>
    %183 = math.exp %182 : vector<2x16xf32>
    %cst_60 = arith.constant 1.000000e+00 : f32
    %184 = vector.broadcast %cst_60 : f32 to vector<2x16xf32>
    %185 = arith.addf %184, %183 : vector<2x16xf32>
    %186 = arith.divf %184, %185 : vector<2x16xf32>
    %187 = vector.extract_strided_slice %175 {offsets = [0, 16], sizes = [2, 16], strides = [1, 1]} : vector<2x48xf32> to vector<2x16xf32>
    %188 = vector.extract_strided_slice %178 {offsets = [0, 16], sizes = [2, 16], strides = [1, 1]} : vector<2x48xf32> to vector<2x16xf32>
    %189 = arith.addf %187, %188 : vector<2x16xf32>
    %190 = arith.negf %189 : vector<2x16xf32>
    %191 = math.exp %190 : vector<2x16xf32>
    %cst_61 = arith.constant 1.000000e+00 : f32
    %192 = vector.broadcast %cst_61 : f32 to vector<2x16xf32>
    %193 = arith.addf %192, %191 : vector<2x16xf32>
    %194 = arith.divf %192, %193 : vector<2x16xf32>
    %195 = vector.extract_strided_slice %175 {offsets = [0, 32], sizes = [2, 16], strides = [1, 1]} : vector<2x48xf32> to vector<2x16xf32>
    %196 = vector.extract_strided_slice %178 {offsets = [0, 32], sizes = [2, 16], strides = [1, 1]} : vector<2x48xf32> to vector<2x16xf32>
    %197 = arith.mulf %186, %196 : vector<2x16xf32>
    %198 = arith.addf %195, %197 : vector<2x16xf32>
    %199 = math.tanh %198 : vector<2x16xf32>
    %cst_62 = arith.constant 1.000000e+00 : f32
    %200 = vector.broadcast %cst_62 : f32 to vector<2x16xf32>
    %201 = arith.subf %200, %194 : vector<2x16xf32>
    %202 = arith.mulf %201, %199 : vector<2x16xf32>
    %203 = arith.mulf %194, %165 : vector<2x16xf32>
    %204 = arith.addf %202, %203 : vector<2x16xf32>
    %c0_63 = arith.constant 0 : index
    %205 = arith.index_cast %173 : i32 to index
    %c0_64 = arith.constant 0 : index
    %206 = vector.load %arg6[%c0_63, %205, %c0_64] : memref<1x16x16xf32, #tpu.memory_space<vmem>>, vector<1x2x16xf32>
    %207 = vector.shape_cast %206 : vector<1x2x16xf32> to vector<2x16xf32>
    %208 = vector.shape_cast %204 : vector<2x16xf32> to vector<1x2x16xf32>
    tpu.vector_store %arg6[%c0_63, %205, %c0_64], %208 {strides = array<i32>} : memref<1x16x16xf32, #tpu.memory_space<vmem>>, vector<1x2x16xf32>,
    %c5_i32 = arith.constant 5 : i32
    %c0_i32_65 = arith.constant 0 : i32
    %209 = arith.cmpi eq, %arg0, %c0_i32_65 : i32
    %c7_i32_66 = arith.constant 7 : i32
    %210 = arith.subi %c7_i32_66, %c5_i32 : i32
    %211 = arith.select %209, %c5_i32, %210 : i32
    %c2_i32_67 = arith.constant 2 : i32
    %212 = arith.muli %211, %c2_i32_67 : i32
    %213 = arith.index_cast %212 : i32 to index
    %c0_68 = arith.constant 0 : index
    %214 = vector.load %arg7[%213, %c0_68] : memref<16x48xf32, #tpu.memory_space<vmem>>, vector<2x48xf32>
    %cst_69 = arith.constant dense<0.000000e+00> : vector<2x48xf32>
    %215 = tpu.matmul %204, %10, %cst_69 {dimension_numbers = #tpu.dot_dimension_numbers<[1], [0], [0], [1], [0, 0, 1, 1], [], []>} : vector<2x16xf32>, vector<16x48xf32>, vector<2x48xf32> -> vector<2x48xf32>
    %216 = vector.broadcast %12 : vector<1x48xf32> to vector<2x48xf32>
    %217 = arith.addf %215, %216 : vector<2x48xf32>
    %218 = vector.extract_strided_slice %214 {offsets = [0, 0], sizes = [2, 16], strides = [1, 1]} : vector<2x48xf32> to vector<2x16xf32>
    %219 = vector.extract_strided_slice %217 {offsets = [0, 0], sizes = [2, 16], strides = [1, 1]} : vector<2x48xf32> to vector<2x16xf32>
    %220 = arith.addf %218, %219 : vector<2x16xf32>
    %221 = arith.negf %220 : vector<2x16xf32>
    %222 = math.exp %221 : vector<2x16xf32>
    %cst_70 = arith.constant 1.000000e+00 : f32
    %223 = vector.broadcast %cst_70 : f32 to vector<2x16xf32>
    %224 = arith.addf %223, %222 : vector<2x16xf32>
    %225 = arith.divf %223, %224 : vector<2x16xf32>
    %226 = vector.extract_strided_slice %214 {offsets = [0, 16], sizes = [2, 16], strides = [1, 1]} : vector<2x48xf32> to vector<2x16xf32>
    %227 = vector.extract_strided_slice %217 {offsets = [0, 16], sizes = [2, 16], strides = [1, 1]} : vector<2x48xf32> to vector<2x16xf32>
    %228 = arith.addf %226, %227 : vector<2x16xf32>
    %229 = arith.negf %228 : vector<2x16xf32>
    %230 = math.exp %229 : vector<2x16xf32>
    %cst_71 = arith.constant 1.000000e+00 : f32
    %231 = vector.broadcast %cst_71 : f32 to vector<2x16xf32>
    %232 = arith.addf %231, %230 : vector<2x16xf32>
    %233 = arith.divf %231, %232 : vector<2x16xf32>
    %234 = vector.extract_strided_slice %214 {offsets = [0, 32], sizes = [2, 16], strides = [1, 1]} : vector<2x48xf32> to vector<2x16xf32>
    %235 = vector.extract_strided_slice %217 {offsets = [0, 32], sizes = [2, 16], strides = [1, 1]} : vector<2x48xf32> to vector<2x16xf32>
    %236 = arith.mulf %225, %235 : vector<2x16xf32>
    %237 = arith.addf %234, %236 : vector<2x16xf32>
    %238 = math.tanh %237 : vector<2x16xf32>
    %cst_72 = arith.constant 1.000000e+00 : f32
    %239 = vector.broadcast %cst_72 : f32 to vector<2x16xf32>
    %240 = arith.subf %239, %233 : vector<2x16xf32>
    %241 = arith.mulf %240, %238 : vector<2x16xf32>
    %242 = arith.mulf %233, %204 : vector<2x16xf32>
    %243 = arith.addf %241, %242 : vector<2x16xf32>
    %c0_73 = arith.constant 0 : index
    %244 = arith.index_cast %212 : i32 to index
    %c0_74 = arith.constant 0 : index
    %245 = vector.load %arg6[%c0_73, %244, %c0_74] : memref<1x16x16xf32, #tpu.memory_space<vmem>>, vector<1x2x16xf32>
    %246 = vector.shape_cast %245 : vector<1x2x16xf32> to vector<2x16xf32>
    %247 = vector.shape_cast %243 : vector<2x16xf32> to vector<1x2x16xf32>
    tpu.vector_store %arg6[%c0_73, %244, %c0_74], %247 {strides = array<i32>} : memref<1x16x16xf32, #tpu.memory_space<vmem>>, vector<1x2x16xf32>,
    %c6_i32 = arith.constant 6 : i32
    %c0_i32_75 = arith.constant 0 : i32
    %248 = arith.cmpi eq, %arg0, %c0_i32_75 : i32
    %c7_i32_76 = arith.constant 7 : i32
    %249 = arith.subi %c7_i32_76, %c6_i32 : i32
    %250 = arith.select %248, %c6_i32, %249 : i32
    %c2_i32_77 = arith.constant 2 : i32
    %251 = arith.muli %250, %c2_i32_77 : i32
    %252 = arith.index_cast %251 : i32 to index
    %c0_78 = arith.constant 0 : index
    %253 = vector.load %arg7[%252, %c0_78] : memref<16x48xf32, #tpu.memory_space<vmem>>, vector<2x48xf32>
    %cst_79 = arith.constant dense<0.000000e+00> : vector<2x48xf32>
    %254 = tpu.matmul %243, %10, %cst_79 {dimension_numbers = #tpu.dot_dimension_numbers<[1], [0], [0], [1], [0, 0, 1, 1], [], []>} : vector<2x16xf32>, vector<16x48xf32>, vector<2x48xf32> -> vector<2x48xf32>
    %255 = vector.broadcast %12 : vector<1x48xf32> to vector<2x48xf32>
    %256 = arith.addf %254, %255 : vector<2x48xf32>
    %257 = vector.extract_strided_slice %253 {offsets = [0, 0], sizes = [2, 16], strides = [1, 1]} : vector<2x48xf32> to vector<2x16xf32>
    %258 = vector.extract_strided_slice %256 {offsets = [0, 0], sizes = [2, 16], strides = [1, 1]} : vector<2x48xf32> to vector<2x16xf32>
    %259 = arith.addf %257, %258 : vector<2x16xf32>
    %260 = arith.negf %259 : vector<2x16xf32>
    %261 = math.exp %260 : vector<2x16xf32>
    %cst_80 = arith.constant 1.000000e+00 : f32
    %262 = vector.broadcast %cst_80 : f32 to vector<2x16xf32>
    %263 = arith.addf %262, %261 : vector<2x16xf32>
    %264 = arith.divf %262, %263 : vector<2x16xf32>
    %265 = vector.extract_strided_slice %253 {offsets = [0, 16], sizes = [2, 16], strides = [1, 1]} : vector<2x48xf32> to vector<2x16xf32>
    %266 = vector.extract_strided_slice %256 {offsets = [0, 16], sizes = [2, 16], strides = [1, 1]} : vector<2x48xf32> to vector<2x16xf32>
    %267 = arith.addf %265, %266 : vector<2x16xf32>
    %268 = arith.negf %267 : vector<2x16xf32>
    %269 = math.exp %268 : vector<2x16xf32>
    %cst_81 = arith.constant 1.000000e+00 : f32
    %270 = vector.broadcast %cst_81 : f32 to vector<2x16xf32>
    %271 = arith.addf %270, %269 : vector<2x16xf32>
    %272 = arith.divf %270, %271 : vector<2x16xf32>
    %273 = vector.extract_strided_slice %253 {offsets = [0, 32], sizes = [2, 16], strides = [1, 1]} : vector<2x48xf32> to vector<2x16xf32>
    %274 = vector.extract_strided_slice %256 {offsets = [0, 32], sizes = [2, 16], strides = [1, 1]} : vector<2x48xf32> to vector<2x16xf32>
    %275 = arith.mulf %264, %274 : vector<2x16xf32>
    %276 = arith.addf %273, %275 : vector<2x16xf32>
    %277 = math.tanh %276 : vector<2x16xf32>
    %cst_82 = arith.constant 1.000000e+00 : f32
    %278 = vector.broadcast %cst_82 : f32 to vector<2x16xf32>
    %279 = arith.subf %278, %272 : vector<2x16xf32>
    %280 = arith.mulf %279, %277 : vector<2x16xf32>
    %281 = arith.mulf %272, %243 : vector<2x16xf32>
    %282 = arith.addf %280, %281 : vector<2x16xf32>
    %c0_83 = arith.constant 0 : index
    %283 = arith.index_cast %251 : i32 to index
    %c0_84 = arith.constant 0 : index
    %284 = vector.load %arg6[%c0_83, %283, %c0_84] : memref<1x16x16xf32, #tpu.memory_space<vmem>>, vector<1x2x16xf32>
    %285 = vector.shape_cast %284 : vector<1x2x16xf32> to vector<2x16xf32>
    %286 = vector.shape_cast %282 : vector<2x16xf32> to vector<1x2x16xf32>
    tpu.vector_store %arg6[%c0_83, %283, %c0_84], %286 {strides = array<i32>} : memref<1x16x16xf32, #tpu.memory_space<vmem>>, vector<1x2x16xf32>,
    %c7_i32_85 = arith.constant 7 : i32
    %c0_i32_86 = arith.constant 0 : i32
    %287 = arith.cmpi eq, %arg0, %c0_i32_86 : i32
    %c7_i32_87 = arith.constant 7 : i32
    %288 = arith.subi %c7_i32_87, %c7_i32_85 : i32
    %289 = arith.select %287, %c7_i32_85, %288 : i32
    %c2_i32_88 = arith.constant 2 : i32
    %290 = arith.muli %289, %c2_i32_88 : i32
    %291 = arith.index_cast %290 : i32 to index
    %c0_89 = arith.constant 0 : index
    %292 = vector.load %arg7[%291, %c0_89] : memref<16x48xf32, #tpu.memory_space<vmem>>, vector<2x48xf32>
    %cst_90 = arith.constant dense<0.000000e+00> : vector<2x48xf32>
    %293 = tpu.matmul %282, %10, %cst_90 {dimension_numbers = #tpu.dot_dimension_numbers<[1], [0], [0], [1], [0, 0, 1, 1], [], []>} : vector<2x16xf32>, vector<16x48xf32>, vector<2x48xf32> -> vector<2x48xf32>
    %294 = vector.broadcast %12 : vector<1x48xf32> to vector<2x48xf32>
    %295 = arith.addf %293, %294 : vector<2x48xf32>
    %296 = vector.extract_strided_slice %292 {offsets = [0, 0], sizes = [2, 16], strides = [1, 1]} : vector<2x48xf32> to vector<2x16xf32>
    %297 = vector.extract_strided_slice %295 {offsets = [0, 0], sizes = [2, 16], strides = [1, 1]} : vector<2x48xf32> to vector<2x16xf32>
    %298 = arith.addf %296, %297 : vector<2x16xf32>
    %299 = arith.negf %298 : vector<2x16xf32>
    %300 = math.exp %299 : vector<2x16xf32>
    %cst_91 = arith.constant 1.000000e+00 : f32
    %301 = vector.broadcast %cst_91 : f32 to vector<2x16xf32>
    %302 = arith.addf %301, %300 : vector<2x16xf32>
    %303 = arith.divf %301, %302 : vector<2x16xf32>
    %304 = vector.extract_strided_slice %292 {offsets = [0, 16], sizes = [2, 16], strides = [1, 1]} : vector<2x48xf32> to vector<2x16xf32>
    %305 = vector.extract_strided_slice %295 {offsets = [0, 16], sizes = [2, 16], strides = [1, 1]} : vector<2x48xf32> to vector<2x16xf32>
    %306 = arith.addf %304, %305 : vector<2x16xf32>
    %307 = arith.negf %306 : vector<2x16xf32>
    %308 = math.exp %307 : vector<2x16xf32>
    %cst_92 = arith.constant 1.000000e+00 : f32
    %309 = vector.broadcast %cst_92 : f32 to vector<2x16xf32>
    %310 = arith.addf %309, %308 : vector<2x16xf32>
    %311 = arith.divf %309, %310 : vector<2x16xf32>
    %312 = vector.extract_strided_slice %292 {offsets = [0, 32], sizes = [2, 16], strides = [1, 1]} : vector<2x48xf32> to vector<2x16xf32>
    %313 = vector.extract_strided_slice %295 {offsets = [0, 32], sizes = [2, 16], strides = [1, 1]} : vector<2x48xf32> to vector<2x16xf32>
    %314 = arith.mulf %303, %313 : vector<2x16xf32>
    %315 = arith.addf %312, %314 : vector<2x16xf32>
    %316 = math.tanh %315 : vector<2x16xf32>
    %cst_93 = arith.constant 1.000000e+00 : f32
    %317 = vector.broadcast %cst_93 : f32 to vector<2x16xf32>
    %318 = arith.subf %317, %311 : vector<2x16xf32>
    %319 = arith.mulf %318, %316 : vector<2x16xf32>
    %320 = arith.mulf %311, %282 : vector<2x16xf32>
    %321 = arith.addf %319, %320 : vector<2x16xf32>
    %c0_94 = arith.constant 0 : index
    %322 = arith.index_cast %290 : i32 to index
    %c0_95 = arith.constant 0 : index
    %323 = vector.load %arg6[%c0_94, %322, %c0_95] : memref<1x16x16xf32, #tpu.memory_space<vmem>>, vector<1x2x16xf32>
    %324 = vector.shape_cast %323 : vector<1x2x16xf32> to vector<2x16xf32>
    %325 = vector.shape_cast %321 : vector<2x16xf32> to vector<1x2x16xf32>
    tpu.vector_store %arg6[%c0_94, %322, %c0_95], %325 {strides = array<i32>} : memref<1x16x16xf32, #tpu.memory_space<vmem>>, vector<1x2x16xf32>,
    %c8_i32 = arith.constant 8 : i32
    return
  }
  func.func @transform_0(%arg0: i32) -> (i32, i32) {
    %c0_i32 = arith.constant 0 : i32
    %c0_i32_0 = arith.constant 0 : i32
    %c0_i32_1 = arith.constant 0 : i32
    return %c0_i32, %c0_i32_0 : i32, i32
  }
  func.func @transform_1(%arg0: i32) -> (i32, i32, i32) {
    %c0_i32 = arith.constant 0 : i32
    %c0_i32_0 = arith.constant 0 : i32
    %c0_i32_1 = arith.constant 0 : i32
    return %arg0, %c0_i32, %c0_i32_0 : i32, i32, i32
  }
  func.func @transform_2(%arg0: i32) -> (i32, i32, i32) {
    %c0_i32 = arith.constant 0 : i32
    %c0_i32_0 = arith.constant 0 : i32
    %c0_i32_1 = arith.constant 0 : i32
    return %arg0, %c0_i32, %c0_i32_0 : i32, i32, i32
  }
  func.func @transform_3(%arg0: i32) -> (i32, i32, i32) {
    %c0_i32 = arith.constant 0 : i32
    %c0_i32_0 = arith.constant 0 : i32
    %c0_i32_1 = arith.constant 0 : i32
    return %arg0, %c0_i32, %c0_i32_0 : i32, i32, i32
  }
  func.func @transform_4(%arg0: i32) -> (i32, i32, i32) {
    %c0_i32 = arith.constant 0 : i32
    %c0_i32_0 = arith.constant 0 : i32
    %c0_i32_1 = arith.constant 0 : i32
    return %arg0, %c0_i32, %c0_i32_0 : i32, i32, i32
  }
  func.func @transform_5(%arg0: i32) -> (i32, i32, i32) {
    %c0_i32 = arith.constant 0 : i32
    %c0_i32_0 = arith.constant 0 : i32
    %c0_i32_1 = arith.constant 0 : i32
    return %arg0, %c0_i32, %c0_i32_0 : i32, i32, i32
  }
}

module attributes {stable_mosaic.version = 11 : i64} {
  func.func @_tail_kernel(%arg0: memref<2x8xf32, #tpu.memory_space<vmem>>, %arg1: memref<2x16xf32, #tpu.memory_space<vmem>>, %arg2: memref<2x16x16xf32, #tpu.memory_space<vmem>>, %arg3: memref<2x16x16xf32, #tpu.memory_space<vmem>>, %arg4: memref<16x2xf32, #tpu.memory_space<vmem>>, %arg5: memref<8x200xf32, #tpu.memory_space<vmem>>, %arg6: memref<16x200xf32, #tpu.memory_space<vmem>>, %arg7: memref<16x200xf32, #tpu.memory_space<vmem>>, %arg8: memref<16x200xf32, #tpu.memory_space<vmem>>, %arg9: memref<16x200xf32, #tpu.memory_space<vmem>>, %arg10: memref<1x200xf32, #tpu.memory_space<vmem>>, %arg11: memref<200x200xf32, #tpu.memory_space<vmem>>, %arg12: memref<1x200xf32, #tpu.memory_space<vmem>>, %arg13: memref<200x128xf32, #tpu.memory_space<vmem>>, %arg14: memref<1x128xf32, #tpu.memory_space<vmem>>, %arg15: memref<16x128xf32, #tpu.memory_space<vmem>>) attributes {dimension_semantics = [], scalar_prefetch = 0 : i64, scratch_operands = 0 : i64, tpu.core_type = #tpu.core_type<tc>} {
    %c0 = arith.constant 0 : index
    %c0_0 = arith.constant 0 : index
    %0 = vector.load %arg1[%c0, %c0_0] : memref<2x16xf32, #tpu.memory_space<vmem>>, vector<2x16xf32>
    %c0_1 = arith.constant 0 : index
    %c0_2 = arith.constant 0 : index
    %c0_3 = arith.constant 0 : index
    %1 = vector.load %arg2[%c0_1, %c0_2, %c0_3] : memref<2x16x16xf32, #tpu.memory_space<vmem>>, vector<1x16x16xf32>
    %2 = vector.shape_cast %1 : vector<1x16x16xf32> to vector<16x16xf32>
    %cst = arith.constant dense<0.000000e+00> : vector<2x16xf32>
    %3 = tpu.matmul %0, %2, %cst {dimension_numbers = #tpu.dot_dimension_numbers<[1], [0], [0], [1], [0, 0, 1, 1], [], []>} : vector<2x16xf32>, vector<16x16xf32>, vector<2x16xf32> -> vector<2x16xf32>
    %c0_4 = arith.constant 0 : index
    %c0_5 = arith.constant 0 : index
    %4 = vector.load %arg1[%c0_4, %c0_5] : memref<2x16xf32, #tpu.memory_space<vmem>>, vector<2x16xf32>
    %c1 = arith.constant 1 : index
    %c0_6 = arith.constant 0 : index
    %c0_7 = arith.constant 0 : index
    %5 = vector.load %arg2[%c1, %c0_6, %c0_7] : memref<2x16x16xf32, #tpu.memory_space<vmem>>, vector<1x16x16xf32>
    %6 = vector.shape_cast %5 : vector<1x16x16xf32> to vector<16x16xf32>
    %cst_8 = arith.constant dense<0.000000e+00> : vector<2x16xf32>
    %7 = tpu.matmul %4, %6, %cst_8 {dimension_numbers = #tpu.dot_dimension_numbers<[1], [0], [0], [1], [0, 0, 1, 1], [], []>} : vector<2x16xf32>, vector<16x16xf32>, vector<2x16xf32> -> vector<2x16xf32>
    %c0_9 = arith.constant 0 : index
    %c0_10 = arith.constant 0 : index
    %8 = vector.load %arg0[%c0_9, %c0_10] : memref<2x8xf32, #tpu.memory_space<vmem>>, vector<2x8xf32>
    %c0_11 = arith.constant 0 : index
    %c0_12 = arith.constant 0 : index
    %9 = vector.load %arg5[%c0_11, %c0_12] : memref<8x200xf32, #tpu.memory_space<vmem>>, vector<8x200xf32>
    %cst_13 = arith.constant dense<0.000000e+00> : vector<2x200xf32>
    %10 = tpu.matmul %8, %9, %cst_13 {dimension_numbers = #tpu.dot_dimension_numbers<[1], [0], [0], [1], [0, 0, 1, 1], [], []>} : vector<2x8xf32>, vector<8x200xf32>, vector<2x200xf32> -> vector<2x200xf32>
    %c0_14 = arith.constant 0 : index
    %c0_15 = arith.constant 0 : index
    %11 = vector.load %arg6[%c0_14, %c0_15] : memref<16x200xf32, #tpu.memory_space<vmem>>, vector<16x200xf32>
    %cst_16 = arith.constant dense<0.000000e+00> : vector<2x200xf32>
    %12 = tpu.matmul %3, %11, %cst_16 {dimension_numbers = #tpu.dot_dimension_numbers<[1], [0], [0], [1], [0, 0, 1, 1], [], []>} : vector<2x16xf32>, vector<16x200xf32>, vector<2x200xf32> -> vector<2x200xf32>
    %13 = arith.addf %10, %12 : vector<2x200xf32>
    %c0_17 = arith.constant 0 : index
    %c0_18 = arith.constant 0 : index
    %14 = vector.load %arg7[%c0_17, %c0_18] : memref<16x200xf32, #tpu.memory_space<vmem>>, vector<16x200xf32>
    %cst_19 = arith.constant dense<0.000000e+00> : vector<2x200xf32>
    %15 = tpu.matmul %7, %14, %cst_19 {dimension_numbers = #tpu.dot_dimension_numbers<[1], [0], [0], [1], [0, 0, 1, 1], [], []>} : vector<2x16xf32>, vector<16x200xf32>, vector<2x200xf32> -> vector<2x200xf32>
    %16 = arith.addf %13, %15 : vector<2x200xf32>
    %c0_20 = arith.constant 0 : index
    %c0_21 = arith.constant 0 : index
    %17 = vector.load %arg10[%c0_20, %c0_21] : memref<1x200xf32, #tpu.memory_space<vmem>>, vector<1x200xf32>
    %18 = vector.broadcast %17 : vector<1x200xf32> to vector<2x200xf32>
    %19 = arith.addf %16, %18 : vector<2x200xf32>
    %c0_22 = arith.constant 0 : index
    %c0_23 = arith.constant 0 : index
    %c0_24 = arith.constant 0 : index
    %20 = vector.load %arg3[%c0_22, %c0_23, %c0_24] : memref<2x16x16xf32, #tpu.memory_space<vmem>>, vector<1x16x16xf32>
    %21 = vector.shape_cast %20 : vector<1x16x16xf32> to vector<16x16xf32>
    %c0_25 = arith.constant 0 : index
    %c0_26 = arith.constant 0 : index
    %22 = vector.load %arg8[%c0_25, %c0_26] : memref<16x200xf32, #tpu.memory_space<vmem>>, vector<16x200xf32>
    %cst_27 = arith.constant dense<0.000000e+00> : vector<16x200xf32>
    %23 = tpu.matmul %21, %22, %cst_27 {dimension_numbers = #tpu.dot_dimension_numbers<[1], [0], [0], [1], [0, 0, 1, 1], [], []>} : vector<16x16xf32>, vector<16x200xf32>, vector<16x200xf32> -> vector<16x200xf32>
    %c1_28 = arith.constant 1 : index
    %c0_29 = arith.constant 0 : index
    %c0_30 = arith.constant 0 : index
    %24 = vector.load %arg3[%c1_28, %c0_29, %c0_30] : memref<2x16x16xf32, #tpu.memory_space<vmem>>, vector<1x16x16xf32>
    %25 = vector.shape_cast %24 : vector<1x16x16xf32> to vector<16x16xf32>
    %c0_31 = arith.constant 0 : index
    %c0_32 = arith.constant 0 : index
    %26 = vector.load %arg9[%c0_31, %c0_32] : memref<16x200xf32, #tpu.memory_space<vmem>>, vector<16x200xf32>
    %cst_33 = arith.constant dense<0.000000e+00> : vector<16x200xf32>
    %27 = tpu.matmul %25, %26, %cst_33 {dimension_numbers = #tpu.dot_dimension_numbers<[1], [0], [0], [1], [0, 0, 1, 1], [], []>} : vector<16x16xf32>, vector<16x200xf32>, vector<16x200xf32> -> vector<16x200xf32>
    %28 = arith.addf %23, %27 : vector<16x200xf32>
    %c0_34 = arith.constant 0 : index
    %c0_35 = arith.constant 0 : index
    %29 = vector.load %arg4[%c0_34, %c0_35] : memref<16x2xf32, #tpu.memory_space<vmem>>, vector<16x2xf32>
    %cst_36 = arith.constant dense<0.000000e+00> : vector<16x200xf32>
    %30 = tpu.matmul %29, %19, %cst_36 {dimension_numbers = #tpu.dot_dimension_numbers<[1], [0], [0], [1], [0, 0, 1, 1], [], []>} : vector<16x2xf32>, vector<2x200xf32>, vector<16x200xf32> -> vector<16x200xf32>
    %31 = arith.addf %28, %30 : vector<16x200xf32>
    %32 = arith.negf %31 : vector<16x200xf32>
    %33 = math.exp %32 : vector<16x200xf32>
    %cst_37 = arith.constant 1.000000e+00 : f32
    %34 = vector.broadcast %cst_37 : f32 to vector<16x200xf32>
    %35 = arith.addf %34, %33 : vector<16x200xf32>
    %36 = arith.divf %34, %35 : vector<16x200xf32>
    %c0_38 = arith.constant 0 : index
    %c0_39 = arith.constant 0 : index
    %37 = vector.load %arg11[%c0_38, %c0_39] : memref<200x200xf32, #tpu.memory_space<vmem>>, vector<200x200xf32>
    %cst_40 = arith.constant dense<0.000000e+00> : vector<16x200xf32>
    %38 = tpu.matmul %36, %37, %cst_40 {dimension_numbers = #tpu.dot_dimension_numbers<[1], [0], [0], [1], [0, 0, 1, 1], [], []>} : vector<16x200xf32>, vector<200x200xf32>, vector<16x200xf32> -> vector<16x200xf32>
    %c0_41 = arith.constant 0 : index
    %c0_42 = arith.constant 0 : index
    %39 = vector.load %arg12[%c0_41, %c0_42] : memref<1x200xf32, #tpu.memory_space<vmem>>, vector<1x200xf32>
    %40 = vector.broadcast %39 : vector<1x200xf32> to vector<16x200xf32>
    %41 = arith.addf %38, %40 : vector<16x200xf32>
    %42 = arith.negf %41 : vector<16x200xf32>
    %43 = math.exp %42 : vector<16x200xf32>
    %cst_43 = arith.constant 1.000000e+00 : f32
    %44 = vector.broadcast %cst_43 : f32 to vector<16x200xf32>
    %45 = arith.addf %44, %43 : vector<16x200xf32>
    %46 = arith.divf %44, %45 : vector<16x200xf32>
    %c0_44 = arith.constant 0 : index
    %c0_45 = arith.constant 0 : index
    %47 = vector.load %arg13[%c0_44, %c0_45] : memref<200x128xf32, #tpu.memory_space<vmem>>, vector<200x128xf32>
    %cst_46 = arith.constant dense<0.000000e+00> : vector<16x128xf32>
    %48 = tpu.matmul %46, %47, %cst_46 {dimension_numbers = #tpu.dot_dimension_numbers<[1], [0], [0], [1], [0, 0, 1, 1], [], []>} : vector<16x200xf32>, vector<200x128xf32>, vector<16x128xf32> -> vector<16x128xf32>
    %c0_47 = arith.constant 0 : index
    %c0_48 = arith.constant 0 : index
    %49 = vector.load %arg14[%c0_47, %c0_48] : memref<1x128xf32, #tpu.memory_space<vmem>>, vector<1x128xf32>
    %50 = vector.broadcast %49 : vector<1x128xf32> to vector<16x128xf32>
    %51 = arith.addf %48, %50 : vector<16x128xf32>
    %52 = arith.negf %51 : vector<16x128xf32>
    %53 = math.exp %52 : vector<16x128xf32>
    %cst_49 = arith.constant 1.000000e+00 : f32
    %54 = vector.broadcast %cst_49 : f32 to vector<16x128xf32>
    %55 = arith.addf %54, %53 : vector<16x128xf32>
    %56 = arith.divf %54, %55 : vector<16x128xf32>
    %c0_50 = arith.constant 0 : index
    %c0_51 = arith.constant 0 : index
    %57 = vector.load %arg15[%c0_50, %c0_51] : memref<16x128xf32, #tpu.memory_space<vmem>>, vector<16x128xf32>
    tpu.vector_store %arg15[%c0_50, %c0_51], %56 {strides = array<i32>} : memref<16x128xf32, #tpu.memory_space<vmem>>, vector<16x128xf32>,
    return
  }
}

</mosaic_0001>

<llo_original>
// kernel: recurrent_tgt_forward.4
$region0: #{recurrent_tgt_forward.4}
  #allocation0 [shape = 'u32[]', space=smem, size = 0x4, offset = 0x4, fixed_abs, tag = 'smem constant byte address 0x4 - core index']
  #allocation1 [shape = 'u32[144,128]{1,0:T(1,128)}', space=vmem, size = 0x12000, scoped, tag = 'internal scratch']
  #allocation2 [shape = 'f32[16,48]{1,0:T(8,128)}', space=vmem, size = 0x2000, scoped, tag = 'scratch operand']
  %s0 = inlined_call_operand.vmem [shape: f32[16,16], index: 0, kind: input, shape index: {}]
  %s1 = inlined_call_operand.vmem [shape: f32[2,16,48], index: 1, kind: input, shape index: {}]
  %s2 = inlined_call_operand.vmem [shape: f32[2,16,48], index: 2, kind: input, shape index: {}]
  %s3 = inlined_call_operand.vmem [shape: f32[2,1,48], index: 3, kind: input, shape index: {}]
  %s4 = inlined_call_operand.vmem [shape: f32[2,1,48], index: 4, kind: input, shape index: {}]
  %s5 = inlined_call_operand.vmem [shape: f32[2,16,16], index: 5, kind: output, shape index: {}]
  %s6 = sld [smem:[#allocation0]]
  $region53: #{recurrent_tgt_forward.4} parent=0
    _
  %s8 = ssub.s32 1, %s6
  %s9 = scalar_select 0, %s8, %s6
  loop: start=0, step=1, limit=4
  $region2: #{recurrent_tgt_forward.4} parent=0 // loop_pre_header
    _
  $region3: #{recurrent_tgt_forward.4} parent=0 // loop_header
    %s11 = sphi 0, %s15
    %p12 = scmp.ge.s32.totalorder %s11, 4
    %s19 = sphi 0, %s19
    %s21 = sphi 0, %s19
    %s22 = sphi 0, %s21
    %s36 = sphi 0, %s22
    %s42 = sphi 0, %s44
    %s45 = sphi 0, %s42
    %s46 = sphi 0, %s45
    %s62 = sphi 0, %s46
    %s68 = sphi 0, %s70
    %s71 = sphi 0, %s68
    %s72 = sphi 0, %s71
    %s88 = sphi 0, %s72
    %s94 = sphi 0, %s96
    %s97 = sphi 0, %s94
    %s98 = sphi 0, %s97
    %s114 = sphi 0, %s98
    %s120 = sphi 0, %s122
    %s123 = sphi 0, %s120
    %s124 = sphi 0, %s123
    %s140 = sphi 0, %s124
    %s146 = sphi 0, %s148
    %s149 = sphi 0, %s146
    %s150 = sphi 0, %s149
    %s166 = sphi 0, %s150
  $region4: #{recurrent_tgt_forward.4} parent=0 // loop_header_branch
    %14 = sbr.rel (%p12) target = $region8
  $region5: #{recurrent_tgt_forward.4} parent=0 // loop_body
    %s16 = ssub.s32 %s11, 1
    %s17 = ssub.s32 %s11, 2
    %s18 = sadd.s32 %s11, 1
    %s20 = sadd.s32 %s19, 1
    %p23 = scmp.eq.s32.totalorder %s11, 1
    %p24 = scmp.ne.s32.totalorder %s19, %s21
    %p25 = scmp.eq.s32.totalorder %s11, 0
    %p26 = por %p24, %p25
    %p27 = scmp.ne.s32.totalorder %s19, %s21
    %p28 = scmp.eq.s32.totalorder %s16, 1
    %p29 = por %p27, %p28
    %p30 = scmp.ne.s32.totalorder %s21, %s22
    %p31 = scmp.eq.s32.totalorder %s16, 0
    %p32 = por %p30, %p31
    %p33 = scmp.ne.s32.totalorder %s21, %s22
    %p34 = scmp.eq.s32.totalorder %s17, 1
    %p35 = por %p33, %p34
    %p37 = scmp.ne.s32.totalorder %s22, %s36
    %p38 = scmp.eq.s32.totalorder %s17, 0
    %p39 = por %p37, %p38
    %s40 = ssub.s32 %s11, %s18
    %p41 = scmp.eq.s32.totalorder %s40, 0
    %s43 = sadd.s32 %s42, 1
    %s44 = scalar_select %p41, %s42, %s43
    %p47 = pneg %p41
    %p48 = scmp.eq.s32.totalorder %s11, 1
    %p49 = por %p47, %p48
    %p50 = scmp.ne.s32.totalorder %s42, %s45
    %p51 = scmp.eq.s32.totalorder %s11, 0
    %p52 = por %p50, %p51
    %p53 = scmp.ne.s32.totalorder %s42, %s45
    %p54 = scmp.eq.s32.totalorder %s16, 1
    %p55 = por %p53, %p54
    %p56 = scmp.ne.s32.totalorder %s45, %s46
    %p57 = scmp.eq.s32.totalorder %s16, 0
    %p58 = por %p56, %p57
    %p59 = scmp.ne.s32.totalorder %s45, %s46
    %p60 = scmp.eq.s32.totalorder %s17, 1
    %p61 = por %p59, %p60
    %p63 = scmp.ne.s32.totalorder %s46, %s62
    %p64 = scmp.eq.s32.totalorder %s17, 0
    %p65 = por %p63, %p64
    %s66 = ssub.s32 %s11, %s18
    %p67 = scmp.eq.s32.totalorder %s66, 0
    %s69 = sadd.s32 %s68, 1
    %s70 = scalar_select %p67, %s68, %s69
    %p73 = pneg %p67
    %p74 = scmp.eq.s32.totalorder %s11, 1
    %p75 = por %p73, %p74
    %p76 = scmp.ne.s32.totalorder %s68, %s71
    %p77 = scmp.eq.s32.totalorder %s11, 0
    %p78 = por %p76, %p77
    %p79 = scmp.ne.s32.totalorder %s68, %s71
    %p80 = scmp.eq.s32.totalorder %s16, 1
    %p81 = por %p79, %p80
    %p82 = scmp.ne.s32.totalorder %s71, %s72
    %p83 = scmp.eq.s32.totalorder %s16, 0
    %p84 = por %p82, %p83
    %p85 = scmp.ne.s32.totalorder %s71, %s72
    %p86 = scmp.eq.s32.totalorder %s17, 1
    %p87 = por %p85, %p86
    %p89 = scmp.ne.s32.totalorder %s72, %s88
    %p90 = scmp.eq.s32.totalorder %s17, 0
    %p91 = por %p89, %p90
    %s92 = ssub.s32 %s11, %s18
    %p93 = scmp.eq.s32.totalorder %s92, 0
    %s95 = sadd.s32 %s94, 1
    %s96 = scalar_select %p93, %s94, %s95
    %p99 = pneg %p93
    %p100 = scmp.eq.s32.totalorder %s11, 1
    %p101 = por %p99, %p100
    %p102 = scmp.ne.s32.totalorder %s94, %s97
    %p103 = scmp.eq.s32.totalorder %s11, 0
    %p104 = por %p102, %p103
    %p105 = scmp.ne.s32.totalorder %s94, %s97
    %p106 = scmp.eq.s32.totalorder %s16, 1
    %p107 = por %p105, %p106
    %p108 = scmp.ne.s32.totalorder %s97, %s98
    %p109 = scmp.eq.s32.totalorder %s16, 0
    %p110 = por %p108, %p109
    %p111 = scmp.ne.s32.totalorder %s97, %s98
    %p112 = scmp.eq.s32.totalorder %s17, 1
    %p113 = por %p111, %p112
    %p115 = scmp.ne.s32.totalorder %s98, %s114
    %p116 = scmp.eq.s32.totalorder %s17, 0
    %p117 = por %p115, %p116
    %s118 = ssub.s32 %s11, %s18
    %p119 = scmp.eq.s32.totalorder %s118, 0
    %s121 = sadd.s32 %s120, 1
    %s122 = scalar_select %p119, %s120, %s121
    %p125 = pneg %p119
    %p126 = scmp.eq.s32.totalorder %s11, 1
    %p127 = por %p125, %p126
    %p128 = scmp.ne.s32.totalorder %s120, %s123
    %p129 = scmp.eq.s32.totalorder %s11, 0
    %p130 = por %p128, %p129
    %p131 = scmp.ne.s32.totalorder %s120, %s123
    %p132 = scmp.eq.s32.totalorder %s16, 1
    %p133 = por %p131, %p132
    %p134 = scmp.ne.s32.totalorder %s123, %s124
    %p135 = scmp.eq.s32.totalorder %s16, 0
    %p136 = por %p134, %p135
    %p137 = scmp.ne.s32.totalorder %s123, %s124
    %p138 = scmp.eq.s32.totalorder %s17, 1
    %p139 = por %p137, %p138
    %p141 = scmp.ne.s32.totalorder %s124, %s140
    %p142 = scmp.eq.s32.totalorder %s17, 0
    %p143 = por %p141, %p142
    %s144 = ssub.s32 %s11, %s18
    %p145 = scmp.eq.s32.totalorder %s144, 0
    %s147 = sadd.s32 %s146, 1
    %s148 = scalar_select %p145, %s146, %s147
    %p151 = pneg %p145
    %p152 = scmp.eq.s32.totalorder %s11, 1
    %p153 = por %p151, %p152
    %p154 = scmp.ne.s32.totalorder %s146, %s149
    %p155 = scmp.eq.s32.totalorder %s11, 0
    %p156 = por %p154, %p155
    %p157 = scmp.ne.s32.totalorder %s146, %s149
    %p158 = scmp.eq.s32.totalorder %s16, 1
    %p159 = por %p157, %p158
    %p160 = scmp.ne.s32.totalorder %s149, %s150
    %p161 = scmp.eq.s32.totalorder %s16, 0
    %p162 = por %p160, %p161
    %p163 = scmp.ne.s32.totalorder %s149, %s150
    %p164 = scmp.eq.s32.totalorder %s17, 1
    %p165 = por %p163, %p164
    %p167 = scmp.ne.s32.totalorder %s150, %s166
    %p168 = scmp.eq.s32.totalorder %s17, 0
    %p169 = por %p167, %p168
    %p170 = scmp.le.s32.totalorder 1, %s11
    %p171 = scmp.lt.s32.totalorder %s11, 3
    %p172 = pnand %p170, %p171
    %p173 = pneg %p172
    // Predicated region
    $region9: #{recurrent_tgt_forward.4} parent=5 // pred_check
      _
    $region10: #{recurrent_tgt_forward.4} parent=5 // pred_check_branch
      %175 = sbr.rel (%p172) target = $region12
    $region11: #{recurrent_tgt_forward.4} parent=5 // pred_region
      %s176 = ssub.s32 %s11, 1
      // Predicated region
      $region13: #{recurrent_tgt_forward.4} parent=11 // pred_check
        %p177 = pneg %p32
      $region14: #{recurrent_tgt_forward.4} parent=11 // pred_check_branch
        %179 = sbr.rel (%p177) target = $region16
      $region15: #{recurrent_tgt_forward.4} parent=11 // pred_region
        _
      $region16: #{recurrent_tgt_forward.4} parent=11 // pred_fallthru
        _
    $region12: #{recurrent_tgt_forward.4} parent=5 // pred_fallthru
      _
    %p180 = scmp.lt.s32.totalorder %s11, 2
    // Predicated region
    $region17: #{recurrent_tgt_forward.4} parent=5 // pred_check
      %p181 = pneg %p180
    $region18: #{recurrent_tgt_forward.4} parent=5 // pred_check_branch
      %183 = sbr.rel (%p181) target = $region20
    $region19: #{recurrent_tgt_forward.4} parent=5 // pred_region
      // Predicated region
      $region21: #{recurrent_tgt_forward.4} parent=19 // pred_check
        %p184 = pneg %p52
      $region22: #{recurrent_tgt_forward.4} parent=19 // pred_check_branch
        %186 = sbr.rel (%p184) target = $region24
      $region23: #{recurrent_tgt_forward.4} parent=19 // pred_region
        %p187 = scmp.lt.s32.totalorder %s11, 1
        %s188 = scalar_select %p187, %s11, 1
        %s189 = smul.addr %s188, 2
        %s190 = smul.addr %s189, 8
        %s191 = scalar_lea.vmem %s1, %s190
      $region24: #{recurrent_tgt_forward.4} parent=19 // pred_fallthru
        _
      // Predicated region
      $region25: #{recurrent_tgt_forward.4} parent=19 // pred_check
        %p192 = pneg %p78
      $region26: #{recurrent_tgt_forward.4} parent=19 // pred_check_branch
        %194 = sbr.rel (%p192) target = $region28
      $region27: #{recurrent_tgt_forward.4} parent=19 // pred_region
        %p195 = scmp.lt.s32.totalorder %s11, 1
        %s196 = scalar_select %p195, %s11, 1
        %s197 = smul.addr %s196, 2
        %s198 = smul.addr %s197, 8
        %s199 = scalar_lea.vmem %s2, %s198
      $region28: #{recurrent_tgt_forward.4} parent=19 // pred_fallthru
        _
      // Predicated region
      $region29: #{recurrent_tgt_forward.4} parent=19 // pred_check
        %p200 = pneg %p104
      $region30: #{recurrent_tgt_forward.4} parent=19 // pred_check_branch
        %202 = sbr.rel (%p200) target = $region32
      $region31: #{recurrent_tgt_forward.4} parent=19 // pred_region
        %p203 = scmp.lt.s32.totalorder %s11, 1
        %s204 = scalar_select %p203, %s11, 1
        %s205 = scalar_lea.vmem %s3, %s204
      $region32: #{recurrent_tgt_forward.4} parent=19 // pred_fallthru
        _
      // Predicated region
      $region33: #{recurrent_tgt_forward.4} parent=19 // pred_check
        %p206 = pneg %p130
      $region34: #{recurrent_tgt_forward.4} parent=19 // pred_check_branch
        %208 = sbr.rel (%p206) target = $region36
      $region35: #{recurrent_tgt_forward.4} parent=19 // pred_region
        %p209 = scmp.lt.s32.totalorder %s11, 1
        %s210 = scalar_select %p209, %s11, 1
        %s211 = scalar_lea.vmem %s4, %s210
      $region36: #{recurrent_tgt_forward.4} parent=19 // pred_fallthru
        _
    $region20: #{recurrent_tgt_forward.4} parent=5 // pred_fallthru
      _
    %p212 = scmp.le.s32.totalorder 1, %s11
    %p213 = scmp.lt.s32.totalorder %s11, 3
    %p214 = pnand %p212, %p213
    %p215 = pneg %p214
    // Predicated region
    $region37: #{recurrent_tgt_forward.4} parent=5 // pred_check
      _
    $region38: #{recurrent_tgt_forward.4} parent=5 // pred_check_branch
      %217 = sbr.rel (%p214) target = $region40
    $region39: #{recurrent_tgt_forward.4} parent=5 // pred_region
      %s218 = ssub.s32 %s11, 1
      %p219 = pneg %p32
      %p220 = pneg %p29
      %p221 = scmp.lt.s32.totalorder %s16, 1
      %s222 = scalar_select %p221, %s16, 1
      %s223 = smul.addr %s222, 2
      %s224 = smul.addr %s223, 8
      %s225 = scalar_lea.vmem %s1, %s224
      %p226 = pneg %p58
      %p227 = pneg %p55
      %p228 = scmp.lt.s32.totalorder %s16, 1
      %s229 = scalar_select %p228, %s16, 1
      %s230 = smul.addr %s229, 2
      %s231 = smul.addr %s230, 8
      %s232 = scalar_lea.vmem %s2, %s231
      %p233 = pneg %p84
      %p234 = pneg %p81
      %p235 = scmp.lt.s32.totalorder %s16, 1
      %s236 = scalar_select %p235, %s16, 1
      %s237 = scalar_lea.vmem %s3, %s236
      %p238 = pneg %p110
      %p239 = pneg %p107
      %p240 = scmp.lt.s32.totalorder %s16, 1
      %s241 = scalar_select %p240, %s16, 1
      %s242 = scalar_lea.vmem %s4, %s241
      %p243 = pneg %p136
      %p244 = pneg %p133
      %p245 = pneg %p162
      %p246 = pneg %p159
      %p247 = scmp.lt.s32.totalorder %s16, 1
      %s248 = scalar_select %p247, %s16, 1
      %s249 = smul.addr %s248, 2
      %s250 = smul.addr %s249, 8
      %s251 = scalar_lea.vmem %s5, %s250
      %p252 = scmp.lt.s32.totalorder %s16, 1
      %s253 = scalar_select %p252, %s16, 1
      %s254 = smul.addr %s253, 2
      %s255 = smul.addr %s254, 8
      %s256 = scalar_lea.vmem %s1, %s255
      %p257 = scmp.lt.s32.totalorder %s16, 1
      %s258 = scalar_select %p257, %s16, 1
      %s259 = smul.addr %s258, 2
      %s260 = smul.addr %s259, 8
      %s261 = scalar_lea.vmem %s2, %s260
      %p262 = scmp.lt.s32.totalorder %s16, 1
      %s263 = scalar_select %p262, %s16, 1
      %s264 = scalar_lea.vmem %s3, %s263
      %p265 = scmp.lt.s32.totalorder %s16, 1
      %s266 = scalar_select %p265, %s16, 1
      %s267 = scalar_lea.vmem %s4, %s266
      %p268 = scmp.lt.s32.totalorder %s16, 1
      %s269 = scalar_select %p268, %s16, 1
      %s270 = smul.addr %s269, 2
      %s271 = smul.addr %s270, 8
      %s272 = scalar_lea.vmem %s5, %s271
      %v273 = vld [vmem:[%s0] sm:$0xff]
      %v274 = vld [vmem:[%s0 + $0x8] sm:$0xff]
      %v275 = vld [vmem:[%s256] sm:$0xff]
      %v276 = vld [vmem:[%s256 + $0x8] sm:$0xff]
      %v277 = vld [vmem:[%s264] sm:$0x1]
      %v279 = vlaneseq
      %v280 = vshrl.u32 %v279, 7
      %v281 = vsub.s32 0, %v280
      %v282 = vrot.slane %v277, %v281
      %vm284 = vcmask 130048
      %v286 = vsel %vm284, %v273, 0
      %v289 = vsel %vm284, %v274, 0
      %291 = vmatprep.subr.mxu0 0.0
      %292 = vmatpush1.msra.mxu0 %v275
      %293 = vmatprep.subr.mxu0 0.0
      %294 = vmatpush1.msra.mxu0 %v276
      %295 = vmatprep.subr.mxu0 0.0
      %296 = vmatpush1.msra.mxu0 0.0
      %297 = vmatprep.subr.mxu0 0.0
      %298 = vmatpush1.msra.mxu0 0.0
      %299 = vmatprep.subr.mxu0 0.0
      %300 = vmatpush1.msra.mxu0 0.0
      %301 = vmatprep.subr.mxu0 0.0
      %302 = vmatpush1.msra.mxu0 0.0
      %303 = vmatprep.subr.mxu0 0.0
      %304 = vmatpush1.msra.mxu0 0.0
      %305 = vmatprep.subr.mxu0 0.0
      %306 = vmatpush1.msra.mxu0 0.0
      %307 = vmatprep.subr.mxu0 0.0
      %308 = vmatpush1.msra.mxu0 0.0
      %309 = vmatprep.subr.mxu0 0.0
      %310 = vmatpush1.msra.mxu0 0.0
      %311 = vmatprep.subr.mxu0 0.0
      %312 = vmatpush1.msra.mxu0 0.0
      %313 = vmatprep.subr.mxu0 0.0
      %314 = vmatpush1.msra.mxu0 0.0
      %315 = vmatprep.subr.mxu0 0.0
      %316 = vmatpush1.msra.mxu0 0.0
      %317 = vmatprep.subr.mxu0 0.0
      %318 = vmatpush1.msra.mxu0 0.0
      %319 = vmatprep.subr.mxu0 0.0
      %320 = vmatpush1.msra.mxu0 0.0
      %321 = vmatprep.subr.mxu0 0.0
      %322 = vmatpush1.msra.mxu0 0.0
      %323 = vmatprep.subr.mxu0 0.0
      %324 = vmatpush1.msra.mxu0 0.0
      %325 = vmatprep.subr.mxu0 0.0
      %326 = vmatpush1.msra.mxu0 0.0
      %327 = vmatprep.subr.mxu0 0.0
      %328 = vmatpush1.msra.mxu0 0.0
      %329 = vmatprep.subr.mxu0 0.0
      %330 = vmatpush1.msra.mxu0 0.0
      %331 = vmatprep.subr.mxu0 0.0
      %332 = vmatpush1.msra.mxu0 0.0
      %333 = vmatprep.subr.mxu0 0.0
      %334 = vmatpush1.msra.mxu0 0.0
      %335 = vmatprep.subr.mxu0 0.0
      %336 = vmatpush1.msra.mxu0 0.0
      %337 = vmatprep.subr.mxu0 0.0
      %338 = vmatpush1.msra.mxu0 0.0
      %339 = vmatprep.subr.mxu0 0.0
      %340 = vmatpush1.msra.mxu0 0.0
      %341 = vmatprep.subr.mxu0 0.0
      %342 = vmatpush1.msra.mxu0 0.0
      %343 = vmatprep.subr.mxu0 0.0
      %344 = vmatpush1.msra.mxu0 0.0
      %345 = vmatprep.subr.mxu0 0.0
      %346 = vmatpush1.msra.mxu0 0.0
      %347 = vmatprep.subr.mxu0 0.0
      %348 = vmatpush1.msra.mxu0 0.0
      %349 = vmatprep.subr.mxu0 0.0
      %350 = vmatpush1.msra.mxu0 0.0
      %351 = vmatprep.subr.mxu0 0.0
      %352 = vmatpush1.msra.mxu0 0.0
      %353 = vmatprep.subr.mxu0 0.0
      %354 = vmatpush1.msra.mxu0 0.0
      %355 = vmatprep.mubr.f32.mxu0 0.0
      %356 = vmatmul.mubr.f32.gmra.mrb[0].mxu0 %v286
      %v357 = vpop.f32.mrb[0].mxu0
      %v358 = vadd.f32 %v282, %v357
      %v359 = vpop.f32.mrb[0].mxu0
      %360 = vmatprep.mubr.f32.mxu0 0.0
      %361 = vmatmul.mubr.f32.gmra.mrb[0].mxu0 %v289
      %v362 = vpop.f32.mrb[0].mxu0
      %v363 = vadd.f32 %v282, %v362
      %v364 = vpop.f32.mrb[0].mxu0
      %365 = vdwg.mxu0
      %vm366 = vcmask 392192
      %367 = vst.msk [vmem:[#allocation2] sm:$0xff] %vm366, %v358
      %368 = vst.msk [vmem:[#allocation2 + $0x8] sm:$0xff] %vm366, %v363
      %v369 = vld [vmem:[%s261] sm:$0xff]
      %v370 = vld [vmem:[%s261 + $0x8] sm:$0xff]
      %v371 = vld [vmem:[%s267] sm:$0x1]
      %p372 = scmp.eq.s32.totalorder %s16, 0
      %s373 = scalar_select %p372, 0, 7
      %s374 = smul.u32 %s373, 2
      %s375 = scalar_lea.vmem [#allocation2], %s374
      %v376 = vld [vmem:[%s375] sm:$0x3]
      %v378 = vlaneseq
      %v379 = vshrl.u32 %v378, 7
      %v380 = vsub.s32 0, %v379
      %v381 = vrot.slane %v371, %v380
      %v384 = vsel %vm284, 0.0, 0
      %386 = vmatprep.subr.mxu0 0.0
      %387 = vmatpush1.msra.mxu0 %v369
      %388 = vmatprep.subr.mxu0 0.0
      %389 = vmatpush1.msra.mxu0 %v370
      %390 = vmatprep.subr.mxu0 0.0
      %391 = vmatpush1.msra.mxu0 0.0
      %392 = vmatprep.subr.mxu0 0.0
      %393 = vmatpush1.msra.mxu0 0.0
      %394 = vmatprep.subr.mxu0 0.0
      %395 = vmatpush1.msra.mxu0 0.0
      %396 = vmatprep.subr.mxu0 0.0
      %397 = vmatpush1.msra.mxu0 0.0
      %398 = vmatprep.subr.mxu0 0.0
      %399 = vmatpush1.msra.mxu0 0.0
      %400 = vmatprep.subr.mxu0 0.0
      %401 = vmatpush1.msra.mxu0 0.0
      %402 = vmatprep.subr.mxu0 0.0
      %403 = vmatpush1.msra.mxu0 0.0
      %404 = vmatprep.subr.mxu0 0.0
      %405 = vmatpush1.msra.mxu0 0.0
      %406 = vmatprep.subr.mxu0 0.0
      %407 = vmatpush1.msra.mxu0 0.0
      %408 = vmatprep.subr.mxu0 0.0
      %409 = vmatpush1.msra.mxu0 0.0
      %410 = vmatprep.subr.mxu0 0.0
      %411 = vmatpush1.msra.mxu0 0.0
      %412 = vmatprep.subr.mxu0 0.0
      %413 = vmatpush1.msra.mxu0 0.0
      %414 = vmatprep.subr.mxu0 0.0
      %415 = vmatpush1.msra.mxu0 0.0
      %416 = vmatprep.subr.mxu0 0.0
      %417 = vmatpush1.msra.mxu0 0.0
      %418 = vmatprep.subr.mxu0 0.0
      %419 = vmatpush1.msra.mxu0 0.0
      %420 = vmatprep.subr.mxu0 0.0
      %421 = vmatpush1.msra.mxu0 0.0
      %422 = vmatprep.subr.mxu0 0.0
      %423 = vmatpush1.msra.mxu0 0.0
      %424 = vmatprep.subr.mxu0 0.0
      %425 = vmatpush1.msra.mxu0 0.0
      %426 = vmatprep.subr.mxu0 0.0
      %427 = vmatpush1.msra.mxu0 0.0
      %428 = vmatprep.subr.mxu0 0.0
      %429 = vmatpush1.msra.mxu0 0.0
      %430 = vmatprep.subr.mxu0 0.0
      %431 = vmatpush1.msra.mxu0 0.0
      %432 = vmatprep.subr.mxu0 0.0
      %433 = vmatpush1.msra.mxu0 0.0
      %434 = vmatprep.subr.mxu0 0.0
      %435 = vmatpush1.msra.mxu0 0.0
      %436 = vmatprep.subr.mxu0 0.0
      %437 = vmatpush1.msra.mxu0 0.0
      %438 = vmatprep.subr.mxu0 0.0
      %439 = vmatpush1.msra.mxu0 0.0
      %440 = vmatprep.subr.mxu0 0.0
      %441 = vmatpush1.msra.mxu0 0.0
      %442 = vmatprep.subr.mxu0 0.0
      %443 = vmatpush1.msra.mxu0 0.0
      %444 = vmatprep.subr.mxu0 0.0
      %445 = vmatpush1.msra.mxu0 0.0
      %446 = vmatprep.subr.mxu0 0.0
      %447 = vmatpush1.msra.mxu0 0.0
      %448 = vmatprep.subr.mxu0 0.0
      %449 = vmatpush1.msra.mxu0 0.0
      %450 = vmatprep.mubr.f32.mxu0 0.0
      %451 = vmatmul.mubr.f32.gmra.mrb[0].mxu0 %v384
      %v452 = vpop.f32.mrb[0].mxu0
      %v453 = vadd.f32 %v381, %v452
      %v454 = vpop.f32.mrb[0].mxu0
      %455 = vdwg.mxu0
      %v456 = vadd.f32 %v376, %v453
      %v457 = vxor.u32 %v456, 2147483648
      %v458 = vmul.f32 %v457, 1.442695
      %v459 = vpow.pop %v458
      %v460 = vadd.f32 %v459, 1.0
      %v461 = vrcp.pop %v460
      %v462 = vmul.f32 1.0, %v461
      %464 = vrot.lane.b32.xlu0 %v453, 96
      %v465 = vpop.permute.xlu0 %464
      %v467 = vmul.f32 %v462, %v465
      %469 = vrot.lane.b32.xlu0 %v467, 32
      %v470 = vpop.permute.xlu0 %469
      %v472 = vadd.f32 %v376, %v470
      %v473 = vtanh.pop %v472
      %v474 = vsub.f32 1.0, %v462
      %476 = vrot.lane.b32.xlu0 %v473, 112
      %v477 = vpop.permute.xlu0 %476
      %v479 = vmul.f32 %v474, %v477
      %v480 = vmul.f32 %v462, 0.0
      %v481 = vadd.f32 %v479, %v480
      %483 = vrot.lane.b32.xlu0 %v481, 112
      %v484 = vpop.permute.xlu0 %483
      %s486 = scalar_lea.vmem %s272, %s374
      %vm487 = vcmask 123904
      %488 = vst.msk [vmem:[%s486] sm:$0x3] %vm487, %v484
      %s489 = scalar_select %p372, 1, 6
      %s490 = smul.u32 %s489, 2
      %s491 = scalar_lea.vmem [#allocation2], %s490
      %v492 = vld [vmem:[%s491] sm:$0x3]
      %v493 = vsel %vm284, %v484, 0
      %495 = vmatprep.subr.mxu0 0.0
      %496 = vmatpush1.msra.mxu0 %v369
      %497 = vmatprep.subr.mxu0 0.0
      %498 = vmatpush1.msra.mxu0 %v370
      %499 = vmatprep.subr.mxu0 0.0
      %500 = vmatpush1.msra.mxu0 0.0
      %501 = vmatprep.subr.mxu0 0.0
      %502 = vmatpush1.msra.mxu0 0.0
      %503 = vmatprep.subr.mxu0 0.0
      %504 = vmatpush1.msra.mxu0 0.0
      %505 = vmatprep.subr.mxu0 0.0
      %506 = vmatpush1.msra.mxu0 0.0
      %507 = vmatprep.subr.mxu0 0.0
      %508 = vmatpush1.msra.mxu0 0.0
      %509 = vmatprep.subr.mxu0 0.0
      %510 = vmatpush1.msra.mxu0 0.0
      %511 = vmatprep.subr.mxu0 0.0
      %512 = vmatpush1.msra.mxu0 0.0
      %513 = vmatprep.subr.mxu0 0.0
      %514 = vmatpush1.msra.mxu0 0.0
      %515 = vmatprep.subr.mxu0 0.0
      %516 = vmatpush1.msra.mxu0 0.0
      %517 = vmatprep.subr.mxu0 0.0
      %518 = vmatpush1.msra.mxu0 0.0
      %519 = vmatprep.subr.mxu0 0.0
      %520 = vmatpush1.msra.mxu0 0.0
      %521 = vmatprep.subr.mxu0 0.0
      %522 = vmatpush1.msra.mxu0 0.0
      %523 = vmatprep.subr.mxu0 0.0
      %524 = vmatpush1.msra.mxu0 0.0
      %525 = vmatprep.subr.mxu0 0.0
      %526 = vmatpush1.msra.mxu0 0.0
      %527 = vmatprep.subr.mxu0 0.0
      %528 = vmatpush1.msra.mxu0 0.0
      %529 = vmatprep.subr.mxu0 0.0
      %530 = vmatpush1.msra.mxu0 0.0
      %531 = vmatprep.subr.mxu0 0.0
      %532 = vmatpush1.msra.mxu0 0.0
      %533 = vmatprep.subr.mxu0 0.0
      %534 = vmatpush1.msra.mxu0 0.0
      %535 = vmatprep.subr.mxu0 0.0
      %536 = vmatpush1.msra.mxu0 0.0
      %537 = vmatprep.subr.mxu0 0.0
      %538 = vmatpush1.msra.mxu0 0.0
      %539 = vmatprep.subr.mxu0 0.0
      %540 = vmatpush1.msra.mxu0 0.0
      %541 = vmatprep.subr.mxu0 0.0
      %542 = vmatpush1.msra.mxu0 0.0
      %543 = vmatprep.subr.mxu0 0.0
      %544 = vmatpush1.msra.mxu0 0.0
      %545 = vmatprep.subr.mxu0 0.0
      %546 = vmatpush1.msra.mxu0 0.0
      %547 = vmatprep.subr.mxu0 0.0
      %548 = vmatpush1.msra.mxu0 0.0
      %549 = vmatprep.subr.mxu0 0.0
      %550 = vmatpush1.msra.mxu0 0.0
      %551 = vmatprep.subr.mxu0 0.0
      %552 = vmatpush1.msra.mxu0 0.0
      %553 = vmatprep.subr.mxu0 0.0
      %554 = vmatpush1.msra.mxu0 0.0
      %555 = vmatprep.subr.mxu0 0.0
      %556 = vmatpush1.msra.mxu0 0.0
      %557 = vmatprep.subr.mxu0 0.0
      %558 = vmatpush1.msra.mxu0 0.0
      %559 = vmatprep.mubr.f32.mxu0 0.0
      %560 = vmatmul.mubr.f32.gmra.mrb[0].mxu0 %v493
      %v561 = vpop.f32.mrb[0].mxu0
      %v562 = vadd.f32 %v381, %v561
      %v563 = vpop.f32.mrb[0].mxu0
      %564 = vdwg.mxu0
      %v565 = vadd.f32 %v492, %v562
      %v566 = vxor.u32 %v565, 2147483648
      %v567 = vmul.f32 %v566, 1.442695
      %v568 = vpow.pop %v567
      %v569 = vadd.f32 %v568, 1.0
      %v570 = vrcp.pop %v569
      %v571 = vmul.f32 1.0, %v570
      %573 = vrot.lane.b32.xlu0 %v562, 96
      %v574 = vpop.permute.xlu0 %573
      %v576 = vmul.f32 %v571, %v574
      %578 = vrot.lane.b32.xlu0 %v576, 32
      %v579 = vpop.permute.xlu0 %578
      %v581 = vadd.f32 %v492, %v579
      %v582 = vtanh.pop %v581
      %v583 = vsub.f32 1.0, %v571
      %585 = vrot.lane.b32.xlu0 %v582, 112
      %v586 = vpop.permute.xlu0 %585
      %v588 = vmul.f32 %v583, %v586
      %v589 = vmul.f32 %v571, %v481
      %v590 = vadd.f32 %v588, %v589
      %592 = vrot.lane.b32.xlu0 %v590, 112
      %v593 = vpop.permute.xlu0 %592
      %s595 = scalar_lea.vmem %s272, %s490
      %596 = vst.msk [vmem:[%s595] sm:$0x3] %vm487, %v593
      %s597 = scalar_select %p372, 2, 5
      %s598 = smul.u32 %s597, 2
      %s599 = scalar_lea.vmem [#allocation2], %s598
      %v600 = vld [vmem:[%s599] sm:$0x3]
      %v601 = vsel %vm284, %v593, 0
      %603 = vmatprep.subr.mxu0 0.0
      %604 = vmatpush1.msra.mxu0 %v369
      %605 = vmatprep.subr.mxu0 0.0
      %606 = vmatpush1.msra.mxu0 %v370
      %607 = vmatprep.subr.mxu0 0.0
      %608 = vmatpush1.msra.mxu0 0.0
      %609 = vmatprep.subr.mxu0 0.0
      %610 = vmatpush1.msra.mxu0 0.0
      %611 = vmatprep.subr.mxu0 0.0
      %612 = vmatpush1.msra.mxu0 0.0
      %613 = vmatprep.subr.mxu0 0.0
      %614 = vmatpush1.msra.mxu0 0.0
      %615 = vmatprep.subr.mxu0 0.0
      %616 = vmatpush1.msra.mxu0 0.0
      %617 = vmatprep.subr.mxu0 0.0
      %618 = vmatpush1.msra.mxu0 0.0
      %619 = vmatprep.subr.mxu0 0.0
      %620 = vmatpush1.msra.mxu0 0.0
      %621 = vmatprep.subr.mxu0 0.0
      %622 = vmatpush1.msra.mxu0 0.0
      %623 = vmatprep.subr.mxu0 0.0
      %624 = vmatpush1.msra.mxu0 0.0
      %625 = vmatprep.subr.mxu0 0.0
      %626 = vmatpush1.msra.mxu0 0.0
      %627 = vmatprep.subr.mxu0 0.0
      %628 = vmatpush1.msra.mxu0 0.0
      %629 = vmatprep.subr.mxu0 0.0
      %630 = vmatpush1.msra.mxu0 0.0
      %631 = vmatprep.subr.mxu0 0.0
      %632 = vmatpush1.msra.mxu0 0.0
      %633 = vmatprep.subr.mxu0 0.0
      %634 = vmatpush1.msra.mxu0 0.0
      %635 = vmatprep.subr.mxu0 0.0
      %636 = vmatpush1.msra.mxu0 0.0
      %637 = vmatprep.subr.mxu0 0.0
      %638 = vmatpush1.msra.mxu0 0.0
      %639 = vmatprep.subr.mxu0 0.0
      %640 = vmatpush1.msra.mxu0 0.0
      %641 = vmatprep.subr.mxu0 0.0
      %642 = vmatpush1.msra.mxu0 0.0
      %643 = vmatprep.subr.mxu0 0.0
      %644 = vmatpush1.msra.mxu0 0.0
      %645 = vmatprep.subr.mxu0 0.0
      %646 = vmatpush1.msra.mxu0 0.0
      %647 = vmatprep.subr.mxu0 0.0
      %648 = vmatpush1.msra.mxu0 0.0
      %649 = vmatprep.subr.mxu0 0.0
      %650 = vmatpush1.msra.mxu0 0.0
      %651 = vmatprep.subr.mxu0 0.0
      %652 = vmatpush1.msra.mxu0 0.0
      %653 = vmatprep.subr.mxu0 0.0
      %654 = vmatpush1.msra.mxu0 0.0
      %655 = vmatprep.subr.mxu0 0.0
      %656 = vmatpush1.msra.mxu0 0.0
      %657 = vmatprep.subr.mxu0 0.0
      %658 = vmatpush1.msra.mxu0 0.0
      %659 = vmatprep.subr.mxu0 0.0
      %660 = vmatpush1.msra.mxu0 0.0
      %661 = vmatprep.subr.mxu0 0.0
      %662 = vmatpush1.msra.mxu0 0.0
      %663 = vmatprep.subr.mxu0 0.0
      %664 = vmatpush1.msra.mxu0 0.0
      %665 = vmatprep.subr.mxu0 0.0
      %666 = vmatpush1.msra.mxu0 0.0
      %667 = vmatprep.mubr.f32.mxu0 0.0
      %668 = vmatmul.mubr.f32.gmra.mrb[0].mxu0 %v601
      %v669 = vpop.f32.mrb[0].mxu0
      %v670 = vadd.f32 %v381, %v669
      %v671 = vpop.f32.mrb[0].mxu0
      %672 = vdwg.mxu0
      %v673 = vadd.f32 %v600, %v670
      %v674 = vxor.u32 %v673, 2147483648
      %v675 = vmul.f32 %v674, 1.442695
      %v676 = vpow.pop %v675
      %v677 = vadd.f32 %v676, 1.0
      %v678 = vrcp.pop %v677
      %v679 = vmul.f32 1.0, %v678
      %681 = vrot.lane.b32.xlu0 %v670, 96
      %v682 = vpop.permute.xlu0 %681
      %v684 = vmul.f32 %v679, %v682
      %686 = vrot.lane.b32.xlu0 %v684, 32
      %v687 = vpop.permute.xlu0 %686
      %v689 = vadd.f32 %v600, %v687
      %v690 = vtanh.pop %v689
      %v691 = vsub.f32 1.0, %v679
      %693 = vrot.lane.b32.xlu0 %v690, 112
      %v694 = vpop.permute.xlu0 %693
      %v696 = vmul.f32 %v691, %v694
      %v697 = vmul.f32 %v679, %v590
      %v698 = vadd.f32 %v696, %v697
      %700 = vrot.lane.b32.xlu0 %v698, 112
      %v701 = vpop.permute.xlu0 %700
      %s703 = scalar_lea.vmem %s272, %s598
      %704 = vst.msk [vmem:[%s703] sm:$0x3] %vm487, %v701
      %s705 = scalar_select %p372, 3, 4
      %s706 = smul.u32 %s705, 2
      %s707 = scalar_lea.vmem [#allocation2], %s706
      %v708 = vld [vmem:[%s707] sm:$0x3]
      %v709 = vsel %vm284, %v701, 0
      %711 = vmatprep.subr.mxu0 0.0
      %712 = vmatpush1.msra.mxu0 %v369
      %713 = vmatprep.subr.mxu0 0.0
      %714 = vmatpush1.msra.mxu0 %v370
      %715 = vmatprep.subr.mxu0 0.0
      %716 = vmatpush1.msra.mxu0 0.0
      %717 = vmatprep.subr.mxu0 0.0
      %718 = vmatpush1.msra.mxu0 0.0
      %719 = vmatprep.subr.mxu0 0.0
      %720 = vmatpush1.msra.mxu0 0.0
      %721 = vmatprep.subr.mxu0 0.0
      %722 = vmatpush1.msra.mxu0 0.0
      %723 = vmatprep.subr.mxu0 0.0
      %724 = vmatpush1.msra.mxu0 0.0
      %725 = vmatprep.subr.mxu0 0.0
      %726 = vmatpush1.msra.mxu0 0.0
      %727 = vmatprep.subr.mxu0 0.0
      %728 = vmatpush1.msra.mxu0 0.0
      %729 = vmatprep.subr.mxu0 0.0
      %730 = vmatpush1.msra.mxu0 0.0
      %731 = vmatprep.subr.mxu0 0.0
      %732 = vmatpush1.msra.mxu0 0.0
      %733 = vmatprep.subr.mxu0 0.0
      %734 = vmatpush1.msra.mxu0 0.0
      %735 = vmatprep.subr.mxu0 0.0
      %736 = vmatpush1.msra.mxu0 0.0
      %737 = vmatprep.subr.mxu0 0.0
      %738 = vmatpush1.msra.mxu0 0.0
      %739 = vmatprep.subr.mxu0 0.0
      %740 = vmatpush1.msra.mxu0 0.0
      %741 = vmatprep.subr.mxu0 0.0
      %742 = vmatpush1.msra.mxu0 0.0
      %743 = vmatprep.subr.mxu0 0.0
      %744 = vmatpush1.msra.mxu0 0.0
      %745 = vmatprep.subr.mxu0 0.0
      %746 = vmatpush1.msra.mxu0 0.0
      %747 = vmatprep.subr.mxu0 0.0
      %748 = vmatpush1.msra.mxu0 0.0
      %749 = vmatprep.subr.mxu0 0.0
      %750 = vmatpush1.msra.mxu0 0.0
      %751 = vmatprep.subr.mxu0 0.0
      %752 = vmatpush1.msra.mxu0 0.0
      %753 = vmatprep.subr.mxu0 0.0
      %754 = vmatpush1.msra.mxu0 0.0
      %755 = vmatprep.subr.mxu0 0.0
      %756 = vmatpush1.msra.mxu0 0.0
      %757 = vmatprep.subr.mxu0 0.0
      %758 = vmatpush1.msra.mxu0 0.0
      %759 = vmatprep.subr.mxu0 0.0
      %760 = vmatpush1.msra.mxu0 0.0
      %761 = vmatprep.subr.mxu0 0.0
      %762 = vmatpush1.msra.mxu0 0.0
      %763 = vmatprep.subr.mxu0 0.0
      %764 = vmatpush1.msra.mxu0 0.0
      %765 = vmatprep.subr.mxu0 0.0
      %766 = vmatpush1.msra.mxu0 0.0
      %767 = vmatprep.subr.mxu0 0.0
      %768 = vmatpush1.msra.mxu0 0.0
      %769 = vmatprep.subr.mxu0 0.0
      %770 = vmatpush1.msra.mxu0 0.0
      %771 = vmatprep.subr.mxu0 0.0
      %772 = vmatpush1.msra.mxu0 0.0
      %773 = vmatprep.subr.mxu0 0.0
      %774 = vmatpush1.msra.mxu0 0.0
      %775 = vmatprep.mubr.f32.mxu0 0.0
      %776 = vmatmul.mubr.f32.gmra.mrb[0].mxu0 %v709
      %v777 = vpop.f32.mrb[0].mxu0
      %v778 = vadd.f32 %v381, %v777
      %v779 = vpop.f32.mrb[0].mxu0
      %780 = vdwg.mxu0
      %v781 = vadd.f32 %v708, %v778
      %v782 = vxor.u32 %v781, 2147483648
      %v783 = vmul.f32 %v782, 1.442695
      %v784 = vpow.pop %v783
      %v785 = vadd.f32 %v784, 1.0
      %v786 = vrcp.pop %v785
      %v787 = vmul.f32 1.0, %v786
      %789 = vrot.lane.b32.xlu0 %v778, 96
      %v790 = vpop.permute.xlu0 %789
      %v792 = vmul.f32 %v787, %v790
      %794 = vrot.lane.b32.xlu0 %v792, 32
      %v795 = vpop.permute.xlu0 %794
      %v797 = vadd.f32 %v708, %v795
      %v798 = vtanh.pop %v797
      %v799 = vsub.f32 1.0, %v787
      %801 = vrot.lane.b32.xlu0 %v798, 112
      %v802 = vpop.permute.xlu0 %801
      %v804 = vmul.f32 %v799, %v802
      %v805 = vmul.f32 %v787, %v698
      %v806 = vadd.f32 %v804, %v805
      %808 = vrot.lane.b32.xlu0 %v806, 112
      %v809 = vpop.permute.xlu0 %808
      %s811 = scalar_lea.vmem %s272, %s706
      %812 = vst.msk [vmem:[%s811] sm:$0x3] %vm487, %v809
      %s813 = scalar_select %p372, 4, 3
      %s814 = smul.u32 %s813, 2
      %s815 = scalar_lea.vmem [#allocation2], %s814
      %v816 = vld [vmem:[%s815] sm:$0x3]
      %v817 = vsel %vm284, %v809, 0
      %819 = vmatprep.subr.mxu0 0.0
      %820 = vmatpush1.msra.mxu0 %v369
      %821 = vmatprep.subr.mxu0 0.0
      %822 = vmatpush1.msra.mxu0 %v370
      %823 = vmatprep.subr.mxu0 0.0
      %824 = vmatpush1.msra.mxu0 0.0
      %825 = vmatprep.subr.mxu0 0.0
      %826 = vmatpush1.msra.mxu0 0.0
      %827 = vmatprep.subr.mxu0 0.0
      %828 = vmatpush1.msra.mxu0 0.0
      %829 = vmatprep.subr.mxu0 0.0
      %830 = vmatpush1.msra.mxu0 0.0
      %831 = vmatprep.subr.mxu0 0.0
      %832 = vmatpush1.msra.mxu0 0.0
      %833 = vmatprep.subr.mxu0 0.0
      %834 = vmatpush1.msra.mxu0 0.0
      %835 = vmatprep.subr.mxu0 0.0
      %836 = vmatpush1.msra.mxu0 0.0
      %837 = vmatprep.subr.mxu0 0.0
      %838 = vmatpush1.msra.mxu0 0.0
      %839 = vmatprep.subr.mxu0 0.0
      %840 = vmatpush1.msra.mxu0 0.0
      %841 = vmatprep.subr.mxu0 0.0
      %842 = vmatpush1.msra.mxu0 0.0
      %843 = vmatprep.subr.mxu0 0.0
      %844 = vmatpush1.msra.mxu0 0.0
      %845 = vmatprep.subr.mxu0 0.0
      %846 = vmatpush1.msra.mxu0 0.0
      %847 = vmatprep.subr.mxu0 0.0
      %848 = vmatpush1.msra.mxu0 0.0
      %849 = vmatprep.subr.mxu0 0.0
      %850 = vmatpush1.msra.mxu0 0.0
      %851 = vmatprep.subr.mxu0 0.0
      %852 = vmatpush1.msra.mxu0 0.0
      %853 = vmatprep.subr.mxu0 0.0
      %854 = vmatpush1.msra.mxu0 0.0
      %855 = vmatprep.subr.mxu0 0.0
      %856 = vmatpush1.msra.mxu0 0.0
      %857 = vmatprep.subr.mxu0 0.0
      %858 = vmatpush1.msra.mxu0 0.0
      %859 = vmatprep.subr.mxu0 0.0
      %860 = vmatpush1.msra.mxu0 0.0
      %861 = vmatprep.subr.mxu0 0.0
      %862 = vmatpush1.msra.mxu0 0.0
      %863 = vmatprep.subr.mxu0 0.0
      %864 = vmatpush1.msra.mxu0 0.0
      %865 = vmatprep.subr.mxu0 0.0
      %866 = vmatpush1.msra.mxu0 0.0
      %867 = vmatprep.subr.mxu0 0.0
      %868 = vmatpush1.msra.mxu0 0.0
      %869 = vmatprep.subr.mxu0 0.0
      %870 = vmatpush1.msra.mxu0 0.0
      %871 = vmatprep.subr.mxu0 0.0
      %872 = vmatpush1.msra.mxu0 0.0
      %873 = vmatprep.subr.mxu0 0.0
      %874 = vmatpush1.msra.mxu0 0.0
      %875 = vmatprep.subr.mxu0 0.0
      %876 = vmatpush1.msra.mxu0 0.0
      %877 = vmatprep.subr.mxu0 0.0
      %878 = vmatpush1.msra.mxu0 0.0
      %879 = vmatprep.subr.mxu0 0.0
      %880 = vmatpush1.msra.mxu0 0.0
      %881 = vmatprep.subr.mxu0 0.0
      %882 = vmatpush1.msra.mxu0 0.0
      %883 = vmatprep.mubr.f32.mxu0 0.0
      %884 = vmatmul.mubr.f32.gmra.mrb[0].mxu0 %v817
      %v885 = vpop.f32.mrb[0].mxu0
      %v886 = vadd.f32 %v381, %v885
      %v887 = vpop.f32.mrb[0].mxu0
      %888 = vdwg.mxu0
      %v889 = vadd.f32 %v816, %v886
      %v890 = vxor.u32 %v889, 2147483648
      %v891 = vmul.f32 %v890, 1.442695
      %v892 = vpow.pop %v891
      %v893 = vadd.f32 %v892, 1.0
      %v894 = vrcp.pop %v893
      %v895 = vmul.f32 1.0, %v894
      %897 = vrot.lane.b32.xlu0 %v886, 96
      %v898 = vpop.permute.xlu0 %897
      %v900 = vmul.f32 %v895, %v898
      %902 = vrot.lane.b32.xlu0 %v900, 32
      %v903 = vpop.permute.xlu0 %902
      %v905 = vadd.f32 %v816, %v903
      %v906 = vtanh.pop %v905
      %v907 = vsub.f32 1.0, %v895
      %909 = vrot.lane.b32.xlu0 %v906, 112
      %v910 = vpop.permute.xlu0 %909
      %v912 = vmul.f32 %v907, %v910
      %v913 = vmul.f32 %v895, %v806
      %v914 = vadd.f32 %v912, %v913
      %916 = vrot.lane.b32.xlu0 %v914, 112
      %v917 = vpop.permute.xlu0 %916
      %s919 = scalar_lea.vmem %s272, %s814
      %920 = vst.msk [vmem:[%s919] sm:$0x3] %vm487, %v917
      %s921 = scalar_select %p372, 5, 2
      %s922 = smul.u32 %s921, 2
      %s923 = scalar_lea.vmem [#allocation2], %s922
      %v924 = vld [vmem:[%s923] sm:$0x3]
      %v925 = vsel %vm284, %v917, 0
      %927 = vmatprep.subr.mxu0 0.0
      %928 = vmatpush1.msra.mxu0 %v369
      %929 = vmatprep.subr.mxu0 0.0
      %930 = vmatpush1.msra.mxu0 %v370
      %931 = vmatprep.subr.mxu0 0.0
      %932 = vmatpush1.msra.mxu0 0.0
      %933 = vmatprep.subr.mxu0 0.0
      %934 = vmatpush1.msra.mxu0 0.0
      %935 = vmatprep.subr.mxu0 0.0
      %936 = vmatpush1.msra.mxu0 0.0
      %937 = vmatprep.subr.mxu0 0.0
      %938 = vmatpush1.msra.mxu0 0.0
      %939 = vmatprep.subr.mxu0 0.0
      %940 = vmatpush1.msra.mxu0 0.0
      %941 = vmatprep.subr.mxu0 0.0
      %942 = vmatpush1.msra.mxu0 0.0
      %943 = vmatprep.subr.mxu0 0.0
      %944 = vmatpush1.msra.mxu0 0.0
      %945 = vmatprep.subr.mxu0 0.0
      %946 = vmatpush1.msra.mxu0 0.0
      %947 = vmatprep.subr.mxu0 0.0
      %948 = vmatpush1.msra.mxu0 0.0
      %949 = vmatprep.subr.mxu0 0.0
      %950 = vmatpush1.msra.mxu0 0.0
      %951 = vmatprep.subr.mxu0 0.0
      %952 = vmatpush1.msra.mxu0 0.0
      %953 = vmatprep.subr.mxu0 0.0
      %954 = vmatpush1.msra.mxu0 0.0
      %955 = vmatprep.subr.mxu0 0.0
      %956 = vmatpush1.msra.mxu0 0.0
      %957 = vmatprep.subr.mxu0 0.0
      %958 = vmatpush1.msra.mxu0 0.0
      %959 = vmatprep.subr.mxu0 0.0
      %960 = vmatpush1.msra.mxu0 0.0
      %961 = vmatprep.subr.mxu0 0.0
      %962 = vmatpush1.msra.mxu0 0.0
      %963 = vmatprep.subr.mxu0 0.0
      %964 = vmatpush1.msra.mxu0 0.0
      %965 = vmatprep.subr.mxu0 0.0
      %966 = vmatpush1.msra.mxu0 0.0
      %967 = vmatprep.subr.mxu0 0.0
      %968 = vmatpush1.msra.mxu0 0.0
      %969 = vmatprep.subr.mxu0 0.0
      %970 = vmatpush1.msra.mxu0 0.0
      %971 = vmatprep.subr.mxu0 0.0
      %972 = vmatpush1.msra.mxu0 0.0
      %973 = vmatprep.subr.mxu0 0.0
      %974 = vmatpush1.msra.mxu0 0.0
      %975 = vmatprep.subr.mxu0 0.0
      %976 = vmatpush1.msra.mxu0 0.0
      %977 = vmatprep.subr.mxu0 0.0
      %978 = vmatpush1.msra.mxu0 0.0
      %979 = vmatprep.subr.mxu0 0.0
      %980 = vmatpush1.msra.mxu0 0.0
      %981 = vmatprep.subr.mxu0 0.0
      %982 = vmatpush1.msra.mxu0 0.0
      %983 = vmatprep.subr.mxu0 0.0
      %984 = vmatpush1.msra.mxu0 0.0
      %985 = vmatprep.subr.mxu0 0.0
      %986 = vmatpush1.msra.mxu0 0.0
      %987 = vmatprep.subr.mxu0 0.0
      %988 = vmatpush1.msra.mxu0 0.0
      %989 = vmatprep.subr.mxu0 0.0
      %990 = vmatpush1.msra.mxu0 0.0
      %991 = vmatprep.mubr.f32.mxu0 0.0
      %992 = vmatmul.mubr.f32.gmra.mrb[0].mxu0 %v925
      %v993 = vpop.f32.mrb[0].mxu0
      %v994 = vadd.f32 %v381, %v993
      %v995 = vpop.f32.mrb[0].mxu0
      %996 = vdwg.mxu0
      %v997 = vadd.f32 %v924, %v994
      %v998 = vxor.u32 %v997, 2147483648
      %v999 = vmul.f32 %v998, 1.442695
      %v1000 = vpow.pop %v999
      %v1001 = vadd.f32 %v1000, 1.0
      %v1002 = vrcp.pop %v1001
      %v1003 = vmul.f32 1.0, %v1002
      %1005 = vrot.lane.b32.xlu0 %v994, 96
      %v1006 = vpop.permute.xlu0 %1005
      %v1008 = vmul.f32 %v1003, %v1006
      %1010 = vrot.lane.b32.xlu0 %v1008, 32
      %v1011 = vpop.permute.xlu0 %1010
      %v1013 = vadd.f32 %v924, %v1011
      %v1014 = vtanh.pop %v1013
      %v1015 = vsub.f32 1.0, %v1003
      %1017 = vrot.lane.b32.xlu0 %v1014, 112
      %v1018 = vpop.permute.xlu0 %1017
      %v1020 = vmul.f32 %v1015, %v1018
      %v1021 = vmul.f32 %v1003, %v914
      %v1022 = vadd.f32 %v1020, %v1021
      %1024 = vrot.lane.b32.xlu0 %v1022, 112
      %v1025 = vpop.permute.xlu0 %1024
      %s1027 = scalar_lea.vmem %s272, %s922
      %1028 = vst.msk [vmem:[%s1027] sm:$0x3] %vm487, %v1025
      %s1029 = scalar_select %p372, 6, 1
      %s1030 = smul.u32 %s1029, 2
      %s1031 = scalar_lea.vmem [#allocation2], %s1030
      %v1032 = vld [vmem:[%s1031] sm:$0x3]
      %v1033 = vsel %vm284, %v1025, 0
      %1035 = vmatprep.subr.mxu0 0.0
      %1036 = vmatpush1.msra.mxu0 %v369
      %1037 = vmatprep.subr.mxu0 0.0
      %1038 = vmatpush1.msra.mxu0 %v370
      %1039 = vmatprep.subr.mxu0 0.0
      %1040 = vmatpush1.msra.mxu0 0.0
      %1041 = vmatprep.subr.mxu0 0.0
      %1042 = vmatpush1.msra.mxu0 0.0
      %1043 = vmatprep.subr.mxu0 0.0
      %1044 = vmatpush1.msra.mxu0 0.0
      %1045 = vmatprep.subr.mxu0 0.0
      %1046 = vmatpush1.msra.mxu0 0.0
      %1047 = vmatprep.subr.mxu0 0.0
      %1048 = vmatpush1.msra.mxu0 0.0
      %1049 = vmatprep.subr.mxu0 0.0
      %1050 = vmatpush1.msra.mxu0 0.0
      %1051 = vmatprep.subr.mxu0 0.0
      %1052 = vmatpush1.msra.mxu0 0.0
      %1053 = vmatprep.subr.mxu0 0.0
      %1054 = vmatpush1.msra.mxu0 0.0
      %1055 = vmatprep.subr.mxu0 0.0
      %1056 = vmatpush1.msra.mxu0 0.0
      %1057 = vmatprep.subr.mxu0 0.0
      %1058 = vmatpush1.msra.mxu0 0.0
      %1059 = vmatprep.subr.mxu0 0.0
      %1060 = vmatpush1.msra.mxu0 0.0
      %1061 = vmatprep.subr.mxu0 0.0
      %1062 = vmatpush1.msra.mxu0 0.0
      %1063 = vmatprep.subr.mxu0 0.0
      %1064 = vmatpush1.msra.mxu0 0.0
      %1065 = vmatprep.subr.mxu0 0.0
      %1066 = vmatpush1.msra.mxu0 0.0
      %1067 = vmatprep.subr.mxu0 0.0
      %1068 = vmatpush1.msra.mxu0 0.0
      %1069 = vmatprep.subr.mxu0 0.0
      %1070 = vmatpush1.msra.mxu0 0.0
      %1071 = vmatprep.subr.mxu0 0.0
      %1072 = vmatpush1.msra.mxu0 0.0
      %1073 = vmatprep.subr.mxu0 0.0
      %1074 = vmatpush1.msra.mxu0 0.0
      %1075 = vmatprep.subr.mxu0 0.0
      %1076 = vmatpush1.msra.mxu0 0.0
      %1077 = vmatprep.subr.mxu0 0.0
      %1078 = vmatpush1.msra.mxu0 0.0
      %1079 = vmatprep.subr.mxu0 0.0
      %1080 = vmatpush1.msra.mxu0 0.0
      %1081 = vmatprep.subr.mxu0 0.0
      %1082 = vmatpush1.msra.mxu0 0.0
      %1083 = vmatprep.subr.mxu0 0.0
      %1084 = vmatpush1.msra.mxu0 0.0
      %1085 = vmatprep.subr.mxu0 0.0
      %1086 = vmatpush1.msra.mxu0 0.0
      %1087 = vmatprep.subr.mxu0 0.0
      %1088 = vmatpush1.msra.mxu0 0.0
      %1089 = vmatprep.subr.mxu0 0.0
      %1090 = vmatpush1.msra.mxu0 0.0
      %1091 = vmatprep.subr.mxu0 0.0
      %1092 = vmatpush1.msra.mxu0 0.0
      %1093 = vmatprep.subr.mxu0 0.0
      %1094 = vmatpush1.msra.mxu0 0.0
      %1095 = vmatprep.subr.mxu0 0.0
      %1096 = vmatpush1.msra.mxu0 0.0
      %1097 = vmatprep.subr.mxu0 0.0
      %1098 = vmatpush1.msra.mxu0 0.0
      %1099 = vmatprep.mubr.f32.mxu0 0.0
      %1100 = vmatmul.mubr.f32.gmra.mrb[0].mxu0 %v1033
      %v1101 = vpop.f32.mrb[0].mxu0
      %v1102 = vadd.f32 %v381, %v1101
      %v1103 = vpop.f32.mrb[0].mxu0
      %1104 = vdwg.mxu0
      %v1105 = vadd.f32 %v1032, %v1102
      %v1106 = vxor.u32 %v1105, 2147483648
      %v1107 = vmul.f32 %v1106, 1.442695
      %v1108 = vpow.pop %v1107
      %v1109 = vadd.f32 %v1108, 1.0
      %v1110 = vrcp.pop %v1109
      %v1111 = vmul.f32 1.0, %v1110
      %1113 = vrot.lane.b32.xlu0 %v1102, 96
      %v1114 = vpop.permute.xlu0 %1113
      %v1116 = vmul.f32 %v1111, %v1114
      %1118 = vrot.lane.b32.xlu0 %v1116, 32
      %v1119 = vpop.permute.xlu0 %1118
      %v1121 = vadd.f32 %v1032, %v1119
      %v1122 = vtanh.pop %v1121
      %v1123 = vsub.f32 1.0, %v1111
      %1125 = vrot.lane.b32.xlu0 %v1122, 112
      %v1126 = vpop.permute.xlu0 %1125
      %v1128 = vmul.f32 %v1123, %v1126
      %v1129 = vmul.f32 %v1111, %v1022
      %v1130 = vadd.f32 %v1128, %v1129
      %1132 = vrot.lane.b32.xlu0 %v1130, 112
      %v1133 = vpop.permute.xlu0 %1132
      %s1135 = scalar_lea.vmem %s272, %s1030
      %1136 = vst.msk [vmem:[%s1135] sm:$0x3] %vm487, %v1133
      %s1137 = scalar_select %p372, 7, 0
      %s1138 = smul.u32 %s1137, 2
      %s1139 = scalar_lea.vmem [#allocation2], %s1138
      %v1140 = vld [vmem:[%s1139] sm:$0x3]
      %v1141 = vsel %vm284, %v1133, 0
      %1143 = vmatprep.subr.mxu0 0.0
      %1144 = vmatpush1.msra.mxu0 %v369
      %1145 = vmatprep.subr.mxu0 0.0
      %1146 = vmatpush1.msra.mxu0 %v370
      %1147 = vmatprep.subr.mxu0 0.0
      %1148 = vmatpush1.msra.mxu0 0.0
      %1149 = vmatprep.subr.mxu0 0.0
      %1150 = vmatpush1.msra.mxu0 0.0
      %1151 = vmatprep.subr.mxu0 0.0
      %1152 = vmatpush1.msra.mxu0 0.0
      %1153 = vmatprep.subr.mxu0 0.0
      %1154 = vmatpush1.msra.mxu0 0.0
      %1155 = vmatprep.subr.mxu0 0.0
      %1156 = vmatpush1.msra.mxu0 0.0
      %1157 = vmatprep.subr.mxu0 0.0
      %1158 = vmatpush1.msra.mxu0 0.0
      %1159 = vmatprep.subr.mxu0 0.0
      %1160 = vmatpush1.msra.mxu0 0.0
      %1161 = vmatprep.subr.mxu0 0.0
      %1162 = vmatpush1.msra.mxu0 0.0
      %1163 = vmatprep.subr.mxu0 0.0
      %1164 = vmatpush1.msra.mxu0 0.0
      %1165 = vmatprep.subr.mxu0 0.0
      %1166 = vmatpush1.msra.mxu0 0.0
      %1167 = vmatprep.subr.mxu0 0.0
      %1168 = vmatpush1.msra.mxu0 0.0
      %1169 = vmatprep.subr.mxu0 0.0
      %1170 = vmatpush1.msra.mxu0 0.0
      %1171 = vmatprep.subr.mxu0 0.0
      %1172 = vmatpush1.msra.mxu0 0.0
      %1173 = vmatprep.subr.mxu0 0.0
      %1174 = vmatpush1.msra.mxu0 0.0
      %1175 = vmatprep.subr.mxu0 0.0
      %1176 = vmatpush1.msra.mxu0 0.0
      %1177 = vmatprep.subr.mxu0 0.0
      %1178 = vmatpush1.msra.mxu0 0.0
      %1179 = vmatprep.subr.mxu0 0.0
      %1180 = vmatpush1.msra.mxu0 0.0
      %1181 = vmatprep.subr.mxu0 0.0
      %1182 = vmatpush1.msra.mxu0 0.0
      %1183 = vmatprep.subr.mxu0 0.0
      %1184 = vmatpush1.msra.mxu0 0.0
      %1185 = vmatprep.subr.mxu0 0.0
      %1186 = vmatpush1.msra.mxu0 0.0
      %1187 = vmatprep.subr.mxu0 0.0
      %1188 = vmatpush1.msra.mxu0 0.0
      %1189 = vmatprep.subr.mxu0 0.0
      %1190 = vmatpush1.msra.mxu0 0.0
      %1191 = vmatprep.subr.mxu0 0.0
      %1192 = vmatpush1.msra.mxu0 0.0
      %1193 = vmatprep.subr.mxu0 0.0
      %1194 = vmatpush1.msra.mxu0 0.0
      %1195 = vmatprep.subr.mxu0 0.0
      %1196 = vmatpush1.msra.mxu0 0.0
      %1197 = vmatprep.subr.mxu0 0.0
      %1198 = vmatpush1.msra.mxu0 0.0
      %1199 = vmatprep.subr.mxu0 0.0
      %1200 = vmatpush1.msra.mxu0 0.0
      %1201 = vmatprep.subr.mxu0 0.0
      %1202 = vmatpush1.msra.mxu0 0.0
      %1203 = vmatprep.subr.mxu0 0.0
      %1204 = vmatpush1.msra.mxu0 0.0
      %1205 = vmatprep.subr.mxu0 0.0
      %1206 = vmatpush1.msra.mxu0 0.0
      %1207 = vmatprep.mubr.f32.mxu0 0.0
      %1208 = vmatmul.mubr.f32.gmra.mrb[0].mxu0 %v1141
      %v1209 = vpop.f32.mrb[0].mxu0
      %v1210 = vadd.f32 %v381, %v1209
      %v1211 = vpop.f32.mrb[0].mxu0
      %1212 = vdwg.mxu0
      %v1213 = vadd.f32 %v1140, %v1210
      %v1214 = vxor.u32 %v1213, 2147483648
      %v1215 = vmul.f32 %v1214, 1.442695
      %v1216 = vpow.pop %v1215
      %v1217 = vadd.f32 %v1216, 1.0
      %v1218 = vrcp.pop %v1217
      %v1219 = vmul.f32 1.0, %v1218
      %1221 = vrot.lane.b32.xlu0 %v1210, 96
      %v1222 = vpop.permute.xlu0 %1221
      %v1224 = vmul.f32 %v1219, %v1222
      %1226 = vrot.lane.b32.xlu0 %v1224, 32
      %v1227 = vpop.permute.xlu0 %1226
      %v1229 = vadd.f32 %v1140, %v1227
      %v1230 = vtanh.pop %v1229
      %v1231 = vsub.f32 1.0, %v1219
      %1233 = vrot.lane.b32.xlu0 %v1230, 112
      %v1234 = vpop.permute.xlu0 %1233
      %v1236 = vmul.f32 %v1231, %v1234
      %v1237 = vmul.f32 %v1219, %v1130
      %v1238 = vadd.f32 %v1236, %v1237
      %1240 = vrot.lane.b32.xlu0 %v1238, 112
      %v1241 = vpop.permute.xlu0 %1240
      %s1243 = scalar_lea.vmem %s272, %s1138
      %1244 = vst.msk [vmem:[%s1243] sm:$0x3] %vm487, %v1241
      %p1245 = scmp.lt.s32.totalorder %s16, 1
      %s1246 = scalar_select %p1245, %s16, 1
      %s1247 = smul.addr %s1246, 2
      %s1248 = smul.addr %s1247, 8
      %s1249 = scalar_lea.vmem %s5, %s1248
      // Predicated region
      $region41: #{recurrent_tgt_forward.4} parent=39 // pred_check
        %p1250 = pneg %p159
      $region42: #{recurrent_tgt_forward.4} parent=39 // pred_check_branch
        %1252 = sbr.rel (%p1250) target = $region44
      $region43: #{recurrent_tgt_forward.4} parent=39 // pred_region
        _
      $region44: #{recurrent_tgt_forward.4} parent=39 // pred_fallthru
        _
    $region40: #{recurrent_tgt_forward.4} parent=5 // pred_fallthru
      _
    %p1253 = scmp.le.s32.totalorder 2, %s11
    // Predicated region
    $region45: #{recurrent_tgt_forward.4} parent=5 // pred_check
      %p1254 = pneg %p1253
    $region46: #{recurrent_tgt_forward.4} parent=5 // pred_check_branch
      %1256 = sbr.rel (%p1254) target = $region48
    $region47: #{recurrent_tgt_forward.4} parent=5 // pred_region
      %s1257 = ssub.s32 %s11, 2
      // Predicated region
      $region49: #{recurrent_tgt_forward.4} parent=47 // pred_check
        %p1258 = pneg %p165
      $region50: #{recurrent_tgt_forward.4} parent=47 // pred_check_branch
        %1260 = sbr.rel (%p1258) target = $region52
      $region51: #{recurrent_tgt_forward.4} parent=47 // pred_region
        %p1261 = scmp.lt.s32.totalorder %s17, 1
        %s1262 = scalar_select %p1261, %s17, 1
        %s1263 = smul.addr %s1262, 2
        %s1264 = smul.addr %s1263, 8
        %s1265 = scalar_lea.vmem %s5, %s1264
      $region52: #{recurrent_tgt_forward.4} parent=47 // pred_fallthru
        _
    $region48: #{recurrent_tgt_forward.4} parent=5 // pred_fallthru
      _
  $region6: #{recurrent_tgt_forward.4} parent=0 // loop_footer
    %s15 = sadd.s32 1, %s11
  $region7: #{recurrent_tgt_forward.4} parent=0 // loop_footer_branch
    %10 = sbr.rel target = $region3
  $region8: #{recurrent_tgt_forward.4} parent=0 // loop_exit
    _

// kernel: recurrent_tgt_forward.5
$region0: #{recurrent_tgt_forward.5}
  #allocation0 [shape = 'u32[]', space=smem, size = 0x4, offset = 0x4, fixed_abs, tag = 'smem constant byte address 0x4 - core index']
  #allocation1 [shape = 'u32[144,128]{1,0:T(1,128)}', space=vmem, size = 0x12000, scoped, tag = 'internal scratch']
  %s0 = inlined_call_operand.vmem [shape: f32[2,8], index: 0, kind: input, shape index: {}]
  %s1 = inlined_call_operand.vmem [shape: f32[2,16], index: 1, kind: input, shape index: {}]
  %s2 = inlined_call_operand.vmem [shape: f32[2,16,16], index: 2, kind: input, shape index: {}]
  %s3 = inlined_call_operand.vmem [shape: f32[2,16,16], index: 3, kind: input, shape index: {}]
  %s4 = inlined_call_operand.vmem [shape: f32[16,2], index: 4, kind: input, shape index: {}]
  %s5 = inlined_call_operand.vmem [shape: f32[8,200], index: 5, kind: input, shape index: {}]
  %s6 = inlined_call_operand.vmem [shape: f32[16,200], index: 6, kind: input, shape index: {}]
  %s7 = inlined_call_operand.vmem [shape: f32[16,200], index: 7, kind: input, shape index: {}]
  %s8 = inlined_call_operand.vmem [shape: f32[16,200], index: 8, kind: input, shape index: {}]
  %s9 = inlined_call_operand.vmem [shape: f32[16,200], index: 9, kind: input, shape index: {}]
  %s10 = inlined_call_operand.vmem [shape: f32[1,200], index: 10, kind: input, shape index: {}]
  %s11 = inlined_call_operand.vmem [shape: f32[200,200], index: 11, kind: input, shape index: {}]
  %s12 = inlined_call_operand.vmem [shape: f32[1,200], index: 12, kind: input, shape index: {}]
  %s13 = inlined_call_operand.vmem [shape: f32[200,128], index: 13, kind: input, shape index: {}]
  %s14 = inlined_call_operand.vmem [shape: f32[1,128], index: 14, kind: input, shape index: {}]
  %s15 = inlined_call_operand.vmem [shape: f32[16,128], index: 15, kind: output, shape index: {}]
  %s16 = sld [smem:[#allocation0]]
  $region70: #{recurrent_tgt_forward.5} parent=0
    _
  %s18 = ssub.s32 1, %s16
  %s19 = scalar_select 0, %s18, %s16
  // Predicated region
  $region2: #{recurrent_tgt_forward.5} parent=0 // pred_check
    _
  $region3: #{recurrent_tgt_forward.5} parent=0 // pred_check_branch
    %21 = sbr.rel (0) target = $region5
  $region4: #{recurrent_tgt_forward.5} parent=0 // pred_region
    _
  $region5: #{recurrent_tgt_forward.5} parent=0 // pred_fallthru
    _
  // Predicated region
  $region6: #{recurrent_tgt_forward.5} parent=0 // pred_check
    _
  $region7: #{recurrent_tgt_forward.5} parent=0 // pred_check_branch
    %23 = sbr.rel (0) target = $region9
  $region8: #{recurrent_tgt_forward.5} parent=0 // pred_region
    _
  $region9: #{recurrent_tgt_forward.5} parent=0 // pred_fallthru
    _
  // Predicated region
  $region10: #{recurrent_tgt_forward.5} parent=0 // pred_check
    _
  $region11: #{recurrent_tgt_forward.5} parent=0 // pred_check_branch
    %25 = sbr.rel (0) target = $region13
  $region12: #{recurrent_tgt_forward.5} parent=0 // pred_region
    _
  $region13: #{recurrent_tgt_forward.5} parent=0 // pred_fallthru
    _
  // Predicated region
  $region14: #{recurrent_tgt_forward.5} parent=0 // pred_check
    _
  $region15: #{recurrent_tgt_forward.5} parent=0 // pred_check_branch
    %27 = sbr.rel (0) target = $region17
  $region16: #{recurrent_tgt_forward.5} parent=0 // pred_region
    _
  $region17: #{recurrent_tgt_forward.5} parent=0 // pred_fallthru
    _
  // Predicated region
  $region18: #{recurrent_tgt_forward.5} parent=0 // pred_check
    _
  $region19: #{recurrent_tgt_forward.5} parent=0 // pred_check_branch
    %29 = sbr.rel (0) target = $region21
  $region20: #{recurrent_tgt_forward.5} parent=0 // pred_region
    _
  $region21: #{recurrent_tgt_forward.5} parent=0 // pred_fallthru
    _
  // Predicated region
  $region22: #{recurrent_tgt_forward.5} parent=0 // pred_check
    _
  $region23: #{recurrent_tgt_forward.5} parent=0 // pred_check_branch
    %31 = sbr.rel (0) target = $region25
  $region24: #{recurrent_tgt_forward.5} parent=0 // pred_region
    _
  $region25: #{recurrent_tgt_forward.5} parent=0 // pred_fallthru
    _
  // Predicated region
  $region26: #{recurrent_tgt_forward.5} parent=0 // pred_check
    _
  $region27: #{recurrent_tgt_forward.5} parent=0 // pred_check_branch
    %33 = sbr.rel (0) target = $region29
  $region28: #{recurrent_tgt_forward.5} parent=0 // pred_region
    _
  $region29: #{recurrent_tgt_forward.5} parent=0 // pred_fallthru
    _
  // Predicated region
  $region30: #{recurrent_tgt_forward.5} parent=0 // pred_check
    _
  $region31: #{recurrent_tgt_forward.5} parent=0 // pred_check_branch
    %35 = sbr.rel (0) target = $region33
  $region32: #{recurrent_tgt_forward.5} parent=0 // pred_region
    _
  $region33: #{recurrent_tgt_forward.5} parent=0 // pred_fallthru
    _
  // Predicated region
  $region34: #{recurrent_tgt_forward.5} parent=0 // pred_check
    _
  $region35: #{recurrent_tgt_forward.5} parent=0 // pred_check_branch
    %37 = sbr.rel (0) target = $region37
  $region36: #{recurrent_tgt_forward.5} parent=0 // pred_region
    _
  $region37: #{recurrent_tgt_forward.5} parent=0 // pred_fallthru
    _
  // Predicated region
  $region38: #{recurrent_tgt_forward.5} parent=0 // pred_check
    _
  $region39: #{recurrent_tgt_forward.5} parent=0 // pred_check_branch
    %39 = sbr.rel (0) target = $region41
  $region40: #{recurrent_tgt_forward.5} parent=0 // pred_region
    _
  $region41: #{recurrent_tgt_forward.5} parent=0 // pred_fallthru
    _
  // Predicated region
  $region42: #{recurrent_tgt_forward.5} parent=0 // pred_check
    _
  $region43: #{recurrent_tgt_forward.5} parent=0 // pred_check_branch
    %41 = sbr.rel (0) target = $region45
  $region44: #{recurrent_tgt_forward.5} parent=0 // pred_region
    _
  $region45: #{recurrent_tgt_forward.5} parent=0 // pred_fallthru
    _
  // Predicated region
  $region46: #{recurrent_tgt_forward.5} parent=0 // pred_check
    _
  $region47: #{recurrent_tgt_forward.5} parent=0 // pred_check_branch
    %43 = sbr.rel (0) target = $region49
  $region48: #{recurrent_tgt_forward.5} parent=0 // pred_region
    _
  $region49: #{recurrent_tgt_forward.5} parent=0 // pred_fallthru
    _
  // Predicated region
  $region50: #{recurrent_tgt_forward.5} parent=0 // pred_check
    _
  $region51: #{recurrent_tgt_forward.5} parent=0 // pred_check_branch
    %45 = sbr.rel (0) target = $region53
  $region52: #{recurrent_tgt_forward.5} parent=0 // pred_region
    _
  $region53: #{recurrent_tgt_forward.5} parent=0 // pred_fallthru
    _
  // Predicated region
  $region54: #{recurrent_tgt_forward.5} parent=0 // pred_check
    _
  $region55: #{recurrent_tgt_forward.5} parent=0 // pred_check_branch
    %47 = sbr.rel (0) target = $region57
  $region56: #{recurrent_tgt_forward.5} parent=0 // pred_region
    _
  $region57: #{recurrent_tgt_forward.5} parent=0 // pred_fallthru
    _
  // Predicated region
  $region58: #{recurrent_tgt_forward.5} parent=0 // pred_check
    _
  $region59: #{recurrent_tgt_forward.5} parent=0 // pred_check_branch
    %49 = sbr.rel (0) target = $region61
  $region60: #{recurrent_tgt_forward.5} parent=0 // pred_region
    _
  $region61: #{recurrent_tgt_forward.5} parent=0 // pred_fallthru
    _
  %v50 = vld [vmem:[%s1] sm:$0x3]
  %v51 = vld [vmem:[%s2] sm:$0xff]
  %v52 = vld [vmem:[%s2 + $0x8] sm:$0xff]
  %vm53 = vcmask 130048
  %v55 = vsel %vm53, %v50, 0
  %57 = vmatprep.subr.mxu0 0.0
  %58 = vmatpush1.msra.mxu0 %v51
  %59 = vmatprep.subr.mxu0 0.0
  %60 = vmatpush1.msra.mxu0 %v52
  %61 = vmatprep.subr.mxu0 0.0
  %62 = vmatpush1.msra.mxu0 0.0
  %63 = vmatprep.subr.mxu0 0.0
  %64 = vmatpush1.msra.mxu0 0.0
  %65 = vmatprep.subr.mxu0 0.0
  %66 = vmatpush1.msra.mxu0 0.0
  %67 = vmatprep.subr.mxu0 0.0
  %68 = vmatpush1.msra.mxu0 0.0
  %69 = vmatprep.subr.mxu0 0.0
  %70 = vmatpush1.msra.mxu0 0.0
  %71 = vmatprep.subr.mxu0 0.0
  %72 = vmatpush1.msra.mxu0 0.0
  %73 = vmatprep.subr.mxu0 0.0
  %74 = vmatpush1.msra.mxu0 0.0
  %75 = vmatprep.subr.mxu0 0.0
  %76 = vmatpush1.msra.mxu0 0.0
  %77 = vmatprep.subr.mxu0 0.0
  %78 = vmatpush1.msra.mxu0 0.0
  %79 = vmatprep.subr.mxu0 0.0
  %80 = vmatpush1.msra.mxu0 0.0
  %81 = vmatprep.subr.mxu0 0.0
  %82 = vmatpush1.msra.mxu0 0.0
  %83 = vmatprep.subr.mxu0 0.0
  %84 = vmatpush1.msra.mxu0 0.0
  %85 = vmatprep.subr.mxu0 0.0
  %86 = vmatpush1.msra.mxu0 0.0
  %87 = vmatprep.subr.mxu0 0.0
  %88 = vmatpush1.msra.mxu0 0.0
  %89 = vmatprep.subr.mxu0 0.0
  %90 = vmatpush1.msra.mxu0 0.0
  %91 = vmatprep.subr.mxu0 0.0
  %92 = vmatpush1.msra.mxu0 0.0
  %93 = vmatprep.subr.mxu0 0.0
  %94 = vmatpush1.msra.mxu0 0.0
  %95 = vmatprep.subr.mxu0 0.0
  %96 = vmatpush1.msra.mxu0 0.0
  %97 = vmatprep.subr.mxu0 0.0
  %98 = vmatpush1.msra.mxu0 0.0
  %99 = vmatprep.subr.mxu0 0.0
  %100 = vmatpush1.msra.mxu0 0.0
  %101 = vmatprep.subr.mxu0 0.0
  %102 = vmatpush1.msra.mxu0 0.0
  %103 = vmatprep.subr.mxu0 0.0
  %104 = vmatpush1.msra.mxu0 0.0
  %105 = vmatprep.subr.mxu0 0.0
  %106 = vmatpush1.msra.mxu0 0.0
  %107 = vmatprep.subr.mxu0 0.0
  %108 = vmatpush1.msra.mxu0 0.0
  %109 = vmatprep.subr.mxu0 0.0
  %110 = vmatpush1.msra.mxu0 0.0
  %111 = vmatprep.subr.mxu0 0.0
  %112 = vmatpush1.msra.mxu0 0.0
  %113 = vmatprep.subr.mxu0 0.0
  %114 = vmatpush1.msra.mxu0 0.0
  %115 = vmatprep.subr.mxu0 0.0
  %116 = vmatpush1.msra.mxu0 0.0
  %117 = vmatprep.subr.mxu0 0.0
  %118 = vmatpush1.msra.mxu0 0.0
  %119 = vmatprep.subr.mxu0 0.0
  %120 = vmatpush1.msra.mxu0 0.0
  %121 = vmatprep.mubr.f32.mxu0 0.0
  %122 = vmatmul.mubr.f32.gmra.mrb[0].mxu0 %v55
  %v123 = vpop.f32.mrb[0].mxu0
  %v124 = vadd.f32 0.0, %v123
  %v125 = vpop.f32.mrb[0].mxu0
  %126 = vdwg.mxu0
  %s127 = scalar_lea.vmem %s2, 16
  %v128 = vld [vmem:[%s127] sm:$0xff]
  %v129 = vld [vmem:[%s127 + $0x8] sm:$0xff]
  %130 = vmatprep.subr.mxu0 0.0
  %131 = vmatpush1.msra.mxu0 %v128
  %132 = vmatprep.subr.mxu0 0.0
  %133 = vmatpush1.msra.mxu0 %v129
  %134 = vmatprep.subr.mxu0 0.0
  %135 = vmatpush1.msra.mxu0 0.0
  %136 = vmatprep.subr.mxu0 0.0
  %137 = vmatpush1.msra.mxu0 0.0
  %138 = vmatprep.subr.mxu0 0.0
  %139 = vmatpush1.msra.mxu0 0.0
  %140 = vmatprep.subr.mxu0 0.0
  %141 = vmatpush1.msra.mxu0 0.0
  %142 = vmatprep.subr.mxu0 0.0
  %143 = vmatpush1.msra.mxu0 0.0
  %144 = vmatprep.subr.mxu0 0.0
  %145 = vmatpush1.msra.mxu0 0.0
  %146 = vmatprep.subr.mxu0 0.0
  %147 = vmatpush1.msra.mxu0 0.0
  %148 = vmatprep.subr.mxu0 0.0
  %149 = vmatpush1.msra.mxu0 0.0
  %150 = vmatprep.subr.mxu0 0.0
  %151 = vmatpush1.msra.mxu0 0.0
  %152 = vmatprep.subr.mxu0 0.0
  %153 = vmatpush1.msra.mxu0 0.0
  %154 = vmatprep.subr.mxu0 0.0
  %155 = vmatpush1.msra.mxu0 0.0
  %156 = vmatprep.subr.mxu0 0.0
  %157 = vmatpush1.msra.mxu0 0.0
  %158 = vmatprep.subr.mxu0 0.0
  %159 = vmatpush1.msra.mxu0 0.0
  %160 = vmatprep.subr.mxu0 0.0
  %161 = vmatpush1.msra.mxu0 0.0
  %162 = vmatprep.subr.mxu0 0.0
  %163 = vmatpush1.msra.mxu0 0.0
  %164 = vmatprep.subr.mxu0 0.0
  %165 = vmatpush1.msra.mxu0 0.0
  %166 = vmatprep.subr.mxu0 0.0
  %167 = vmatpush1.msra.mxu0 0.0
  %168 = vmatprep.subr.mxu0 0.0
  %169 = vmatpush1.msra.mxu0 0.0
  %170 = vmatprep.subr.mxu0 0.0
  %171 = vmatpush1.msra.mxu0 0.0
  %172 = vmatprep.subr.mxu0 0.0
  %173 = vmatpush1.msra.mxu0 0.0
  %174 = vmatprep.subr.mxu0 0.0
  %175 = vmatpush1.msra.mxu0 0.0
  %176 = vmatprep.subr.mxu0 0.0
  %177 = vmatpush1.msra.mxu0 0.0
  %178 = vmatprep.subr.mxu0 0.0
  %179 = vmatpush1.msra.mxu0 0.0
  %180 = vmatprep.subr.mxu0 0.0
  %181 = vmatpush1.msra.mxu0 0.0
  %182 = vmatprep.subr.mxu0 0.0
  %183 = vmatpush1.msra.mxu0 0.0
  %184 = vmatprep.subr.mxu0 0.0
  %185 = vmatpush1.msra.mxu0 0.0
  %186 = vmatprep.subr.mxu0 0.0
  %187 = vmatpush1.msra.mxu0 0.0
  %188 = vmatprep.subr.mxu0 0.0
  %189 = vmatpush1.msra.mxu0 0.0
  %190 = vmatprep.subr.mxu0 0.0
  %191 = vmatpush1.msra.mxu0 0.0
  %192 = vmatprep.subr.mxu0 0.0
  %193 = vmatpush1.msra.mxu0 0.0
  %194 = vmatprep.mubr.f32.mxu0 0.0
  %195 = vmatmul.mubr.f32.gmra.mrb[0].mxu0 %v55
  %v196 = vpop.f32.mrb[0].mxu0
  %v197 = vadd.f32 0.0, %v196
  %v198 = vpop.f32.mrb[0].mxu0
  %199 = vdwg.mxu0
  %v200 = vld [vmem:[%s0] sm:$0x3]
  %v201 = vld [vmem:[%s5] sm:$0xff]
  %v202 = vld [vmem:[%s5 + $0x8] sm:$0xff]
  %v203 = vld [vmem:[%s6] sm:$0xff]
  %v204 = vld [vmem:[%s6 + $0x8] sm:$0xff]
  %v205 = vld [vmem:[%s6 + $0x10] sm:$0xff]
  %v206 = vld [vmem:[%s6 + $0x18] sm:$0xff]
  %v208 = vsel %vm53, %v124, 0
  %210 = vmatprep.subr.mxu0 %v204
  %211 = vmatpush1.msra.mxu0 %v203
  %212 = vmatprep.subr.mxu0 %v206
  %213 = vmatpush1.msra.mxu0 %v205
  %214 = vmatprep.subr.mxu0 0.0
  %215 = vmatpush1.msra.mxu0 0.0
  %216 = vmatprep.subr.mxu0 0.0
  %217 = vmatpush1.msra.mxu0 0.0
  %218 = vmatprep.subr.mxu0 0.0
  %219 = vmatpush1.msra.mxu0 0.0
  %220 = vmatprep.subr.mxu0 0.0
  %221 = vmatpush1.msra.mxu0 0.0
  %222 = vmatprep.subr.mxu0 0.0
  %223 = vmatpush1.msra.mxu0 0.0
  %224 = vmatprep.subr.mxu0 0.0
  %225 = vmatpush1.msra.mxu0 0.0
  %226 = vmatprep.subr.mxu0 0.0
  %227 = vmatpush1.msra.mxu0 0.0
  %228 = vmatprep.subr.mxu0 0.0
  %229 = vmatpush1.msra.mxu0 0.0
  %230 = vmatprep.subr.mxu0 0.0
  %231 = vmatpush1.msra.mxu0 0.0
  %232 = vmatprep.subr.mxu0 0.0
  %233 = vmatpush1.msra.mxu0 0.0
  %234 = vmatprep.subr.mxu0 0.0
  %235 = vmatpush1.msra.mxu0 0.0
  %236 = vmatprep.subr.mxu0 0.0
  %237 = vmatpush1.msra.mxu0 0.0
  %238 = vmatprep.subr.mxu0 0.0
  %239 = vmatpush1.msra.mxu0 0.0
  %240 = vmatprep.subr.mxu0 0.0
  %241 = vmatpush1.msra.mxu0 0.0
  %242 = vmatprep.subr.mxu0 0.0
  %243 = vmatpush1.msra.mxu0 0.0
  %244 = vmatprep.subr.mxu0 0.0
  %245 = vmatpush1.msra.mxu0 0.0
  %246 = vmatprep.subr.mxu0 0.0
  %247 = vmatpush1.msra.mxu0 0.0
  %248 = vmatprep.subr.mxu0 0.0
  %249 = vmatpush1.msra.mxu0 0.0
  %250 = vmatprep.subr.mxu0 0.0
  %251 = vmatpush1.msra.mxu0 0.0
  %252 = vmatprep.subr.mxu0 0.0
  %253 = vmatpush1.msra.mxu0 0.0
  %254 = vmatprep.subr.mxu0 0.0
  %255 = vmatpush1.msra.mxu0 0.0
  %256 = vmatprep.subr.mxu0 0.0
  %257 = vmatpush1.msra.mxu0 0.0
  %258 = vmatprep.subr.mxu0 0.0
  %259 = vmatpush1.msra.mxu0 0.0
  %260 = vmatprep.subr.mxu0 0.0
  %261 = vmatpush1.msra.mxu0 0.0
  %262 = vmatprep.subr.mxu0 0.0
  %263 = vmatpush1.msra.mxu0 0.0
  %264 = vmatprep.subr.mxu0 0.0
  %265 = vmatpush1.msra.mxu0 0.0
  %266 = vmatprep.subr.mxu0 0.0
  %267 = vmatpush1.msra.mxu0 0.0
  %268 = vmatprep.subr.mxu0 0.0
  %269 = vmatpush1.msra.mxu0 0.0
  %270 = vmatprep.subr.mxu0 0.0
  %271 = vmatpush1.msra.mxu0 0.0
  %272 = vmatprep.subr.mxu0 0.0
  %273 = vmatpush1.msra.mxu0 0.0
  %274 = vmatprep.mubr.f32.mxu0 0.0
  %275 = vmatmul.mubr.f32.gmra.mrb[0].mxu0 %v208
  %v276 = vpop.f32.mrb[0].mxu0
  %v277 = vadd.f32 0.0, %v276
  %v278 = vpop.f32.mrb[0].mxu0
  %v279 = vadd.f32 0.0, %v278
  %280 = vdwg.mxu0
  %vm281 = vcmask 64512
  %v283 = vsel %vm281, %v200, 0
  %285 = vmatprep.subr.mxu0 %v202
  %286 = vmatpush1.msra.mxu0 %v201
  %287 = vmatprep.subr.mxu0 0.0
  %288 = vmatpush1.msra.mxu0 0.0
  %289 = vmatprep.subr.mxu0 0.0
  %290 = vmatpush1.msra.mxu0 0.0
  %291 = vmatprep.subr.mxu0 0.0
  %292 = vmatpush1.msra.mxu0 0.0
  %293 = vmatprep.subr.mxu0 0.0
  %294 = vmatpush1.msra.mxu0 0.0
  %295 = vmatprep.subr.mxu0 0.0
  %296 = vmatpush1.msra.mxu0 0.0
  %297 = vmatprep.subr.mxu0 0.0
  %298 = vmatpush1.msra.mxu0 0.0
  %299 = vmatprep.subr.mxu0 0.0
  %300 = vmatpush1.msra.mxu0 0.0
  %301 = vmatprep.subr.mxu0 0.0
  %302 = vmatpush1.msra.mxu0 0.0
  %303 = vmatprep.subr.mxu0 0.0
  %304 = vmatpush1.msra.mxu0 0.0
  %305 = vmatprep.subr.mxu0 0.0
  %306 = vmatpush1.msra.mxu0 0.0
  %307 = vmatprep.subr.mxu0 0.0
  %308 = vmatpush1.msra.mxu0 0.0
  %309 = vmatprep.subr.mxu0 0.0
  %310 = vmatpush1.msra.mxu0 0.0
  %311 = vmatprep.subr.mxu0 0.0
  %312 = vmatpush1.msra.mxu0 0.0
  %313 = vmatprep.subr.mxu0 0.0
  %314 = vmatpush1.msra.mxu0 0.0
  %315 = vmatprep.subr.mxu0 0.0
  %316 = vmatpush1.msra.mxu0 0.0
  %317 = vmatprep.subr.mxu0 0.0
  %318 = vmatpush1.msra.mxu0 0.0
  %319 = vmatprep.subr.mxu0 0.0
  %320 = vmatpush1.msra.mxu0 0.0
  %321 = vmatprep.subr.mxu0 0.0
  %322 = vmatpush1.msra.mxu0 0.0
  %323 = vmatprep.subr.mxu0 0.0
  %324 = vmatpush1.msra.mxu0 0.0
  %325 = vmatprep.subr.mxu0 0.0
  %326 = vmatpush1.msra.mxu0 0.0
  %327 = vmatprep.subr.mxu0 0.0
  %328 = vmatpush1.msra.mxu0 0.0
  %329 = vmatprep.subr.mxu0 0.0
  %330 = vmatpush1.msra.mxu0 0.0
  %331 = vmatprep.subr.mxu0 0.0
  %332 = vmatpush1.msra.mxu0 0.0
  %333 = vmatprep.subr.mxu0 0.0
  %334 = vmatpush1.msra.mxu0 0.0
  %335 = vmatprep.subr.mxu0 0.0
  %336 = vmatpush1.msra.mxu0 0.0
  %337 = vmatprep.subr.mxu0 0.0
  %338 = vmatpush1.msra.mxu0 0.0
  %339 = vmatprep.subr.mxu0 0.0
  %340 = vmatpush1.msra.mxu0 0.0
  %341 = vmatprep.subr.mxu0 0.0
  %342 = vmatpush1.msra.mxu0 0.0
  %343 = vmatprep.subr.mxu0 0.0
  %344 = vmatpush1.msra.mxu0 0.0
  %345 = vmatprep.subr.mxu0 0.0
  %346 = vmatpush1.msra.mxu0 0.0
  %347 = vmatprep.subr.mxu0 0.0
  %348 = vmatpush1.msra.mxu0 0.0
  %349 = vmatprep.mubr.f32.mxu0 0.0
  %350 = vmatmul.mubr.f32.gmra.mrb[0].mxu0 %v283
  %v351 = vpop.f32.mrb[0].mxu0
  %v352 = vadd.f32 %v277, %v351
  %v353 = vpop.f32.mrb[0].mxu0
  %v354 = vadd.f32 %v279, %v353
  %355 = vdwg.mxu0
  %v356 = vld [vmem:[%s7] sm:$0xff]
  %v357 = vld [vmem:[%s7 + $0x8] sm:$0xff]
  %v358 = vld [vmem:[%s7 + $0x10] sm:$0xff]
  %v359 = vld [vmem:[%s7 + $0x18] sm:$0xff]
  %v361 = vsel %vm53, %v197, 0
  %363 = vmatprep.subr.mxu0 %v357
  %364 = vmatpush1.msra.mxu0 %v356
  %365 = vmatprep.subr.mxu0 %v359
  %366 = vmatpush1.msra.mxu0 %v358
  %367 = vmatprep.subr.mxu0 0.0
  %368 = vmatpush1.msra.mxu0 0.0
  %369 = vmatprep.subr.mxu0 0.0
  %370 = vmatpush1.msra.mxu0 0.0
  %371 = vmatprep.subr.mxu0 0.0
  %372 = vmatpush1.msra.mxu0 0.0
  %373 = vmatprep.subr.mxu0 0.0
  %374 = vmatpush1.msra.mxu0 0.0
  %375 = vmatprep.subr.mxu0 0.0
  %376 = vmatpush1.msra.mxu0 0.0
  %377 = vmatprep.subr.mxu0 0.0
  %378 = vmatpush1.msra.mxu0 0.0
  %379 = vmatprep.subr.mxu0 0.0
  %380 = vmatpush1.msra.mxu0 0.0
  %381 = vmatprep.subr.mxu0 0.0
  %382 = vmatpush1.msra.mxu0 0.0
  %383 = vmatprep.subr.mxu0 0.0
  %384 = vmatpush1.msra.mxu0 0.0
  %385 = vmatprep.subr.mxu0 0.0
  %386 = vmatpush1.msra.mxu0 0.0
  %387 = vmatprep.subr.mxu0 0.0
  %388 = vmatpush1.msra.mxu0 0.0
  %389 = vmatprep.subr.mxu0 0.0
  %390 = vmatpush1.msra.mxu0 0.0
  %391 = vmatprep.subr.mxu0 0.0
  %392 = vmatpush1.msra.mxu0 0.0
  %393 = vmatprep.subr.mxu0 0.0
  %394 = vmatpush1.msra.mxu0 0.0
  %395 = vmatprep.subr.mxu0 0.0
  %396 = vmatpush1.msra.mxu0 0.0
  %397 = vmatprep.subr.mxu0 0.0
  %398 = vmatpush1.msra.mxu0 0.0
  %399 = vmatprep.subr.mxu0 0.0
  %400 = vmatpush1.msra.mxu0 0.0
  %401 = vmatprep.subr.mxu0 0.0
  %402 = vmatpush1.msra.mxu0 0.0
  %403 = vmatprep.subr.mxu0 0.0
  %404 = vmatpush1.msra.mxu0 0.0
  %405 = vmatprep.subr.mxu0 0.0
  %406 = vmatpush1.msra.mxu0 0.0
  %407 = vmatprep.subr.mxu0 0.0
  %408 = vmatpush1.msra.mxu0 0.0
  %409 = vmatprep.subr.mxu0 0.0
  %410 = vmatpush1.msra.mxu0 0.0
  %411 = vmatprep.subr.mxu0 0.0
  %412 = vmatpush1.msra.mxu0 0.0
  %413 = vmatprep.subr.mxu0 0.0
  %414 = vmatpush1.msra.mxu0 0.0
  %415 = vmatprep.subr.mxu0 0.0
  %416 = vmatpush1.msra.mxu0 0.0
  %417 = vmatprep.subr.mxu0 0.0
  %418 = vmatpush1.msra.mxu0 0.0
  %419 = vmatprep.subr.mxu0 0.0
  %420 = vmatpush1.msra.mxu0 0.0
  %421 = vmatprep.subr.mxu0 0.0
  %422 = vmatpush1.msra.mxu0 0.0
  %423 = vmatprep.subr.mxu0 0.0
  %424 = vmatpush1.msra.mxu0 0.0
  %425 = vmatprep.subr.mxu0 0.0
  %426 = vmatpush1.msra.mxu0 0.0
  %427 = vmatprep.mubr.f32.mxu0 0.0
  %428 = vmatmul.mubr.f32.gmra.mrb[0].mxu0 %v361
  %v429 = vpop.f32.mrb[0].mxu0
  %v430 = vadd.f32 0.0, %v429
  %v431 = vpop.f32.mrb[0].mxu0
  %v432 = vadd.f32 0.0, %v431
  %433 = vdwg.mxu0
  %v434 = vadd.f32 %v352, %v430
  %v435 = vadd.f32 %v354, %v432
  %v436 = vld [vmem:[%s10] sm:$0x3]
  %v438 = vlaneseq
  %v439 = vshrl.u32 %v438, 7
  %v440 = vsub.s32 0, %v439
  %v441 = vrot.slane %v436, %v440
  %v442 = vlaneseq
  %v443 = vshrl.u32 %v442, 7
  %v444 = vsub.s32 1, %v443
  %v445 = vrot.slane %v436, %v444
  %v448 = vadd.f32 %v434, %v441
  %v449 = vadd.f32 %v435, %v445
  %v450 = vld [vmem:[%s3] sm:$0xff]
  %v451 = vld [vmem:[%s3 + $0x8] sm:$0xff]
  %v452 = vld [vmem:[%s8] sm:$0xff]
  %v453 = vld [vmem:[%s8 + $0x8] sm:$0xff]
  %v454 = vld [vmem:[%s8 + $0x10] sm:$0xff]
  %v455 = vld [vmem:[%s8 + $0x18] sm:$0xff]
  %s456 = scalar_lea.vmem %s3, 16
  %v457 = vld [vmem:[%s456] sm:$0xff]
  %v458 = vld [vmem:[%s456 + $0x8] sm:$0xff]
  %v459 = vld [vmem:[%s9] sm:$0xff]
  %v460 = vld [vmem:[%s9 + $0x8] sm:$0xff]
  %v461 = vld [vmem:[%s9 + $0x10] sm:$0xff]
  %v462 = vld [vmem:[%s9 + $0x18] sm:$0xff]
  %v464 = vsel %vm53, %v457, 0
  %v467 = vsel %vm53, %v458, 0
  %469 = vmatprep.subr.mxu0 %v460
  %470 = vmatpush1.msra.mxu0 %v459
  %471 = vmatprep.subr.mxu0 %v462
  %472 = vmatpush1.msra.mxu0 %v461
  %473 = vmatprep.subr.mxu0 0.0
  %474 = vmatpush1.msra.mxu0 0.0
  %475 = vmatprep.subr.mxu0 0.0
  %476 = vmatpush1.msra.mxu0 0.0
  %477 = vmatprep.subr.mxu0 0.0
  %478 = vmatpush1.msra.mxu0 0.0
  %479 = vmatprep.subr.mxu0 0.0
  %480 = vmatpush1.msra.mxu0 0.0
  %481 = vmatprep.subr.mxu0 0.0
  %482 = vmatpush1.msra.mxu0 0.0
  %483 = vmatprep.subr.mxu0 0.0
  %484 = vmatpush1.msra.mxu0 0.0
  %485 = vmatprep.subr.mxu0 0.0
  %486 = vmatpush1.msra.mxu0 0.0
  %487 = vmatprep.subr.mxu0 0.0
  %488 = vmatpush1.msra.mxu0 0.0
  %489 = vmatprep.subr.mxu0 0.0
  %490 = vmatpush1.msra.mxu0 0.0
  %491 = vmatprep.subr.mxu0 0.0
  %492 = vmatpush1.msra.mxu0 0.0
  %493 = vmatprep.subr.mxu0 0.0
  %494 = vmatpush1.msra.mxu0 0.0
  %495 = vmatprep.subr.mxu0 0.0
  %496 = vmatpush1.msra.mxu0 0.0
  %497 = vmatprep.subr.mxu0 0.0
  %498 = vmatpush1.msra.mxu0 0.0
  %499 = vmatprep.subr.mxu0 0.0
  %500 = vmatpush1.msra.mxu0 0.0
  %501 = vmatprep.subr.mxu0 0.0
  %502 = vmatpush1.msra.mxu0 0.0
  %503 = vmatprep.subr.mxu0 0.0
  %504 = vmatpush1.msra.mxu0 0.0
  %505 = vmatprep.subr.mxu0 0.0
  %506 = vmatpush1.msra.mxu0 0.0
  %507 = vmatprep.subr.mxu0 0.0
  %508 = vmatpush1.msra.mxu0 0.0
  %509 = vmatprep.subr.mxu0 0.0
  %510 = vmatpush1.msra.mxu0 0.0
  %511 = vmatprep.subr.mxu0 0.0
  %512 = vmatpush1.msra.mxu0 0.0
  %513 = vmatprep.subr.mxu0 0.0
  %514 = vmatpush1.msra.mxu0 0.0
  %515 = vmatprep.subr.mxu0 0.0
  %516 = vmatpush1.msra.mxu0 0.0
  %517 = vmatprep.subr.mxu0 0.0
  %518 = vmatpush1.msra.mxu0 0.0
  %519 = vmatprep.subr.mxu0 0.0
  %520 = vmatpush1.msra.mxu0 0.0
  %521 = vmatprep.subr.mxu0 0.0
  %522 = vmatpush1.msra.mxu0 0.0
  %523 = vmatprep.subr.mxu0 0.0
  %524 = vmatpush1.msra.mxu0 0.0
  %525 = vmatprep.subr.mxu0 0.0
  %526 = vmatpush1.msra.mxu0 0.0
  %527 = vmatprep.subr.mxu0 0.0
  %528 = vmatpush1.msra.mxu0 0.0
  %529 = vmatprep.subr.mxu0 0.0
  %530 = vmatpush1.msra.mxu0 0.0
  %531 = vmatprep.subr.mxu0 0.0
  %532 = vmatpush1.msra.mxu0 0.0
  %533 = vmatprep.mubr.f32.mxu0 0.0
  %534 = vmatmul.mubr.f32.gmra.mrb[0].mxu0 %v464
  %v535 = vpop.f32.mrb[0].mxu0
  %v536 = vadd.f32 0.0, %v535
  %v537 = vpop.f32.mrb[0].mxu0
  %v538 = vadd.f32 0.0, %v537
  %539 = vmatprep.mubr.f32.mxu0 0.0
  %540 = vmatmul.mubr.f32.gmra.mrb[0].mxu0 %v467
  %v541 = vpop.f32.mrb[0].mxu0
  %v542 = vadd.f32 0.0, %v541
  %v543 = vpop.f32.mrb[0].mxu0
  %v544 = vadd.f32 0.0, %v543
  %545 = vdwg.mxu0
  %v547 = vsel %vm53, %v450, 0
  %v550 = vsel %vm53, %v451, 0
  %552 = vmatprep.subr.mxu0 %v453
  %553 = vmatpush1.msra.mxu0 %v452
  %554 = vmatprep.subr.mxu0 %v455
  %555 = vmatpush1.msra.mxu0 %v454
  %556 = vmatprep.subr.mxu0 0.0
  %557 = vmatpush1.msra.mxu0 0.0
  %558 = vmatprep.subr.mxu0 0.0
  %559 = vmatpush1.msra.mxu0 0.0
  %560 = vmatprep.subr.mxu0 0.0
  %561 = vmatpush1.msra.mxu0 0.0
  %562 = vmatprep.subr.mxu0 0.0
  %563 = vmatpush1.msra.mxu0 0.0
  %564 = vmatprep.subr.mxu0 0.0
  %565 = vmatpush1.msra.mxu0 0.0
  %566 = vmatprep.subr.mxu0 0.0
  %567 = vmatpush1.msra.mxu0 0.0
  %568 = vmatprep.subr.mxu0 0.0
  %569 = vmatpush1.msra.mxu0 0.0
  %570 = vmatprep.subr.mxu0 0.0
  %571 = vmatpush1.msra.mxu0 0.0
  %572 = vmatprep.subr.mxu0 0.0
  %573 = vmatpush1.msra.mxu0 0.0
  %574 = vmatprep.subr.mxu0 0.0
  %575 = vmatpush1.msra.mxu0 0.0
  %576 = vmatprep.subr.mxu0 0.0
  %577 = vmatpush1.msra.mxu0 0.0
  %578 = vmatprep.subr.mxu0 0.0
  %579 = vmatpush1.msra.mxu0 0.0
  %580 = vmatprep.subr.mxu0 0.0
  %581 = vmatpush1.msra.mxu0 0.0
  %582 = vmatprep.subr.mxu0 0.0
  %583 = vmatpush1.msra.mxu0 0.0
  %584 = vmatprep.subr.mxu0 0.0
  %585 = vmatpush1.msra.mxu0 0.0
  %586 = vmatprep.subr.mxu0 0.0
  %587 = vmatpush1.msra.mxu0 0.0
  %588 = vmatprep.subr.mxu0 0.0
  %589 = vmatpush1.msra.mxu0 0.0
  %590 = vmatprep.subr.mxu0 0.0
  %591 = vmatpush1.msra.mxu0 0.0
  %592 = vmatprep.subr.mxu0 0.0
  %593 = vmatpush1.msra.mxu0 0.0
  %594 = vmatprep.subr.mxu0 0.0
  %595 = vmatpush1.msra.mxu0 0.0
  %596 = vmatprep.subr.mxu0 0.0
  %597 = vmatpush1.msra.mxu0 0.0
  %598 = vmatprep.subr.mxu0 0.0
  %599 = vmatpush1.msra.mxu0 0.0
  %600 = vmatprep.subr.mxu0 0.0
  %601 = vmatpush1.msra.mxu0 0.0
  %602 = vmatprep.subr.mxu0 0.0
  %603 = vmatpush1.msra.mxu0 0.0
  %604 = vmatprep.subr.mxu0 0.0
  %605 = vmatpush1.msra.mxu0 0.0
  %606 = vmatprep.subr.mxu0 0.0
  %607 = vmatpush1.msra.mxu0 0.0
  %608 = vmatprep.subr.mxu0 0.0
  %609 = vmatpush1.msra.mxu0 0.0
  %610 = vmatprep.subr.mxu0 0.0
  %611 = vmatpush1.msra.mxu0 0.0
  %612 = vmatprep.subr.mxu0 0.0
  %613 = vmatpush1.msra.mxu0 0.0
  %614 = vmatprep.subr.mxu0 0.0
  %615 = vmatpush1.msra.mxu0 0.0
  %616 = vmatprep.mubr.f32.mxu0 0.0
  %617 = vmatmul.mubr.f32.gmra.mrb[0].mxu0 %v547
  %v618 = vpop.f32.mrb[0].mxu0
  %v619 = vadd.f32 %v536, %v618
  %v620 = vpop.f32.mrb[0].mxu0
  %v621 = vadd.f32 %v538, %v620
  %622 = vmatprep.mubr.f32.mxu0 0.0
  %623 = vmatmul.mubr.f32.gmra.mrb[0].mxu0 %v550
  %v624 = vpop.f32.mrb[0].mxu0
  %v625 = vadd.f32 %v542, %v624
  %v626 = vpop.f32.mrb[0].mxu0
  %v627 = vadd.f32 %v544, %v626
  %628 = vdwg.mxu0
  %v629 = vld [vmem:[%s4] sm:$0xff]
  %v630 = vld [vmem:[%s4 + $0x8] sm:$0xff]
  %vm631 = vcmask 15360
  %v633 = vsel %vm631, %v629, 0
  %v636 = vsel %vm631, %v630, 0
  %vm638 = vcmask 1041408
  %v640 = vsel %vm638, %v448, 0
  %v643 = vsel %vm638, %v449, 0
  %645 = vmatprep.subr.mxu0 %v643
  %646 = vmatpush1.msra.mxu0 %v640
  %647 = vmatprep.subr.mxu0 0.0
  %648 = vmatpush1.msra.mxu0 0.0
  %649 = vmatprep.subr.mxu0 0.0
  %650 = vmatpush1.msra.mxu0 0.0
  %651 = vmatprep.subr.mxu0 0.0
  %652 = vmatpush1.msra.mxu0 0.0
  %653 = vmatprep.subr.mxu0 0.0
  %654 = vmatpush1.msra.mxu0 0.0
  %655 = vmatprep.subr.mxu0 0.0
  %656 = vmatpush1.msra.mxu0 0.0
  %657 = vmatprep.subr.mxu0 0.0
  %658 = vmatpush1.msra.mxu0 0.0
  %659 = vmatprep.subr.mxu0 0.0
  %660 = vmatpush1.msra.mxu0 0.0
  %661 = vmatprep.subr.mxu0 0.0
  %662 = vmatpush1.msra.mxu0 0.0
  %663 = vmatprep.subr.mxu0 0.0
  %664 = vmatpush1.msra.mxu0 0.0
  %665 = vmatprep.subr.mxu0 0.0
  %666 = vmatpush1.msra.mxu0 0.0
  %667 = vmatprep.subr.mxu0 0.0
  %668 = vmatpush1.msra.mxu0 0.0
  %669 = vmatprep.subr.mxu0 0.0
  %670 = vmatpush1.msra.mxu0 0.0
  %671 = vmatprep.subr.mxu0 0.0
  %672 = vmatpush1.msra.mxu0 0.0
  %673 = vmatprep.subr.mxu0 0.0
  %674 = vmatpush1.msra.mxu0 0.0
  %675 = vmatprep.subr.mxu0 0.0
  %676 = vmatpush1.msra.mxu0 0.0
  %677 = vmatprep.subr.mxu0 0.0
  %678 = vmatpush1.msra.mxu0 0.0
  %679 = vmatprep.subr.mxu0 0.0
  %680 = vmatpush1.msra.mxu0 0.0
  %681 = vmatprep.subr.mxu0 0.0
  %682 = vmatpush1.msra.mxu0 0.0
  %683 = vmatprep.subr.mxu0 0.0
  %684 = vmatpush1.msra.mxu0 0.0
  %685 = vmatprep.subr.mxu0 0.0
  %686 = vmatpush1.msra.mxu0 0.0
  %687 = vmatprep.subr.mxu0 0.0
  %688 = vmatpush1.msra.mxu0 0.0
  %689 = vmatprep.subr.mxu0 0.0
  %690 = vmatpush1.msra.mxu0 0.0
  %691 = vmatprep.subr.mxu0 0.0
  %692 = vmatpush1.msra.mxu0 0.0
  %693 = vmatprep.subr.mxu0 0.0
  %694 = vmatpush1.msra.mxu0 0.0
  %695 = vmatprep.subr.mxu0 0.0
  %696 = vmatpush1.msra.mxu0 0.0
  %697 = vmatprep.subr.mxu0 0.0
  %698 = vmatpush1.msra.mxu0 0.0
  %699 = vmatprep.subr.mxu0 0.0
  %700 = vmatpush1.msra.mxu0 0.0
  %701 = vmatprep.subr.mxu0 0.0
  %702 = vmatpush1.msra.mxu0 0.0
  %703 = vmatprep.subr.mxu0 0.0
  %704 = vmatpush1.msra.mxu0 0.0
  %705 = vmatprep.subr.mxu0 0.0
  %706 = vmatpush1.msra.mxu0 0.0
  %707 = vmatprep.subr.mxu0 0.0
  %708 = vmatpush1.msra.mxu0 0.0
  %709 = vmatprep.mubr.f32.mxu0 0.0
  %710 = vmatmul.mubr.f32.gmra.mrb[0].mxu0 %v633
  %v711 = vpop.f32.mrb[0].mxu0
  %v712 = vadd.f32 0.0, %v711
  %v713 = vpop.f32.mrb[0].mxu0
  %v714 = vadd.f32 0.0, %v713
  %715 = vmatprep.mubr.f32.mxu0 0.0
  %716 = vmatmul.mubr.f32.gmra.mrb[0].mxu0 %v636
  %v717 = vpop.f32.mrb[0].mxu0
  %v718 = vadd.f32 0.0, %v717
  %v719 = vpop.f32.mrb[0].mxu0
  %v720 = vadd.f32 0.0, %v719
  %721 = vdwg.mxu0
  %v722 = vadd.f32 %v619, %v712
  %v723 = vadd.f32 %v621, %v714
  %v724 = vadd.f32 %v625, %v718
  %v725 = vadd.f32 %v627, %v720
  %v726 = vxor.u32 %v722, 2147483648
  %v727 = vxor.u32 %v723, 2147483648
  %v728 = vxor.u32 %v724, 2147483648
  %v729 = vxor.u32 %v725, 2147483648
  %v730 = vmul.f32 %v726, 1.442695
  %v731 = vpow.pop %v730
  %v732 = vmul.f32 %v727, 1.442695
  %v733 = vpow.pop %v732
  %v734 = vmul.f32 %v728, 1.442695
  %v735 = vpow.pop %v734
  %v736 = vmul.f32 %v729, 1.442695
  %v737 = vpow.pop %v736
  %v738 = vadd.f32 %v731, 1.0
  %v739 = vadd.f32 %v733, 1.0
  %v740 = vadd.f32 %v735, 1.0
  %v741 = vadd.f32 %v737, 1.0
  %v742 = vrcp.pop %v738
  %v743 = vmul.f32 1.0, %v742
  %v744 = vrcp.pop %v739
  %v745 = vmul.f32 1.0, %v744
  %v746 = vrcp.pop %v740
  %v747 = vmul.f32 1.0, %v746
  %v748 = vrcp.pop %v741
  %v749 = vmul.f32 1.0, %v748
  %v750 = vld [vmem:[%s11] sm:$0xff]
  %v751 = vld [vmem:[%s11 + $0x8] sm:$0xff]
  %v752 = vld [vmem:[%s11 + $0x10] sm:$0xff]
  %v753 = vld [vmem:[%s11 + $0x18] sm:$0xff]
  %v754 = vld [vmem:[%s11 + $0x20] sm:$0xff]
  %v755 = vld [vmem:[%s11 + $0x28] sm:$0xff]
  %v756 = vld [vmem:[%s11 + $0x30] sm:$0xff]
  %v757 = vld [vmem:[%s11 + $0x38] sm:$0xff]
  %v758 = vld [vmem:[%s11 + $0x40] sm:$0xff]
  %v759 = vld [vmem:[%s11 + $0x48] sm:$0xff]
  %v760 = vld [vmem:[%s11 + $0x50] sm:$0xff]
  %v761 = vld [vmem:[%s11 + $0x58] sm:$0xff]
  %v762 = vld [vmem:[%s11 + $0x60] sm:$0xff]
  %v763 = vld [vmem:[%s11 + $0x68] sm:$0xff]
  %v764 = vld [vmem:[%s11 + $0x70] sm:$0xff]
  %v765 = vld [vmem:[%s11 + $0x78] sm:$0xff]
  %v766 = vld [vmem:[%s11 + $0x80] sm:$0xff]
  %v767 = vld [vmem:[%s11 + $0x88] sm:$0xff]
  %v768 = vld [vmem:[%s11 + $0x90] sm:$0xff]
  %v769 = vld [vmem:[%s11 + $0x98] sm:$0xff]
  %v770 = vld [vmem:[%s11 + $0xa0] sm:$0xff]
  %v771 = vld [vmem:[%s11 + $0xa8] sm:$0xff]
  %v772 = vld [vmem:[%s11 + $0xb0] sm:$0xff]
  %v773 = vld [vmem:[%s11 + $0xb8] sm:$0xff]
  %v774 = vld [vmem:[%s11 + $0xc0] sm:$0xff]
  %v775 = vld [vmem:[%s11 + $0xc8] sm:$0xff]
  %v776 = vld [vmem:[%s11 + $0xd0] sm:$0xff]
  %v777 = vld [vmem:[%s11 + $0xd8] sm:$0xff]
  %v778 = vld [vmem:[%s11 + $0xe0] sm:$0xff]
  %v779 = vld [vmem:[%s11 + $0xe8] sm:$0xff]
  %v780 = vld [vmem:[%s11 + $0xf0] sm:$0xff]
  %v781 = vld [vmem:[%s11 + $0xf8] sm:$0xff]
  %v782 = vld [vmem:[%s11 + $0x100] sm:$0xff]
  %v783 = vld [vmem:[%s11 + $0x108] sm:$0xff]
  %v784 = vld [vmem:[%s11 + $0x110] sm:$0xff]
  %v785 = vld [vmem:[%s11 + $0x118] sm:$0xff]
  %v786 = vld [vmem:[%s11 + $0x120] sm:$0xff]
  %v787 = vld [vmem:[%s11 + $0x128] sm:$0xff]
  %v788 = vld [vmem:[%s11 + $0x130] sm:$0xff]
  %v789 = vld [vmem:[%s11 + $0x138] sm:$0xff]
  %v790 = vld [vmem:[%s11 + $0x140] sm:$0xff]
  %v791 = vld [vmem:[%s11 + $0x148] sm:$0xff]
  %v792 = vld [vmem:[%s11 + $0x150] sm:$0xff]
  %v793 = vld [vmem:[%s11 + $0x158] sm:$0xff]
  %v794 = vld [vmem:[%s11 + $0x160] sm:$0xff]
  %v795 = vld [vmem:[%s11 + $0x168] sm:$0xff]
  %v796 = vld [vmem:[%s11 + $0x170] sm:$0xff]
  %v797 = vld [vmem:[%s11 + $0x178] sm:$0xff]
  %v798 = vld [vmem:[%s11 + $0x180] sm:$0xff]
  %v799 = vld [vmem:[%s11 + $0x188] sm:$0xff]
  %v800 = vld [vmem:[%s12] sm:$0x3]
  %v802 = vlaneseq
  %v803 = vshrl.u32 %v802, 7
  %v804 = vsub.s32 0, %v803
  %v805 = vrot.slane %v800, %v804
  %v806 = vlaneseq
  %v807 = vshrl.u32 %v806, 7
  %v808 = vsub.s32 1, %v807
  %v809 = vrot.slane %v800, %v808
  %vm812 = vcmask 588800
  %v814 = vsel %vm812, %v745, 0
  %v817 = vsel %vm812, %v749, 0
  %819 = vmatprep.subr.mxu0 %v751
  %820 = vmatpush1.msra.mxu0 %v750
  %821 = vmatprep.subr.mxu0 %v753
  %822 = vmatpush1.msra.mxu0 %v752
  %823 = vmatprep.subr.mxu0 %v755
  %824 = vmatpush1.msra.mxu0 %v754
  %825 = vmatprep.subr.mxu0 %v757
  %826 = vmatpush1.msra.mxu0 %v756
  %827 = vmatprep.subr.mxu0 %v759
  %828 = vmatpush1.msra.mxu0 %v758
  %829 = vmatprep.subr.mxu0 %v761
  %830 = vmatpush1.msra.mxu0 %v760
  %831 = vmatprep.subr.mxu0 %v763
  %832 = vmatpush1.msra.mxu0 %v762
  %833 = vmatprep.subr.mxu0 %v765
  %834 = vmatpush1.msra.mxu0 %v764
  %835 = vmatprep.subr.mxu0 %v767
  %836 = vmatpush1.msra.mxu0 %v766
  %837 = vmatprep.subr.mxu0 %v769
  %838 = vmatpush1.msra.mxu0 %v768
  %839 = vmatprep.subr.mxu0 %v771
  %840 = vmatpush1.msra.mxu0 %v770
  %841 = vmatprep.subr.mxu0 %v773
  %842 = vmatpush1.msra.mxu0 %v772
  %843 = vmatprep.subr.mxu0 %v775
  %844 = vmatpush1.msra.mxu0 %v774
  %845 = vmatprep.subr.mxu0 %v777
  %846 = vmatpush1.msra.mxu0 %v776
  %847 = vmatprep.subr.mxu0 %v779
  %848 = vmatpush1.msra.mxu0 %v778
  %849 = vmatprep.subr.mxu0 %v781
  %850 = vmatpush1.msra.mxu0 %v780
  %851 = vmatprep.subr.mxu0 %v783
  %852 = vmatpush1.msra.mxu0 %v782
  %853 = vmatprep.subr.mxu0 %v785
  %854 = vmatpush1.msra.mxu0 %v784
  %855 = vmatprep.subr.mxu0 %v787
  %856 = vmatpush1.msra.mxu0 %v786
  %857 = vmatprep.subr.mxu0 %v789
  %858 = vmatpush1.msra.mxu0 %v788
  %859 = vmatprep.subr.mxu0 %v791
  %860 = vmatpush1.msra.mxu0 %v790
  %861 = vmatprep.subr.mxu0 %v793
  %862 = vmatpush1.msra.mxu0 %v792
  %863 = vmatprep.subr.mxu0 %v795
  %864 = vmatpush1.msra.mxu0 %v794
  %865 = vmatprep.subr.mxu0 %v797
  %866 = vmatpush1.msra.mxu0 %v796
  %867 = vmatprep.subr.mxu0 %v799
  %868 = vmatpush1.msra.mxu0 %v798
  %869 = vmatprep.subr.mxu0 0.0
  %870 = vmatpush1.msra.mxu0 0.0
  %871 = vmatprep.subr.mxu0 0.0
  %872 = vmatpush1.msra.mxu0 0.0
  %873 = vmatprep.subr.mxu0 0.0
  %874 = vmatpush1.msra.mxu0 0.0
  %875 = vmatprep.subr.mxu0 0.0
  %876 = vmatpush1.msra.mxu0 0.0
  %877 = vmatprep.subr.mxu0 0.0
  %878 = vmatpush1.msra.mxu0 0.0
  %879 = vmatprep.subr.mxu0 0.0
  %880 = vmatpush1.msra.mxu0 0.0
  %881 = vmatprep.subr.mxu0 0.0
  %882 = vmatpush1.msra.mxu0 0.0
  %883 = vmatprep.mubr.f32.mxu0 %v814
  %884 = vmatmul.mubr.f32.gmra.mrb[0].mxu0 %v743
  %v885 = vpop.f32.mrb[0].mxu0
  %v886 = vadd.f32 %v805, %v885
  %v887 = vpop.f32.mrb[0].mxu0
  %v888 = vadd.f32 %v809, %v887
  %889 = vmatprep.mubr.f32.mxu0 %v817
  %890 = vmatmul.mubr.f32.gmra.mrb[0].mxu0 %v747
  %v891 = vpop.f32.mrb[0].mxu0
  %v892 = vadd.f32 %v805, %v891
  %v893 = vpop.f32.mrb[0].mxu0
  %v894 = vadd.f32 %v809, %v893
  %895 = vdwg.mxu0
  %v896 = vxor.u32 %v886, 2147483648
  %v897 = vxor.u32 %v888, 2147483648
  %v898 = vxor.u32 %v892, 2147483648
  %v899 = vxor.u32 %v894, 2147483648
  %v900 = vmul.f32 %v896, 1.442695
  %v901 = vpow.pop %v900
  %v902 = vmul.f32 %v897, 1.442695
  %v903 = vpow.pop %v902
  %v904 = vmul.f32 %v898, 1.442695
  %v905 = vpow.pop %v904
  %v906 = vmul.f32 %v899, 1.442695
  %v907 = vpow.pop %v906
  %v908 = vadd.f32 %v901, 1.0
  %v909 = vadd.f32 %v903, 1.0
  %v910 = vadd.f32 %v905, 1.0
  %v911 = vadd.f32 %v907, 1.0
  %v912 = vrcp.pop %v908
  %v913 = vmul.f32 1.0, %v912
  %v914 = vrcp.pop %v909
  %v915 = vmul.f32 1.0, %v914
  %v916 = vrcp.pop %v910
  %v917 = vmul.f32 1.0, %v916
  %v918 = vrcp.pop %v911
  %v919 = vmul.f32 1.0, %v918
  %v920 = vld [vmem:[%s13] sm:$0xff]
  %v921 = vld [vmem:[%s13 + $0x8] sm:$0xff]
  %v922 = vld [vmem:[%s13 + $0x10] sm:$0xff]
  %v923 = vld [vmem:[%s13 + $0x18] sm:$0xff]
  %v924 = vld [vmem:[%s13 + $0x20] sm:$0xff]
  %v925 = vld [vmem:[%s13 + $0x28] sm:$0xff]
  %v926 = vld [vmem:[%s13 + $0x30] sm:$0xff]
  %v927 = vld [vmem:[%s13 + $0x38] sm:$0xff]
  %v928 = vld [vmem:[%s13 + $0x40] sm:$0xff]
  %v929 = vld [vmem:[%s13 + $0x48] sm:$0xff]
  %v930 = vld [vmem:[%s13 + $0x50] sm:$0xff]
  %v931 = vld [vmem:[%s13 + $0x58] sm:$0xff]
  %v932 = vld [vmem:[%s13 + $0x60] sm:$0xff]
  %v933 = vld [vmem:[%s13 + $0x68] sm:$0xff]
  %v934 = vld [vmem:[%s13 + $0x70] sm:$0xff]
  %v935 = vld [vmem:[%s13 + $0x78] sm:$0xff]
  %v936 = vld [vmem:[%s13 + $0x80] sm:$0xff]
  %v937 = vld [vmem:[%s13 + $0x88] sm:$0xff]
  %v938 = vld [vmem:[%s13 + $0x90] sm:$0xff]
  %v939 = vld [vmem:[%s13 + $0x98] sm:$0xff]
  %v940 = vld [vmem:[%s13 + $0xa0] sm:$0xff]
  %v941 = vld [vmem:[%s13 + $0xa8] sm:$0xff]
  %v942 = vld [vmem:[%s13 + $0xb0] sm:$0xff]
  %v943 = vld [vmem:[%s13 + $0xb8] sm:$0xff]
  %v944 = vld [vmem:[%s13 + $0xc0] sm:$0xff]
  %v945 = vld [vmem:[%s14] sm:$0x1]
  %v947 = vlaneseq
  %v948 = vshrl.u32 %v947, 7
  %v949 = vsub.s32 0, %v948
  %v950 = vrot.slane %v945, %v949
  %v953 = vsel %vm812, %v915, 0
  %v956 = vsel %vm812, %v919, 0
  %958 = vmatprep.subr.mxu0 0.0
  %959 = vmatpush1.msra.mxu0 %v920
  %960 = vmatprep.subr.mxu0 0.0
  %961 = vmatpush1.msra.mxu0 %v921
  %962 = vmatprep.subr.mxu0 0.0
  %963 = vmatpush1.msra.mxu0 %v922
  %964 = vmatprep.subr.mxu0 0.0
  %965 = vmatpush1.msra.mxu0 %v923
  %966 = vmatprep.subr.mxu0 0.0
  %967 = vmatpush1.msra.mxu0 %v924
  %968 = vmatprep.subr.mxu0 0.0
  %969 = vmatpush1.msra.mxu0 %v925
  %970 = vmatprep.subr.mxu0 0.0
  %971 = vmatpush1.msra.mxu0 %v926
  %972 = vmatprep.subr.mxu0 0.0
  %973 = vmatpush1.msra.mxu0 %v927
  %974 = vmatprep.subr.mxu0 0.0
  %975 = vmatpush1.msra.mxu0 %v928
  %976 = vmatprep.subr.mxu0 0.0
  %977 = vmatpush1.msra.mxu0 %v929
  %978 = vmatprep.subr.mxu0 0.0
  %979 = vmatpush1.msra.mxu0 %v930
  %980 = vmatprep.subr.mxu0 0.0
  %981 = vmatpush1.msra.mxu0 %v931
  %982 = vmatprep.subr.mxu0 0.0
  %983 = vmatpush1.msra.mxu0 %v932
  %984 = vmatprep.subr.mxu0 0.0
  %985 = vmatpush1.msra.mxu0 %v933
  %986 = vmatprep.subr.mxu0 0.0
  %987 = vmatpush1.msra.mxu0 %v934
  %988 = vmatprep.subr.mxu0 0.0
  %989 = vmatpush1.msra.mxu0 %v935
  %990 = vmatprep.subr.mxu0 0.0
  %991 = vmatpush1.msra.mxu0 %v936
  %992 = vmatprep.subr.mxu0 0.0
  %993 = vmatpush1.msra.mxu0 %v937
  %994 = vmatprep.subr.mxu0 0.0
  %995 = vmatpush1.msra.mxu0 %v938
  %996 = vmatprep.subr.mxu0 0.0
  %997 = vmatpush1.msra.mxu0 %v939
  %998 = vmatprep.subr.mxu0 0.0
  %999 = vmatpush1.msra.mxu0 %v940
  %1000 = vmatprep.subr.mxu0 0.0
  %1001 = vmatpush1.msra.mxu0 %v941
  %1002 = vmatprep.subr.mxu0 0.0
  %1003 = vmatpush1.msra.mxu0 %v942
  %1004 = vmatprep.subr.mxu0 0.0
  %1005 = vmatpush1.msra.mxu0 %v943
  %1006 = vmatprep.subr.mxu0 0.0
  %1007 = vmatpush1.msra.mxu0 %v944
  %1008 = vmatprep.subr.mxu0 0.0
  %1009 = vmatpush1.msra.mxu0 0.0
  %1010 = vmatprep.subr.mxu0 0.0
  %1011 = vmatpush1.msra.mxu0 0.0
  %1012 = vmatprep.subr.mxu0 0.0
  %1013 = vmatpush1.msra.mxu0 0.0
  %1014 = vmatprep.subr.mxu0 0.0
  %1015 = vmatpush1.msra.mxu0 0.0
  %1016 = vmatprep.subr.mxu0 0.0
  %1017 = vmatpush1.msra.mxu0 0.0
  %1018 = vmatprep.subr.mxu0 0.0
  %1019 = vmatpush1.msra.mxu0 0.0
  %1020 = vmatprep.subr.mxu0 0.0
  %1021 = vmatpush1.msra.mxu0 0.0
  %1022 = vmatprep.mubr.f32.mxu0 %v953
  %1023 = vmatmul.mubr.f32.gmra.mrb[0].mxu0 %v913
  %v1024 = vpop.f32.mrb[0].mxu0
  %v1025 = vadd.f32 %v950, %v1024
  %v1026 = vpop.f32.mrb[0].mxu0
  %1027 = vmatprep.mubr.f32.mxu0 %v956
  %1028 = vmatmul.mubr.f32.gmra.mrb[0].mxu0 %v917
  %v1029 = vpop.f32.mrb[0].mxu0
  %v1030 = vadd.f32 %v950, %v1029
  %v1031 = vpop.f32.mrb[0].mxu0
  %1032 = vdwg.mxu0
  %v1033 = vxor.u32 %v1025, 2147483648
  %v1034 = vxor.u32 %v1030, 2147483648
  %v1035 = vmul.f32 %v1033, 1.442695
  %v1036 = vpow.pop %v1035
  %v1037 = vmul.f32 %v1034, 1.442695
  %v1038 = vpow.pop %v1037
  %v1039 = vadd.f32 %v1036, 1.0
  %v1040 = vadd.f32 %v1038, 1.0
  %v1041 = vrcp.pop %v1039
  %v1042 = vmul.f32 1.0, %v1041
  %v1043 = vrcp.pop %v1040
  %v1044 = vmul.f32 1.0, %v1043
  %1045 = vst [vmem:[%s15] sm:$0xff] %v1042
  %1046 = vst [vmem:[%s15 + $0x8] sm:$0xff] %v1044
  // Predicated region
  $region62: #{recurrent_tgt_forward.5} parent=0 // pred_check
    _
  $region63: #{recurrent_tgt_forward.5} parent=0 // pred_check_branch
    %1048 = sbr.rel (0) target = $region65
  $region64: #{recurrent_tgt_forward.5} parent=0 // pred_region
    _
  $region65: #{recurrent_tgt_forward.5} parent=0 // pred_fallthru
    _
  // Predicated region
  $region66: #{recurrent_tgt_forward.5} parent=0 // pred_check
    _
  $region67: #{recurrent_tgt_forward.5} parent=0 // pred_check_branch
    %1050 = sbr.rel (0) target = $region69
  $region68: #{recurrent_tgt_forward.5} parent=0 // pred_region
    _
  $region69: #{recurrent_tgt_forward.5} parent=0 // pred_fallthru
    _

</llo_original>
